<compile_context>
chip_gen: v7x
topology: tpu7x:2x2x1
jax: 0.10.0
libtpu: 0.0.40
codegen_flags: <defaults>
</compile_context>

<pallas_src>
import functools

import jax
import jax.numpy as jnp
from jax.experimental import pallas as pl
from jax.experimental.pallas import tpu as pltpu


def _round_up(a, b):
    return (a + b - 1) // b * b


# --------------------- pass 1: conv matmul + partial BN stats ----------------
def _conv_stats_kernel(p_ref, w_ref, y_ref, stats_ref):
    k = pl.program_id(1)

    @pl.when(k == 0)
    def _():
        y_ref[...] = jnp.zeros_like(y_ref)

    # Output block index is independent of k -> y_ref stays resident in VMEM
    # across the K reduction and doubles as the f32 accumulator.
    y_ref[...] += jnp.dot(p_ref[...], w_ref[...],
                          preferred_element_type=jnp.float32)

    @pl.when(k == pl.num_programs(1) - 1)
    def _():
        acc = y_ref[...]
        stats_ref[0:1, :] = jnp.sum(acc, axis=0, keepdims=True)        # sum
        stats_ref[1:2, :] = jnp.sum(acc * acc, axis=0, keepdims=True)  # sumsq


# --------------------- pass 2: BN (folded scale/shift) + ReLU ----------------
def _bn_relu_kernel(stats_ref, g_ref, b_ref, y_ref, o_ref, *, count, eps):
    tot = jnp.sum(stats_ref[...], axis=0)          # combine partials -> (2, Cout)
    inv_cnt = 1.0 / count
    mean = tot[0:1, :] * inv_cnt
    var = tot[1:2, :] * inv_cnt - mean * mean      # biased var (training-mode BN)
    scale = g_ref[...] * jax.lax.rsqrt(var + eps)
    shift = b_ref[...] - mean * scale
    o_ref[...] = jnp.maximum(y_ref[...] * scale + shift, 0.0)


def conv_bn_relu(x_nchw, w_oihw, bias, gamma, beta, *, stride=1, padding=3,
                 eps=1e-5):
    """x_nchw: (N, Cin, H, W); w_oihw: (Cout, Cin, KH, KW) (PyTorch layouts).

    `bias` is accepted for interface parity but unused: under training-mode
    BatchNorm the per-channel conv bias is exactly cancelled by the mean
    subtraction, so dropping it changes nothing numerically.
    """
    del bias
    N, Cin, H, W = x_nchw.shape
    Cout, _, KH, KW = w_oihw.shape
    Ho = (H + 2 * padding - KH) // stride + 1
    Wo = (W + 2 * padding - KW) // stride + 1
    M = N * Ho * Wo
    K_raw = KH * KW * Cin

    # ---- glue: layout + im2col (lane-dense (M, K) patch matrix) -------------
    x = jnp.transpose(x_nchw, (0, 2, 3, 1)).astype(jnp.float32)       # NHWC
    x_pad = jnp.pad(x, ((0, 0), (padding, padding), (padding, padding), (0, 0)))
    taps = [
        x_pad[:, kh:kh + (Ho - 1) * stride + 1:stride,
              kw:kw + (Wo - 1) * stride + 1:stride, :]
        for kh in range(KH) for kw in range(KW)
    ]
    patches = jnp.stack(taps, axis=3).reshape(M, K_raw)               # (M, K)
    w_mat = jnp.transpose(w_oihw, (2, 3, 1, 0)).reshape(K_raw, Cout)  # (K, Cout)

    # ---- tiling --------------------------------------------------------------
    TM = min(512, _round_up(M, 16))
    M_pad = _round_up(M, TM)
    GM = M_pad // TM

    K128 = _round_up(K_raw, 128)          # minimal lane-aligned K
    GK = -(-K128 // 1024)                 # <= 1024 per K tile
    TK = _round_up(-(-K128 // GK), 128)
    K_pad = TK * GK                       # == K128 -> no wasted MXU work

    # Zero padding of rows/cols is exact: padded patches produce conv == 0 (no
    # bias in-kernel) and contribute nothing to sum / sumsq; the stat divisor
    # below is the true element count M.
    patches = jnp.pad(patches.astype(jnp.bfloat16),
                      ((0, M_pad - M), (0, K_pad - K_raw)))
    w_mat = jnp.pad(w_mat, ((0, K_pad - K_raw), (0, 0))).astype(jnp.bfloat16)

    conv_flat, stats = pl.pallas_call(
        _conv_stats_kernel,
        out_shape=(jax.ShapeDtypeStruct((M_pad, Cout), jnp.float32),
                   jax.ShapeDtypeStruct((GM, 2, Cout), jnp.float32)),
        grid_spec=pltpu.PrefetchScalarGridSpec(
            num_scalar_prefetch=0,
            grid=(GM, GK),
            in_specs=[
                pl.BlockSpec((TM, TK), lambda m, k: (m, k)),
                pl.BlockSpec((TK, Cout), lambda m, k: (k, 0)),
            ],
            out_specs=[
                pl.BlockSpec((TM, Cout), lambda m, k: (m, 0)),
                pl.BlockSpec((None, 2, Cout), lambda m, k: (m, 0, 0)),
            ],
        ),
        compiler_params=pltpu.CompilerParams(
            dimension_semantics=("parallel", "arbitrary"),
            vmem_limit_bytes=32 * 1024 * 1024),
    )(patches, w_mat)

    kernel2 = functools.partial(_bn_relu_kernel, count=float(M), eps=float(eps))
    out_flat = pl.pallas_call(
        kernel2,
        out_shape=jax.ShapeDtypeStruct((M_pad, Cout), jnp.float32),
        grid_spec=pltpu.PrefetchScalarGridSpec(
            num_scalar_prefetch=0,
            grid=(GM,),
            in_specs=[
                pl.BlockSpec((GM, 2, Cout), lambda m: (0, 0, 0)),  # partial stats
                pl.BlockSpec((1, Cout), lambda m: (0, 0)),         # gamma
                pl.BlockSpec((1, Cout), lambda m: (0, 0)),         # beta
                pl.BlockSpec((TM, Cout), lambda m: (m, 0)),        # conv tile
            ],
            out_specs=pl.BlockSpec((TM, Cout), lambda m: (m, 0)),
        ),
        compiler_params=pltpu.CompilerParams(
            dimension_semantics=("parallel",),
            vmem_limit_bytes=32 * 1024 * 1024),
    )(stats,
      gamma.reshape(1, Cout).astype(jnp.float32),
      beta.reshape(1, Cout).astype(jnp.float32),
      conv_flat)

    out = out_flat[:M].reshape(N, Ho, Wo, Cout)
    return jnp.transpose(out, (0, 3, 1, 2))                          # NCHW


if __name__ == "__main__":
    # Small shapes consistent with the module (kernel=7, stride=1, pad=3;
    # out_channels kept at the module default 128 so stores are lane-dense).
    N, Cin, Cout, H, W, K, PAD = 2, 16, 128, 16, 16, 7, 3
    EPS = 1e-5

    key = jax.random.PRNGKey(0)
    k1, k2, k3 = jax.random.split(key, 3)
    x = jax.random.normal(k1, (N, Cin, H, W), jnp.float32)
    fan_in = Cin * K * K
    w = jax.random.normal(k2, (Cout, Cin, K, K), jnp.float32) / jnp.sqrt(fan_in)
    b = 0.1 * jax.random.normal(k3, (Cout,), jnp.float32)
    gamma = jnp.ones((Cout,), jnp.float32)   # BatchNorm2d default affine params
    beta = jnp.zeros((Cout,), jnp.float32)

    out = conv_bn_relu(x, w, b, gamma, beta, stride=1, padding=PAD, eps=EPS)
    out = jax.block_until_ready(out)

    # Pure-JAX reference: conv (+bias) + training-mode BN (batch stats, biased
    # var) + ReLU.  The conv bias cancels under BN, so the reference including
    # it must match the bias-free kernel exactly (up to bf16 matmul rounding).
    conv_ref = jax.lax.conv_general_dilated(
        x, w, window_strides=(1, 1), padding=[(PAD, PAD), (PAD, PAD)],
        dimension_numbers=("NCHW", "OIHW", "NCHW")) + b.reshape(1, Cout, 1, 1)
    mean = conv_ref.mean(axis=(0, 2, 3), keepdims=True)
    var = conv_ref.var(axis=(0, 2, 3), keepdims=True)
    ref = jnp.maximum(
        (conv_ref - mean) * jax.lax.rsqrt(var + EPS) * gamma.reshape(1, Cout, 1, 1)
        + beta.reshape(1, Cout, 1, 1), 0.0)

    assert out.shape == (N, Cout, H, W)
    assert jnp.allclose(out, ref, atol=3e-2, rtol=3e-2), \
        float(jnp.abs(out - ref).max())
    # TODO(synk): BatchNorm running_mean / running_var buffer updates (a
    # training-time side effect that does not affect the returned tensor) are
    # not modeled.
    print("KERNEL_OK")
</pallas_src>

<mosaic_0001>
module attributes {stable_mosaic.version = 11 : i64} {
  func.func @_conv_stats_kernel(%arg0: i32, %arg1: i32, %arg2: memref<512x896xbf16, #tpu.memory_space<vmem>>, %arg3: memref<896x128xbf16, #tpu.memory_space<vmem>>, %arg4: memref<512x128xf32, #tpu.memory_space<vmem>>, %arg5: memref<1x2x128xf32, #tpu.memory_space<vmem>>) attributes {dimension_semantics = [#tpu.dimension_semantics<parallel>, #tpu.dimension_semantics<arbitrary>], iteration_bounds = array<i64: 1, 1>, scalar_prefetch = 0 : i64, scratch_operands = 0 : i64, tpu.core_type = #tpu.core_type<tc>, window_params = [{transform_indices = @transform_0, window_bounds = array<i64: 512, 896>}, {transform_indices = @transform_1, window_bounds = array<i64: 896, 128>}, {transform_indices = @transform_2, window_bounds = array<i64: 512, 128>}, {transform_indices = @transform_3, window_bounds = array<i64: 1, 2, 128>}]} {
    %c0_i32 = arith.constant 0 : i32
    %0 = arith.cmpi eq, %arg1, %c0_i32 : i32
    %1 = arith.extui %0 : i1 to i32
    %c0_i32_0 = arith.constant 0 : i32
    %2 = arith.cmpi ne, %1, %c0_i32_0 : i32
    scf.if %2 {
      %cst_10 = arith.constant 0.000000e+00 : f32
      %12 = vector.broadcast %cst_10 : f32 to vector<512x128xf32>
      %c0_11 = arith.constant 0 : index
      %c0_12 = arith.constant 0 : index
      %13 = vector.load %arg4[%c0_11, %c0_12] : memref<512x128xf32, #tpu.memory_space<vmem>>, vector<512x128xf32>
      tpu.vector_store %arg4[%c0_11, %c0_12], %12 {strides = array<i32>} : memref<512x128xf32, #tpu.memory_space<vmem>>, vector<512x128xf32>,
    } else {
    }
    %c0 = arith.constant 0 : index
    %c0_1 = arith.constant 0 : index
    %3 = vector.load %arg4[%c0, %c0_1] : memref<512x128xf32, #tpu.memory_space<vmem>>, vector<512x128xf32>
    %c0_2 = arith.constant 0 : index
    %c0_3 = arith.constant 0 : index
    %4 = vector.load %arg2[%c0_2, %c0_3] : memref<512x896xbf16, #tpu.memory_space<vmem>>, vector<512x896xbf16>
    %c0_4 = arith.constant 0 : index
    %c0_5 = arith.constant 0 : index
    %5 = vector.load %arg3[%c0_4, %c0_5] : memref<896x128xbf16, #tpu.memory_space<vmem>>, vector<896x128xbf16>
    %cst = arith.constant dense<0.000000e+00> : vector<512x128xf32>
    %6 = tpu.matmul %4, %5, %cst {dimension_numbers = #tpu.dot_dimension_numbers<[1], [0], [0], [1], [0, 0, 1, 1], [], []>} : vector<512x896xbf16>, vector<896x128xbf16>, vector<512x128xf32> -> vector<512x128xf32>
    %7 = arith.addf %3, %6 : vector<512x128xf32>
    %c0_6 = arith.constant 0 : index
    %c0_7 = arith.constant 0 : index
    %8 = vector.load %arg4[%c0_6, %c0_7] : memref<512x128xf32, #tpu.memory_space<vmem>>, vector<512x128xf32>
    tpu.vector_store %arg4[%c0_6, %c0_7], %7 {strides = array<i32>} : memref<512x128xf32, #tpu.memory_space<vmem>>, vector<512x128xf32>,
    %c0_i32_8 = arith.constant 0 : i32
    %9 = arith.cmpi eq, %arg1, %c0_i32_8 : i32
    %10 = arith.extui %9 : i1 to i32
    %c0_i32_9 = arith.constant 0 : i32
    %11 = arith.cmpi ne, %10, %c0_i32_9 : i32
    scf.if %11 {
      %c0_10 = arith.constant 0 : index
      %c0_11 = arith.constant 0 : index
      %12 = vector.load %arg4[%c0_10, %c0_11] : memref<512x128xf32, #tpu.memory_space<vmem>>, vector<512x128xf32>
      %cst_12 = arith.constant dense<0.000000e+00> : vector<128xf32>
      %13 = vector.multi_reduction <add>, %12, %cst_12 [0] : vector<512x128xf32> to vector<128xf32>
      %14 = vector.shape_cast %13 : vector<128xf32> to vector<1x128xf32>
      %c0_13 = arith.constant 0 : index
      %c0_14 = arith.constant 0 : index
      %c0_15 = arith.constant 0 : index
      %15 = vector.load %arg5[%c0_13, %c0_14, %c0_15] : memref<1x2x128xf32, #tpu.memory_space<vmem>>, vector<1x1x128xf32>
      %16 = vector.shape_cast %15 : vector<1x1x128xf32> to vector<1x128xf32>
      %17 = vector.shape_cast %14 : vector<1x128xf32> to vector<1x1x128xf32>
      tpu.vector_store %arg5[%c0_13, %c0_14, %c0_15], %17 {strides = array<i32>} : memref<1x2x128xf32, #tpu.memory_space<vmem>>, vector<1x1x128xf32>,
      %18 = arith.mulf %12, %12 : vector<512x128xf32>
      %cst_16 = arith.constant dense<0.000000e+00> : vector<128xf32>
      %19 = vector.multi_reduction <add>, %18, %cst_16 [0] : vector<512x128xf32> to vector<128xf32>
      %20 = vector.shape_cast %19 : vector<128xf32> to vector<1x128xf32>
      %c0_17 = arith.constant 0 : index
      %c1 = arith.constant 1 : index
      %c0_18 = arith.constant 0 : index
      %21 = vector.load %arg5[%c0_17, %c1, %c0_18] : memref<1x2x128xf32, #tpu.memory_space<vmem>>, vector<1x1x128xf32>
      %22 = vector.shape_cast %21 : vector<1x1x128xf32> to vector<1x128xf32>
      %23 = vector.shape_cast %20 : vector<1x128xf32> to vector<1x1x128xf32>
      tpu.vector_store %arg5[%c0_17, %c1, %c0_18], %23 {strides = array<i32>} : memref<1x2x128xf32, #tpu.memory_space<vmem>>, vector<1x1x128xf32>,
    } else {
    }
    return
  }
  func.func @transform_0(%arg0: i32, %arg1: i32) -> (i32, i32) {
    %c0_i32 = arith.constant 0 : i32
    return %arg0, %arg1 : i32, i32
  }
  func.func @transform_1(%arg0: i32, %arg1: i32) -> (i32, i32) {
    %c0_i32 = arith.constant 0 : i32
    %c0_i32_0 = arith.constant 0 : i32
    return %arg1, %c0_i32 : i32, i32
  }
  func.func @transform_2(%arg0: i32, %arg1: i32) -> (i32, i32) {
    %c0_i32 = arith.constant 0 : i32
    %c0_i32_0 = arith.constant 0 : i32
    return %arg0, %c0_i32 : i32, i32
  }
  func.func @transform_3(%arg0: i32, %arg1: i32) -> (i32, i32, i32) {
    %c0_i32 = arith.constant 0 : i32
    %c0_i32_0 = arith.constant 0 : i32
    %c0_i32_1 = arith.constant 0 : i32
    return %arg0, %c0_i32, %c0_i32_0 : i32, i32, i32
  }
}

</mosaic_0001>

<llo_original>
// kernel: tpu_custom_call.1
$region0: #{tpu_custom_call.1}
  #allocation0 [shape = 'u32[]', space=smem, size = 0x4, offset = 0x4, fixed_abs, tag = 'smem constant byte address 0x4 - core index']
  #allocation1 [shape = 'u32[144,128]{1,0:T(1,128)}', space=vmem, size = 0x12000, scoped, tag = 'internal scratch']
  %s0 = inlined_call_operand.hbm [shape: bf16[512,896], index: 0, kind: input, shape index: {}]
  %s1 = inlined_call_operand.hbm [shape: bf16[896,128], index: 1, kind: input, shape index: {}]
  %s2 = inlined_call_operand.hbm [shape: f32[512,128], index: 2, kind: output, shape index: {0}]
  %s3 = inlined_call_operand.hbm [shape: f32[1,2,128], index: 3, kind: output, shape index: {1}]
  %4 = xla_tuple %s2, %s3
  %s5 = sld [smem:[#allocation0]]
  $region42: #{tpu_custom_call.1} parent=0
    _
  %s7 = ssub.s32 1, %s5
  %s8 = scalar_select 0, %s7, %s5
  $region1: #{tpu_custom_call.1} parent=0
    #allocation2 [shape = 'u8[917504]{0}', space=vmem, size = 0xe0000, scoped, tag = 'input window, operand 0, single buffered']
    #allocation3 [shape = 's32[1]{0}', space=sflag, size = 0x4, scoped, tag = 'scoped memory for tpu_custom_call.1']
    #allocation4 [shape = 's32[1]{0}', space=sflag, size = 0x4, scoped, tag = 'scoped memory for tpu_custom_call.1']
    #allocation5 [shape = 'u8[229376]{0}', space=vmem, size = 0x38000, scoped, tag = 'input window, operand 1, single buffered']
    #allocation6 [shape = 's32[1]{0}', space=sflag, size = 0x4, scoped, tag = 'scoped memory for tpu_custom_call.1']
    #allocation7 [shape = 'u8[262144]{0}', space=vmem, size = 0x40000, scoped, tag = 'output window, operand 0, single buffered']
    #allocation8 [shape = 'u8[1024]{0}', space=vmem, size = 0x400, scoped, tag = 'output window, operand 1, single buffered']
    #allocation9 [shape = 's32[1]{0}', space=sflag, size = 0x4, scoped, tag = 'scoped memory for tpu_custom_call.1']
    %9 = vsyncpa [#allocation3], 0
    %10 = vsyncpa [#allocation6], 0
    %11 = vsyncpa [#allocation4], 0
    %12 = vsyncpa [#allocation9], 0
    // Predicated region
    $region2: #{tpu_custom_call.1} parent=1 // pred_check
      _
    $region3: #{tpu_custom_call.1} parent=1 // pred_check_branch
      %14 = sbr.rel (0) target = $region5
    $region4: #{tpu_custom_call.1} parent=1 // pred_region
      %s16 = ssub.s32 28672, 28672
      %17 = vsyncadd [#allocation3], %s16
      %s18 = sshll.u32 [#allocation2], 4
      %s19 = int_to_ptr.vmem [resolvable:$true] %s18
      %24 = dma.hbm_to_vmem [thread:$0]  %s0, 28672, %s19, [#allocation3], 448, 448, 28
    $region5: #{tpu_custom_call.1} parent=1 // pred_fallthru
      _
    // Predicated region
    $region6: #{tpu_custom_call.1} parent=1 // pred_check
      _
    $region7: #{tpu_custom_call.1} parent=1 // pred_check_branch
      %26 = sbr.rel (0) target = $region9
    $region8: #{tpu_custom_call.1} parent=1 // pred_region
      %s28 = ssub.s32 7168, 7168
      %29 = vsyncadd [#allocation6], %s28
      %s30 = sshll.u32 [#allocation5], 4
      %s31 = int_to_ptr.vmem [resolvable:$true] %s30
      %36 = dma.hbm_to_vmem [thread:$0]  %s1, 7168, %s31, [#allocation6], 64, 64, 4
    $region9: #{tpu_custom_call.1} parent=1 // pred_fallthru
      _
    // Predicated region
    $region10: #{tpu_custom_call.1} parent=1 // pred_check
      _
    $region11: #{tpu_custom_call.1} parent=1 // pred_check_branch
      %38 = sbr.rel (0) target = $region13
    $region12: #{tpu_custom_call.1} parent=1 // pred_region
      %39 = dma.done [#allocation3], 28672
    $region13: #{tpu_custom_call.1} parent=1 // pred_fallthru
      _
    // Predicated region
    $region14: #{tpu_custom_call.1} parent=1 // pred_check
      _
    $region15: #{tpu_custom_call.1} parent=1 // pred_check_branch
      %41 = sbr.rel (0) target = $region17
    $region16: #{tpu_custom_call.1} parent=1 // pred_region
      %42 = dma.done [#allocation6], 7168
    $region17: #{tpu_custom_call.1} parent=1 // pred_fallthru
      _
    %p44 = scmp.eq.s32.totalorder 0, 0
    // Predicated region
    $region18: #{tpu_custom_call.1} parent=1 // pred_check
      %p45 = pneg %p44
    $region19: #{tpu_custom_call.1} parent=1 // pred_check_branch
      %47 = sbr.rel (%p45) target = $region21
    $region20: #{tpu_custom_call.1} parent=1 // pred_region
      %48 = vst [vmem:[#allocation7] sm:$0xff] 0.0
      %49 = vst [vmem:[#allocation7 + $0x8] sm:$0xff] 0.0
      %50 = vst [vmem:[#allocation7 + $0x10] sm:$0xff] 0.0
      %51 = vst [vmem:[#allocation7 + $0x18] sm:$0xff] 0.0
      %52 = vst [vmem:[#allocation7 + $0x20] sm:$0xff] 0.0
      %53 = vst [vmem:[#allocation7 + $0x28] sm:$0xff] 0.0
      %54 = vst [vmem:[#allocation7 + $0x30] sm:$0xff] 0.0
      %55 = vst [vmem:[#allocation7 + $0x38] sm:$0xff] 0.0
      %56 = vst [vmem:[#allocation7 + $0x40] sm:$0xff] 0.0
      %57 = vst [vmem:[#allocation7 + $0x48] sm:$0xff] 0.0
      %58 = vst [vmem:[#allocation7 + $0x50] sm:$0xff] 0.0
      %59 = vst [vmem:[#allocation7 + $0x58] sm:$0xff] 0.0
      %60 = vst [vmem:[#allocation7 + $0x60] sm:$0xff] 0.0
      %61 = vst [vmem:[#allocation7 + $0x68] sm:$0xff] 0.0
      %62 = vst [vmem:[#allocation7 + $0x70] sm:$0xff] 0.0
      %63 = vst [vmem:[#allocation7 + $0x78] sm:$0xff] 0.0
      %64 = vst [vmem:[#allocation7 + $0x80] sm:$0xff] 0.0
      %65 = vst [vmem:[#allocation7 + $0x88] sm:$0xff] 0.0
      %66 = vst [vmem:[#allocation7 + $0x90] sm:$0xff] 0.0
      %67 = vst [vmem:[#allocation7 + $0x98] sm:$0xff] 0.0
      %68 = vst [vmem:[#allocation7 + $0xa0] sm:$0xff] 0.0
      %69 = vst [vmem:[#allocation7 + $0xa8] sm:$0xff] 0.0
      %70 = vst [vmem:[#allocation7 + $0xb0] sm:$0xff] 0.0
      %71 = vst [vmem:[#allocation7 + $0xb8] sm:$0xff] 0.0
      %72 = vst [vmem:[#allocation7 + $0xc0] sm:$0xff] 0.0
      %73 = vst [vmem:[#allocation7 + $0xc8] sm:$0xff] 0.0
      %74 = vst [vmem:[#allocation7 + $0xd0] sm:$0xff] 0.0
      %75 = vst [vmem:[#allocation7 + $0xd8] sm:$0xff] 0.0
      %76 = vst [vmem:[#allocation7 + $0xe0] sm:$0xff] 0.0
      %77 = vst [vmem:[#allocation7 + $0xe8] sm:$0xff] 0.0
      %78 = vst [vmem:[#allocation7 + $0xf0] sm:$0xff] 0.0
      %79 = vst [vmem:[#allocation7 + $0xf8] sm:$0xff] 0.0
      %80 = vst [vmem:[#allocation7 + $0x100] sm:$0xff] 0.0
      %81 = vst [vmem:[#allocation7 + $0x108] sm:$0xff] 0.0
      %82 = vst [vmem:[#allocation7 + $0x110] sm:$0xff] 0.0
      %83 = vst [vmem:[#allocation7 + $0x118] sm:$0xff] 0.0
      %84 = vst [vmem:[#allocation7 + $0x120] sm:$0xff] 0.0
      %85 = vst [vmem:[#allocation7 + $0x128] sm:$0xff] 0.0
      %86 = vst [vmem:[#allocation7 + $0x130] sm:$0xff] 0.0
      %87 = vst [vmem:[#allocation7 + $0x138] sm:$0xff] 0.0
      %88 = vst [vmem:[#allocation7 + $0x140] sm:$0xff] 0.0
      %89 = vst [vmem:[#allocation7 + $0x148] sm:$0xff] 0.0
      %90 = vst [vmem:[#allocation7 + $0x150] sm:$0xff] 0.0
      %91 = vst [vmem:[#allocation7 + $0x158] sm:$0xff] 0.0
      %92 = vst [vmem:[#allocation7 + $0x160] sm:$0xff] 0.0
      %93 = vst [vmem:[#allocation7 + $0x168] sm:$0xff] 0.0
      %94 = vst [vmem:[#allocation7 + $0x170] sm:$0xff] 0.0
      %95 = vst [vmem:[#allocation7 + $0x178] sm:$0xff] 0.0
      %96 = vst [vmem:[#allocation7 + $0x180] sm:$0xff] 0.0
      %97 = vst [vmem:[#allocation7 + $0x188] sm:$0xff] 0.0
      %98 = vst [vmem:[#allocation7 + $0x190] sm:$0xff] 0.0
      %99 = vst [vmem:[#allocation7 + $0x198] sm:$0xff] 0.0
      %100 = vst [vmem:[#allocation7 + $0x1a0] sm:$0xff] 0.0
      %101 = vst [vmem:[#allocation7 + $0x1a8] sm:$0xff] 0.0
      %102 = vst [vmem:[#allocation7 + $0x1b0] sm:$0xff] 0.0
      %103 = vst [vmem:[#allocation7 + $0x1b8] sm:$0xff] 0.0
      %104 = vst [vmem:[#allocation7 + $0x1c0] sm:$0xff] 0.0
      %105 = vst [vmem:[#allocation7 + $0x1c8] sm:$0xff] 0.0
      %106 = vst [vmem:[#allocation7 + $0x1d0] sm:$0xff] 0.0
      %107 = vst [vmem:[#allocation7 + $0x1d8] sm:$0xff] 0.0
      %108 = vst [vmem:[#allocation7 + $0x1e0] sm:$0xff] 0.0
      %109 = vst [vmem:[#allocation7 + $0x1e8] sm:$0xff] 0.0
      %110 = vst [vmem:[#allocation7 + $0x1f0] sm:$0xff] 0.0
      %111 = vst [vmem:[#allocation7 + $0x1f8] sm:$0xff] 0.0
    $region21: #{tpu_custom_call.1} parent=1 // pred_fallthru
      _
    %v112 = vld [vmem:[#allocation7] sm:$0xff]
    %v113 = vld [vmem:[#allocation7 + $0x8] sm:$0xff]
    %v114 = vld [vmem:[#allocation7 + $0x10] sm:$0xff]
    %v115 = vld [vmem:[#allocation7 + $0x18] sm:$0xff]
    %v116 = vld [vmem:[#allocation7 + $0x20] sm:$0xff]
    %v117 = vld [vmem:[#allocation7 + $0x28] sm:$0xff]
    %v118 = vld [vmem:[#allocation7 + $0x30] sm:$0xff]
    %v119 = vld [vmem:[#allocation7 + $0x38] sm:$0xff]
    %v120 = vld [vmem:[#allocation7 + $0x40] sm:$0xff]
    %v121 = vld [vmem:[#allocation7 + $0x48] sm:$0xff]
    %v122 = vld [vmem:[#allocation7 + $0x50] sm:$0xff]
    %v123 = vld [vmem:[#allocation7 + $0x58] sm:$0xff]
    %v124 = vld [vmem:[#allocation7 + $0x60] sm:$0xff]
    %v125 = vld [vmem:[#allocation7 + $0x68] sm:$0xff]
    %v126 = vld [vmem:[#allocation7 + $0x70] sm:$0xff]
    %v127 = vld [vmem:[#allocation7 + $0x78] sm:$0xff]
    %v128 = vld [vmem:[#allocation7 + $0x80] sm:$0xff]
    %v129 = vld [vmem:[#allocation7 + $0x88] sm:$0xff]
    %v130 = vld [vmem:[#allocation7 + $0x90] sm:$0xff]
    %v131 = vld [vmem:[#allocation7 + $0x98] sm:$0xff]
    %v132 = vld [vmem:[#allocation7 + $0xa0] sm:$0xff]
    %v133 = vld [vmem:[#allocation7 + $0xa8] sm:$0xff]
    %v134 = vld [vmem:[#allocation7 + $0xb0] sm:$0xff]
    %v135 = vld [vmem:[#allocation7 + $0xb8] sm:$0xff]
    %v136 = vld [vmem:[#allocation7 + $0xc0] sm:$0xff]
    %v137 = vld [vmem:[#allocation7 + $0xc8] sm:$0xff]
    %v138 = vld [vmem:[#allocation7 + $0xd0] sm:$0xff]
    %v139 = vld [vmem:[#allocation7 + $0xd8] sm:$0xff]
    %v140 = vld [vmem:[#allocation7 + $0xe0] sm:$0xff]
    %v141 = vld [vmem:[#allocation7 + $0xe8] sm:$0xff]
    %v142 = vld [vmem:[#allocation7 + $0xf0] sm:$0xff]
    %v143 = vld [vmem:[#allocation7 + $0xf8] sm:$0xff]
    %v144 = vld [vmem:[#allocation7 + $0x100] sm:$0xff]
    %v145 = vld [vmem:[#allocation7 + $0x108] sm:$0xff]
    %v146 = vld [vmem:[#allocation7 + $0x110] sm:$0xff]
    %v147 = vld [vmem:[#allocation7 + $0x118] sm:$0xff]
    %v148 = vld [vmem:[#allocation7 + $0x120] sm:$0xff]
    %v149 = vld [vmem:[#allocation7 + $0x128] sm:$0xff]
    %v150 = vld [vmem:[#allocation7 + $0x130] sm:$0xff]
    %v151 = vld [vmem:[#allocation7 + $0x138] sm:$0xff]
    %v152 = vld [vmem:[#allocation7 + $0x140] sm:$0xff]
    %v153 = vld [vmem:[#allocation7 + $0x148] sm:$0xff]
    %v154 = vld [vmem:[#allocation7 + $0x150] sm:$0xff]
    %v155 = vld [vmem:[#allocation7 + $0x158] sm:$0xff]
    %v156 = vld [vmem:[#allocation7 + $0x160] sm:$0xff]
    %v157 = vld [vmem:[#allocation7 + $0x168] sm:$0xff]
    %v158 = vld [vmem:[#allocation7 + $0x170] sm:$0xff]
    %v159 = vld [vmem:[#allocation7 + $0x178] sm:$0xff]
    %v160 = vld [vmem:[#allocation7 + $0x180] sm:$0xff]
    %v161 = vld [vmem:[#allocation7 + $0x188] sm:$0xff]
    %v162 = vld [vmem:[#allocation7 + $0x190] sm:$0xff]
    %v163 = vld [vmem:[#allocation7 + $0x198] sm:$0xff]
    %v164 = vld [vmem:[#allocation7 + $0x1a0] sm:$0xff]
    %v165 = vld [vmem:[#allocation7 + $0x1a8] sm:$0xff]
    %v166 = vld [vmem:[#allocation7 + $0x1b0] sm:$0xff]
    %v167 = vld [vmem:[#allocation7 + $0x1b8] sm:$0xff]
    %v168 = vld [vmem:[#allocation7 + $0x1c0] sm:$0xff]
    %v169 = vld [vmem:[#allocation7 + $0x1c8] sm:$0xff]
    %v170 = vld [vmem:[#allocation7 + $0x1d0] sm:$0xff]
    %v171 = vld [vmem:[#allocation7 + $0x1d8] sm:$0xff]
    %v172 = vld [vmem:[#allocation7 + $0x1e0] sm:$0xff]
    %v173 = vld [vmem:[#allocation7 + $0x1e8] sm:$0xff]
    %v174 = vld [vmem:[#allocation7 + $0x1f0] sm:$0xff]
    %v175 = vld [vmem:[#allocation7 + $0x1f8] sm:$0xff]
    %v176 = vld [vmem:[#allocation2] sm:$0xff]
    %v177 = vld [vmem:[#allocation2 + $0x8] sm:$0xff]
    %v178 = vld [vmem:[#allocation2 + $0x10] sm:$0xff]
    %v179 = vld [vmem:[#allocation2 + $0x18] sm:$0xf]
    %v180 = vld [vmem:[#allocation2 + $0x1c] sm:$0xff]
    %v181 = vld [vmem:[#allocation2 + $0x24] sm:$0xff]
    %v182 = vld [vmem:[#allocation2 + $0x2c] sm:$0xff]
    %v183 = vld [vmem:[#allocation2 + $0x34] sm:$0xf]
    %v184 = vld [vmem:[#allocation2 + $0x38] sm:$0xff]
    %v185 = vld [vmem:[#allocation2 + $0x40] sm:$0xff]
    %v186 = vld [vmem:[#allocation2 + $0x48] sm:$0xff]
    %v187 = vld [vmem:[#allocation2 + $0x50] sm:$0xf]
    %v188 = vld [vmem:[#allocation2 + $0x54] sm:$0xff]
    %v189 = vld [vmem:[#allocation2 + $0x5c] sm:$0xff]
    %v190 = vld [vmem:[#allocation2 + $0x64] sm:$0xff]
    %v191 = vld [vmem:[#allocation2 + $0x6c] sm:$0xf]
    %v192 = vld [vmem:[#allocation2 + $0x70] sm:$0xff]
    %v193 = vld [vmem:[#allocation2 + $0x78] sm:$0xff]
    %v194 = vld [vmem:[#allocation2 + $0x80] sm:$0xff]
    %v195 = vld [vmem:[#allocation2 + $0x88] sm:$0xf]
    %v196 = vld [vmem:[#allocation2 + $0x8c] sm:$0xff]
    %v197 = vld [vmem:[#allocation2 + $0x94] sm:$0xff]
    %v198 = vld [vmem:[#allocation2 + $0x9c] sm:$0xff]
    %v199 = vld [vmem:[#allocation2 + $0xa4] sm:$0xf]
    %v200 = vld [vmem:[#allocation2 + $0xa8] sm:$0xff]
    %v201 = vld [vmem:[#allocation2 + $0xb0] sm:$0xff]
    %v202 = vld [vmem:[#allocation2 + $0xb8] sm:$0xff]
    %v203 = vld [vmem:[#allocation2 + $0xc0] sm:$0xf]
    %v204 = vld [vmem:[#allocation2 + $0xc4] sm:$0xff]
    %v205 = vld [vmem:[#allocation2 + $0xcc] sm:$0xff]
    %v206 = vld [vmem:[#allocation2 + $0xd4] sm:$0xff]
    %v207 = vld [vmem:[#allocation2 + $0xdc] sm:$0xf]
    %v208 = vld [vmem:[#allocation2 + $0xe0] sm:$0xff]
    %v209 = vld [vmem:[#allocation2 + $0xe8] sm:$0xff]
    %v210 = vld [vmem:[#allocation2 + $0xf0] sm:$0xff]
    %v211 = vld [vmem:[#allocation2 + $0xf8] sm:$0xf]
    %v212 = vld [vmem:[#allocation2 + $0xfc] sm:$0xff]
    %v213 = vld [vmem:[#allocation2 + $0x104] sm:$0xff]
    %v214 = vld [vmem:[#allocation2 + $0x10c] sm:$0xff]
    %v215 = vld [vmem:[#allocation2 + $0x114] sm:$0xf]
    %v216 = vld [vmem:[#allocation2 + $0x118] sm:$0xff]
    %v217 = vld [vmem:[#allocation2 + $0x120] sm:$0xff]
    %v218 = vld [vmem:[#allocation2 + $0x128] sm:$0xff]
    %v219 = vld [vmem:[#allocation2 + $0x130] sm:$0xf]
    %v220 = vld [vmem:[#allocation2 + $0x134] sm:$0xff]
    %v221 = vld [vmem:[#allocation2 + $0x13c] sm:$0xff]
    %v222 = vld [vmem:[#allocation2 + $0x144] sm:$0xff]
    %v223 = vld [vmem:[#allocation2 + $0x14c] sm:$0xf]
    %v224 = vld [vmem:[#allocation2 + $0x150] sm:$0xff]
    %v225 = vld [vmem:[#allocation2 + $0x158] sm:$0xff]
    %v226 = vld [vmem:[#allocation2 + $0x160] sm:$0xff]
    %v227 = vld [vmem:[#allocation2 + $0x168] sm:$0xf]
    %v228 = vld [vmem:[#allocation2 + $0x16c] sm:$0xff]
    %v229 = vld [vmem:[#allocation2 + $0x174] sm:$0xff]
    %v230 = vld [vmem:[#allocation2 + $0x17c] sm:$0xff]
    %v231 = vld [vmem:[#allocation2 + $0x184] sm:$0xf]
    %v232 = vld [vmem:[#allocation2 + $0x188] sm:$0xff]
    %v233 = vld [vmem:[#allocation2 + $0x190] sm:$0xff]
    %v234 = vld [vmem:[#allocation2 + $0x198] sm:$0xff]
    %v235 = vld [vmem:[#allocation2 + $0x1a0] sm:$0xf]
    %v236 = vld [vmem:[#allocation2 + $0x1a4] sm:$0xff]
    %v237 = vld [vmem:[#allocation2 + $0x1ac] sm:$0xff]
    %v238 = vld [vmem:[#allocation2 + $0x1b4] sm:$0xff]
    %v239 = vld [vmem:[#allocation2 + $0x1bc] sm:$0xf]
    %v240 = vld [vmem:[#allocation2 + $0x1c0] sm:$0xff]
    %v241 = vld [vmem:[#allocation2 + $0x1c8] sm:$0xff]
    %v242 = vld [vmem:[#allocation2 + $0x1d0] sm:$0xff]
    %v243 = vld [vmem:[#allocation2 + $0x1d8] sm:$0xf]
    %v244 = vld [vmem:[#allocation2 + $0x1dc] sm:$0xff]
    %v245 = vld [vmem:[#allocation2 + $0x1e4] sm:$0xff]
    %v246 = vld [vmem:[#allocation2 + $0x1ec] sm:$0xff]
    %v247 = vld [vmem:[#allocation2 + $0x1f4] sm:$0xf]
    %v248 = vld [vmem:[#allocation2 + $0x1f8] sm:$0xff]
    %v249 = vld [vmem:[#allocation2 + $0x200] sm:$0xff]
    %v250 = vld [vmem:[#allocation2 + $0x208] sm:$0xff]
    %v251 = vld [vmem:[#allocation2 + $0x210] sm:$0xf]
    %v252 = vld [vmem:[#allocation2 + $0x214] sm:$0xff]
    %v253 = vld [vmem:[#allocation2 + $0x21c] sm:$0xff]
    %v254 = vld [vmem:[#allocation2 + $0x224] sm:$0xff]
    %v255 = vld [vmem:[#allocation2 + $0x22c] sm:$0xf]
    %v256 = vld [vmem:[#allocation2 + $0x230] sm:$0xff]
    %v257 = vld [vmem:[#allocation2 + $0x238] sm:$0xff]
    %v258 = vld [vmem:[#allocation2 + $0x240] sm:$0xff]
    %v259 = vld [vmem:[#allocation2 + $0x248] sm:$0xf]
    %v260 = vld [vmem:[#allocation2 + $0x24c] sm:$0xff]
    %v261 = vld [vmem:[#allocation2 + $0x254] sm:$0xff]
    %v262 = vld [vmem:[#allocation2 + $0x25c] sm:$0xff]
    %v263 = vld [vmem:[#allocation2 + $0x264] sm:$0xf]
    %v264 = vld [vmem:[#allocation2 + $0x268] sm:$0xff]
    %v265 = vld [vmem:[#allocation2 + $0x270] sm:$0xff]
    %v266 = vld [vmem:[#allocation2 + $0x278] sm:$0xff]
    %v267 = vld [vmem:[#allocation2 + $0x280] sm:$0xf]
    %v268 = vld [vmem:[#allocation2 + $0x284] sm:$0xff]
    %v269 = vld [vmem:[#allocation2 + $0x28c] sm:$0xff]
    %v270 = vld [vmem:[#allocation2 + $0x294] sm:$0xff]
    %v271 = vld [vmem:[#allocation2 + $0x29c] sm:$0xf]
    %v272 = vld [vmem:[#allocation2 + $0x2a0] sm:$0xff]
    %v273 = vld [vmem:[#allocation2 + $0x2a8] sm:$0xff]
    %v274 = vld [vmem:[#allocation2 + $0x2b0] sm:$0xff]
    %v275 = vld [vmem:[#allocation2 + $0x2b8] sm:$0xf]
    %v276 = vld [vmem:[#allocation2 + $0x2bc] sm:$0xff]
    %v277 = vld [vmem:[#allocation2 + $0x2c4] sm:$0xff]
    %v278 = vld [vmem:[#allocation2 + $0x2cc] sm:$0xff]
    %v279 = vld [vmem:[#allocation2 + $0x2d4] sm:$0xf]
    %v280 = vld [vmem:[#allocation2 + $0x2d8] sm:$0xff]
    %v281 = vld [vmem:[#allocation2 + $0x2e0] sm:$0xff]
    %v282 = vld [vmem:[#allocation2 + $0x2e8] sm:$0xff]
    %v283 = vld [vmem:[#allocation2 + $0x2f0] sm:$0xf]
    %v284 = vld [vmem:[#allocation2 + $0x2f4] sm:$0xff]
    %v285 = vld [vmem:[#allocation2 + $0x2fc] sm:$0xff]
    %v286 = vld [vmem:[#allocation2 + $0x304] sm:$0xff]
    %v287 = vld [vmem:[#allocation2 + $0x30c] sm:$0xf]
    %v288 = vld [vmem:[#allocation2 + $0x310] sm:$0xff]
    %v289 = vld [vmem:[#allocation2 + $0x318] sm:$0xff]
    %v290 = vld [vmem:[#allocation2 + $0x320] sm:$0xff]
    %v291 = vld [vmem:[#allocation2 + $0x328] sm:$0xf]
    %v292 = vld [vmem:[#allocation2 + $0x32c] sm:$0xff]
    %v293 = vld [vmem:[#allocation2 + $0x334] sm:$0xff]
    %v294 = vld [vmem:[#allocation2 + $0x33c] sm:$0xff]
    %v295 = vld [vmem:[#allocation2 + $0x344] sm:$0xf]
    %v296 = vld [vmem:[#allocation2 + $0x348] sm:$0xff]
    %v297 = vld [vmem:[#allocation2 + $0x350] sm:$0xff]
    %v298 = vld [vmem:[#allocation2 + $0x358] sm:$0xff]
    %v299 = vld [vmem:[#allocation2 + $0x360] sm:$0xf]
    %v300 = vld [vmem:[#allocation2 + $0x364] sm:$0xff]
    %v301 = vld [vmem:[#allocation2 + $0x36c] sm:$0xff]
    %v302 = vld [vmem:[#allocation2 + $0x374] sm:$0xff]
    %v303 = vld [vmem:[#allocation2 + $0x37c] sm:$0xf]
    %v304 = vld [vmem:[#allocation2 + $0x380] sm:$0xff]
    %v305 = vld [vmem:[#allocation2 + $0x388] sm:$0xff]
    %v306 = vld [vmem:[#allocation2 + $0x390] sm:$0xff]
    %v307 = vld [vmem:[#allocation2 + $0x398] sm:$0xf]
    %v308 = vld [vmem:[#allocation2 + $0x39c] sm:$0xff]
    %v309 = vld [vmem:[#allocation2 + $0x3a4] sm:$0xff]
    %v310 = vld [vmem:[#allocation2 + $0x3ac] sm:$0xff]
    %v311 = vld [vmem:[#allocation2 + $0x3b4] sm:$0xf]
    %v312 = vld [vmem:[#allocation2 + $0x3b8] sm:$0xff]
    %v313 = vld [vmem:[#allocation2 + $0x3c0] sm:$0xff]
    %v314 = vld [vmem:[#allocation2 + $0x3c8] sm:$0xff]
    %v315 = vld [vmem:[#allocation2 + $0x3d0] sm:$0xf]
    %v316 = vld [vmem:[#allocation2 + $0x3d4] sm:$0xff]
    %v317 = vld [vmem:[#allocation2 + $0x3dc] sm:$0xff]
    %v318 = vld [vmem:[#allocation2 + $0x3e4] sm:$0xff]
    %v319 = vld [vmem:[#allocation2 + $0x3ec] sm:$0xf]
    %v320 = vld [vmem:[#allocation2 + $0x3f0] sm:$0xff]
    %v321 = vld [vmem:[#allocation2 + $0x3f8] sm:$0xff]
    %v322 = vld [vmem:[#allocation2 + $0x400] sm:$0xff]
    %v323 = vld [vmem:[#allocation2 + $0x408] sm:$0xf]
    %v324 = vld [vmem:[#allocation2 + $0x40c] sm:$0xff]
    %v325 = vld [vmem:[#allocation2 + $0x414] sm:$0xff]
    %v326 = vld [vmem:[#allocation2 + $0x41c] sm:$0xff]
    %v327 = vld [vmem:[#allocation2 + $0x424] sm:$0xf]
    %v328 = vld [vmem:[#allocation2 + $0x428] sm:$0xff]
    %v329 = vld [vmem:[#allocation2 + $0x430] sm:$0xff]
    %v330 = vld [vmem:[#allocation2 + $0x438] sm:$0xff]
    %v331 = vld [vmem:[#allocation2 + $0x440] sm:$0xf]
    %v332 = vld [vmem:[#allocation2 + $0x444] sm:$0xff]
    %v333 = vld [vmem:[#allocation2 + $0x44c] sm:$0xff]
    %v334 = vld [vmem:[#allocation2 + $0x454] sm:$0xff]
    %v335 = vld [vmem:[#allocation2 + $0x45c] sm:$0xf]
    %v336 = vld [vmem:[#allocation2 + $0x460] sm:$0xff]
    %v337 = vld [vmem:[#allocation2 + $0x468] sm:$0xff]
    %v338 = vld [vmem:[#allocation2 + $0x470] sm:$0xff]
    %v339 = vld [vmem:[#allocation2 + $0x478] sm:$0xf]
    %v340 = vld [vmem:[#allocation2 + $0x47c] sm:$0xff]
    %v341 = vld [vmem:[#allocation2 + $0x484] sm:$0xff]
    %v342 = vld [vmem:[#allocation2 + $0x48c] sm:$0xff]
    %v343 = vld [vmem:[#allocation2 + $0x494] sm:$0xf]
    %v344 = vld [vmem:[#allocation2 + $0x498] sm:$0xff]
    %v345 = vld [vmem:[#allocation2 + $0x4a0] sm:$0xff]
    %v346 = vld [vmem:[#allocation2 + $0x4a8] sm:$0xff]
    %v347 = vld [vmem:[#allocation2 + $0x4b0] sm:$0xf]
    %v348 = vld [vmem:[#allocation2 + $0x4b4] sm:$0xff]
    %v349 = vld [vmem:[#allocation2 + $0x4bc] sm:$0xff]
    %v350 = vld [vmem:[#allocation2 + $0x4c4] sm:$0xff]
    %v351 = vld [vmem:[#allocation2 + $0x4cc] sm:$0xf]
    %v352 = vld [vmem:[#allocation2 + $0x4d0] sm:$0xff]
    %v353 = vld [vmem:[#allocation2 + $0x4d8] sm:$0xff]
    %v354 = vld [vmem:[#allocation2 + $0x4e0] sm:$0xff]
    %v355 = vld [vmem:[#allocation2 + $0x4e8] sm:$0xf]
    %v356 = vld [vmem:[#allocation2 + $0x4ec] sm:$0xff]
    %v357 = vld [vmem:[#allocation2 + $0x4f4] sm:$0xff]
    %v358 = vld [vmem:[#allocation2 + $0x4fc] sm:$0xff]
    %v359 = vld [vmem:[#allocation2 + $0x504] sm:$0xf]
    %v360 = vld [vmem:[#allocation2 + $0x508] sm:$0xff]
    %v361 = vld [vmem:[#allocation2 + $0x510] sm:$0xff]
    %v362 = vld [vmem:[#allocation2 + $0x518] sm:$0xff]
    %v363 = vld [vmem:[#allocation2 + $0x520] sm:$0xf]
    %v364 = vld [vmem:[#allocation2 + $0x524] sm:$0xff]
    %v365 = vld [vmem:[#allocation2 + $0x52c] sm:$0xff]
    %v366 = vld [vmem:[#allocation2 + $0x534] sm:$0xff]
    %v367 = vld [vmem:[#allocation2 + $0x53c] sm:$0xf]
    %v368 = vld [vmem:[#allocation2 + $0x540] sm:$0xff]
    %v369 = vld [vmem:[#allocation2 + $0x548] sm:$0xff]
    %v370 = vld [vmem:[#allocation2 + $0x550] sm:$0xff]
    %v371 = vld [vmem:[#allocation2 + $0x558] sm:$0xf]
    %v372 = vld [vmem:[#allocation2 + $0x55c] sm:$0xff]
    %v373 = vld [vmem:[#allocation2 + $0x564] sm:$0xff]
    %v374 = vld [vmem:[#allocation2 + $0x56c] sm:$0xff]
    %v375 = vld [vmem:[#allocation2 + $0x574] sm:$0xf]
    %v376 = vld [vmem:[#allocation2 + $0x578] sm:$0xff]
    %v377 = vld [vmem:[#allocation2 + $0x580] sm:$0xff]
    %v378 = vld [vmem:[#allocation2 + $0x588] sm:$0xff]
    %v379 = vld [vmem:[#allocation2 + $0x590] sm:$0xf]
    %v380 = vld [vmem:[#allocation2 + $0x594] sm:$0xff]
    %v381 = vld [vmem:[#allocation2 + $0x59c] sm:$0xff]
    %v382 = vld [vmem:[#allocation2 + $0x5a4] sm:$0xff]
    %v383 = vld [vmem:[#allocation2 + $0x5ac] sm:$0xf]
    %v384 = vld [vmem:[#allocation2 + $0x5b0] sm:$0xff]
    %v385 = vld [vmem:[#allocation2 + $0x5b8] sm:$0xff]
    %v386 = vld [vmem:[#allocation2 + $0x5c0] sm:$0xff]
    %v387 = vld [vmem:[#allocation2 + $0x5c8] sm:$0xf]
    %v388 = vld [vmem:[#allocation2 + $0x5cc] sm:$0xff]
    %v389 = vld [vmem:[#allocation2 + $0x5d4] sm:$0xff]
    %v390 = vld [vmem:[#allocation2 + $0x5dc] sm:$0xff]
    %v391 = vld [vmem:[#allocation2 + $0x5e4] sm:$0xf]
    %v392 = vld [vmem:[#allocation2 + $0x5e8] sm:$0xff]
    %v393 = vld [vmem:[#allocation2 + $0x5f0] sm:$0xff]
    %v394 = vld [vmem:[#allocation2 + $0x5f8] sm:$0xff]
    %v395 = vld [vmem:[#allocation2 + $0x600] sm:$0xf]
    %v396 = vld [vmem:[#allocation2 + $0x604] sm:$0xff]
    %v397 = vld [vmem:[#allocation2 + $0x60c] sm:$0xff]
    %v398 = vld [vmem:[#allocation2 + $0x614] sm:$0xff]
    %v399 = vld [vmem:[#allocation2 + $0x61c] sm:$0xf]
    %v400 = vld [vmem:[#allocation2 + $0x620] sm:$0xff]
    %v401 = vld [vmem:[#allocation2 + $0x628] sm:$0xff]
    %v402 = vld [vmem:[#allocation2 + $0x630] sm:$0xff]
    %v403 = vld [vmem:[#allocation2 + $0x638] sm:$0xf]
    %v404 = vld [vmem:[#allocation2 + $0x63c] sm:$0xff]
    %v405 = vld [vmem:[#allocation2 + $0x644] sm:$0xff]
    %v406 = vld [vmem:[#allocation2 + $0x64c] sm:$0xff]
    %v407 = vld [vmem:[#allocation2 + $0x654] sm:$0xf]
    %v408 = vld [vmem:[#allocation2 + $0x658] sm:$0xff]
    %v409 = vld [vmem:[#allocation2 + $0x660] sm:$0xff]
    %v410 = vld [vmem:[#allocation2 + $0x668] sm:$0xff]
    %v411 = vld [vmem:[#allocation2 + $0x670] sm:$0xf]
    %v412 = vld [vmem:[#allocation2 + $0x674] sm:$0xff]
    %v413 = vld [vmem:[#allocation2 + $0x67c] sm:$0xff]
    %v414 = vld [vmem:[#allocation2 + $0x684] sm:$0xff]
    %v415 = vld [vmem:[#allocation2 + $0x68c] sm:$0xf]
    %v416 = vld [vmem:[#allocation2 + $0x690] sm:$0xff]
    %v417 = vld [vmem:[#allocation2 + $0x698] sm:$0xff]
    %v418 = vld [vmem:[#allocation2 + $0x6a0] sm:$0xff]
    %v419 = vld [vmem:[#allocation2 + $0x6a8] sm:$0xf]
    %v420 = vld [vmem:[#allocation2 + $0x6ac] sm:$0xff]
    %v421 = vld [vmem:[#allocation2 + $0x6b4] sm:$0xff]
    %v422 = vld [vmem:[#allocation2 + $0x6bc] sm:$0xff]
    %v423 = vld [vmem:[#allocation2 + $0x6c4] sm:$0xf]
    %v424 = vld [vmem:[#allocation2 + $0x6c8] sm:$0xff]
    %v425 = vld [vmem:[#allocation2 + $0x6d0] sm:$0xff]
    %v426 = vld [vmem:[#allocation2 + $0x6d8] sm:$0xff]
    %v427 = vld [vmem:[#allocation2 + $0x6e0] sm:$0xf]
    %v428 = vld [vmem:[#allocation2 + $0x6e4] sm:$0xff]
    %v429 = vld [vmem:[#allocation2 + $0x6ec] sm:$0xff]
    %v430 = vld [vmem:[#allocation2 + $0x6f4] sm:$0xff]
    %v431 = vld [vmem:[#allocation2 + $0x6fc] sm:$0xf]
    %v432 = vld [vmem:[#allocation5] sm:$0xf]
    %v433 = vld [vmem:[#allocation5 + $0x4] sm:$0xf]
    %v434 = vld [vmem:[#allocation5 + $0x8] sm:$0xf]
    %v435 = vld [vmem:[#allocation5 + $0xc] sm:$0xf]
    %v436 = vld [vmem:[#allocation5 + $0x10] sm:$0xf]
    %v437 = vld [vmem:[#allocation5 + $0x14] sm:$0xf]
    %v438 = vld [vmem:[#allocation5 + $0x18] sm:$0xf]
    %v439 = vld [vmem:[#allocation5 + $0x1c] sm:$0xf]
    %v440 = vld [vmem:[#allocation5 + $0x20] sm:$0xf]
    %v441 = vld [vmem:[#allocation5 + $0x24] sm:$0xf]
    %v442 = vld [vmem:[#allocation5 + $0x28] sm:$0xf]
    %v443 = vld [vmem:[#allocation5 + $0x2c] sm:$0xf]
    %v444 = vld [vmem:[#allocation5 + $0x30] sm:$0xf]
    %v445 = vld [vmem:[#allocation5 + $0x34] sm:$0xf]
    %v446 = vld [vmem:[#allocation5 + $0x38] sm:$0xf]
    %v447 = vld [vmem:[#allocation5 + $0x3c] sm:$0xf]
    %v448 = vld [vmem:[#allocation5 + $0x40] sm:$0xf]
    %v449 = vld [vmem:[#allocation5 + $0x44] sm:$0xf]
    %v450 = vld [vmem:[#allocation5 + $0x48] sm:$0xf]
    %v451 = vld [vmem:[#allocation5 + $0x4c] sm:$0xf]
    %v452 = vld [vmem:[#allocation5 + $0x50] sm:$0xf]
    %v453 = vld [vmem:[#allocation5 + $0x54] sm:$0xf]
    %v454 = vld [vmem:[#allocation5 + $0x58] sm:$0xf]
    %v455 = vld [vmem:[#allocation5 + $0x5c] sm:$0xf]
    %v456 = vld [vmem:[#allocation5 + $0x60] sm:$0xf]
    %v457 = vld [vmem:[#allocation5 + $0x64] sm:$0xf]
    %v458 = vld [vmem:[#allocation5 + $0x68] sm:$0xf]
    %v459 = vld [vmem:[#allocation5 + $0x6c] sm:$0xf]
    %v460 = vld [vmem:[#allocation5 + $0x70] sm:$0xf]
    %v461 = vld [vmem:[#allocation5 + $0x74] sm:$0xf]
    %v462 = vld [vmem:[#allocation5 + $0x78] sm:$0xf]
    %v463 = vld [vmem:[#allocation5 + $0x7c] sm:$0xf]
    %v464 = vld [vmem:[#allocation5 + $0x80] sm:$0xf]
    %v465 = vld [vmem:[#allocation5 + $0x84] sm:$0xf]
    %v466 = vld [vmem:[#allocation5 + $0x88] sm:$0xf]
    %v467 = vld [vmem:[#allocation5 + $0x8c] sm:$0xf]
    %v468 = vld [vmem:[#allocation5 + $0x90] sm:$0xf]
    %v469 = vld [vmem:[#allocation5 + $0x94] sm:$0xf]
    %v470 = vld [vmem:[#allocation5 + $0x98] sm:$0xf]
    %v471 = vld [vmem:[#allocation5 + $0x9c] sm:$0xf]
    %v472 = vld [vmem:[#allocation5 + $0xa0] sm:$0xf]
    %v473 = vld [vmem:[#allocation5 + $0xa4] sm:$0xf]
    %v474 = vld [vmem:[#allocation5 + $0xa8] sm:$0xf]
    %v475 = vld [vmem:[#allocation5 + $0xac] sm:$0xf]
    %v476 = vld [vmem:[#allocation5 + $0xb0] sm:$0xf]
    %v477 = vld [vmem:[#allocation5 + $0xb4] sm:$0xf]
    %v478 = vld [vmem:[#allocation5 + $0xb8] sm:$0xf]
    %v479 = vld [vmem:[#allocation5 + $0xbc] sm:$0xf]
    %v480 = vld [vmem:[#allocation5 + $0xc0] sm:$0xf]
    %v481 = vld [vmem:[#allocation5 + $0xc4] sm:$0xf]
    %v482 = vld [vmem:[#allocation5 + $0xc8] sm:$0xf]
    %v483 = vld [vmem:[#allocation5 + $0xcc] sm:$0xf]
    %v484 = vld [vmem:[#allocation5 + $0xd0] sm:$0xf]
    %v485 = vld [vmem:[#allocation5 + $0xd4] sm:$0xf]
    %v486 = vld [vmem:[#allocation5 + $0xd8] sm:$0xf]
    %v487 = vld [vmem:[#allocation5 + $0xdc] sm:$0xf]
    %v488 = vld [vmem:[#allocation5 + $0xe0] sm:$0xf]
    %v489 = vld [vmem:[#allocation5 + $0xe4] sm:$0xf]
    %v490 = vld [vmem:[#allocation5 + $0xe8] sm:$0xf]
    %v491 = vld [vmem:[#allocation5 + $0xec] sm:$0xf]
    %v492 = vld [vmem:[#allocation5 + $0xf0] sm:$0xf]
    %v493 = vld [vmem:[#allocation5 + $0xf4] sm:$0xf]
    %v494 = vld [vmem:[#allocation5 + $0xf8] sm:$0xf]
    %v495 = vld [vmem:[#allocation5 + $0xfc] sm:$0xf]
    %v496 = vld [vmem:[#allocation5 + $0x100] sm:$0xf]
    %v497 = vld [vmem:[#allocation5 + $0x104] sm:$0xf]
    %v498 = vld [vmem:[#allocation5 + $0x108] sm:$0xf]
    %v499 = vld [vmem:[#allocation5 + $0x10c] sm:$0xf]
    %v500 = vld [vmem:[#allocation5 + $0x110] sm:$0xf]
    %v501 = vld [vmem:[#allocation5 + $0x114] sm:$0xf]
    %v502 = vld [vmem:[#allocation5 + $0x118] sm:$0xf]
    %v503 = vld [vmem:[#allocation5 + $0x11c] sm:$0xf]
    %v504 = vld [vmem:[#allocation5 + $0x120] sm:$0xf]
    %v505 = vld [vmem:[#allocation5 + $0x124] sm:$0xf]
    %v506 = vld [vmem:[#allocation5 + $0x128] sm:$0xf]
    %v507 = vld [vmem:[#allocation5 + $0x12c] sm:$0xf]
    %v508 = vld [vmem:[#allocation5 + $0x130] sm:$0xf]
    %v509 = vld [vmem:[#allocation5 + $0x134] sm:$0xf]
    %v510 = vld [vmem:[#allocation5 + $0x138] sm:$0xf]
    %v511 = vld [vmem:[#allocation5 + $0x13c] sm:$0xf]
    %v512 = vld [vmem:[#allocation5 + $0x140] sm:$0xf]
    %v513 = vld [vmem:[#allocation5 + $0x144] sm:$0xf]
    %v514 = vld [vmem:[#allocation5 + $0x148] sm:$0xf]
    %v515 = vld [vmem:[#allocation5 + $0x14c] sm:$0xf]
    %v516 = vld [vmem:[#allocation5 + $0x150] sm:$0xf]
    %v517 = vld [vmem:[#allocation5 + $0x154] sm:$0xf]
    %v518 = vld [vmem:[#allocation5 + $0x158] sm:$0xf]
    %v519 = vld [vmem:[#allocation5 + $0x15c] sm:$0xf]
    %v520 = vld [vmem:[#allocation5 + $0x160] sm:$0xf]
    %v521 = vld [vmem:[#allocation5 + $0x164] sm:$0xf]
    %v522 = vld [vmem:[#allocation5 + $0x168] sm:$0xf]
    %v523 = vld [vmem:[#allocation5 + $0x16c] sm:$0xf]
    %v524 = vld [vmem:[#allocation5 + $0x170] sm:$0xf]
    %v525 = vld [vmem:[#allocation5 + $0x174] sm:$0xf]
    %v526 = vld [vmem:[#allocation5 + $0x178] sm:$0xf]
    %v527 = vld [vmem:[#allocation5 + $0x17c] sm:$0xf]
    %v528 = vld [vmem:[#allocation5 + $0x180] sm:$0xf]
    %v529 = vld [vmem:[#allocation5 + $0x184] sm:$0xf]
    %v530 = vld [vmem:[#allocation5 + $0x188] sm:$0xf]
    %v531 = vld [vmem:[#allocation5 + $0x18c] sm:$0xf]
    %v532 = vld [vmem:[#allocation5 + $0x190] sm:$0xf]
    %v533 = vld [vmem:[#allocation5 + $0x194] sm:$0xf]
    %v534 = vld [vmem:[#allocation5 + $0x198] sm:$0xf]
    %v535 = vld [vmem:[#allocation5 + $0x19c] sm:$0xf]
    %v536 = vld [vmem:[#allocation5 + $0x1a0] sm:$0xf]
    %v537 = vld [vmem:[#allocation5 + $0x1a4] sm:$0xf]
    %v538 = vld [vmem:[#allocation5 + $0x1a8] sm:$0xf]
    %v539 = vld [vmem:[#allocation5 + $0x1ac] sm:$0xf]
    %v540 = vld [vmem:[#allocation5 + $0x1b0] sm:$0xf]
    %v541 = vld [vmem:[#allocation5 + $0x1b4] sm:$0xf]
    %v542 = vld [vmem:[#allocation5 + $0x1b8] sm:$0xf]
    %v543 = vld [vmem:[#allocation5 + $0x1bc] sm:$0xf]
    %v800 = vunpack.c.l.b16 %v176
    %v801 = vunpack.c.h.b16 %v176
    %v802 = vunpack.c.l.b16 %v177
    %v803 = vunpack.c.h.b16 %v177
    %v804 = vunpack.c.l.b16 %v178
    %v805 = vunpack.c.h.b16 %v178
    %v806 = vunpack.c.l.b16 %v179
    %v807 = vunpack.c.l.b16 %v180
    %v808 = vunpack.c.h.b16 %v180
    %v809 = vunpack.c.l.b16 %v181
    %v810 = vunpack.c.h.b16 %v181
    %v811 = vunpack.c.l.b16 %v182
    %v812 = vunpack.c.h.b16 %v182
    %v813 = vunpack.c.l.b16 %v183
    %v814 = vunpack.c.l.b16 %v184
    %v815 = vunpack.c.h.b16 %v184
    %v816 = vunpack.c.l.b16 %v185
    %v817 = vunpack.c.h.b16 %v185
    %v818 = vunpack.c.l.b16 %v186
    %v819 = vunpack.c.h.b16 %v186
    %v820 = vunpack.c.l.b16 %v187
    %v821 = vunpack.c.l.b16 %v188
    %v822 = vunpack.c.h.b16 %v188
    %v823 = vunpack.c.l.b16 %v189
    %v824 = vunpack.c.h.b16 %v189
    %v825 = vunpack.c.l.b16 %v190
    %v826 = vunpack.c.h.b16 %v190
    %v827 = vunpack.c.l.b16 %v191
    %v828 = vunpack.c.l.b16 %v192
    %v829 = vunpack.c.h.b16 %v192
    %v830 = vunpack.c.l.b16 %v193
    %v831 = vunpack.c.h.b16 %v193
    %v832 = vunpack.c.l.b16 %v194
    %v833 = vunpack.c.h.b16 %v194
    %v834 = vunpack.c.l.b16 %v195
    %v835 = vunpack.c.l.b16 %v196
    %v836 = vunpack.c.h.b16 %v196
    %v837 = vunpack.c.l.b16 %v197
    %v838 = vunpack.c.h.b16 %v197
    %v839 = vunpack.c.l.b16 %v198
    %v840 = vunpack.c.h.b16 %v198
    %v841 = vunpack.c.l.b16 %v199
    %v842 = vunpack.c.l.b16 %v200
    %v843 = vunpack.c.h.b16 %v200
    %v844 = vunpack.c.l.b16 %v201
    %v845 = vunpack.c.h.b16 %v201
    %v846 = vunpack.c.l.b16 %v202
    %v847 = vunpack.c.h.b16 %v202
    %v848 = vunpack.c.l.b16 %v203
    %v849 = vunpack.c.l.b16 %v204
    %v850 = vunpack.c.h.b16 %v204
    %v851 = vunpack.c.l.b16 %v205
    %v852 = vunpack.c.h.b16 %v205
    %v853 = vunpack.c.l.b16 %v206
    %v854 = vunpack.c.h.b16 %v206
    %v855 = vunpack.c.l.b16 %v207
    %v856 = vunpack.c.l.b16 %v208
    %v857 = vunpack.c.h.b16 %v208
    %v858 = vunpack.c.l.b16 %v209
    %v859 = vunpack.c.h.b16 %v209
    %v860 = vunpack.c.l.b16 %v210
    %v861 = vunpack.c.h.b16 %v210
    %v862 = vunpack.c.l.b16 %v211
    %v863 = vunpack.c.l.b16 %v212
    %v864 = vunpack.c.h.b16 %v212
    %v865 = vunpack.c.l.b16 %v213
    %v866 = vunpack.c.h.b16 %v213
    %v867 = vunpack.c.l.b16 %v214
    %v868 = vunpack.c.h.b16 %v214
    %v869 = vunpack.c.l.b16 %v215
    %v870 = vunpack.c.l.b16 %v216
    %v871 = vunpack.c.h.b16 %v216
    %v872 = vunpack.c.l.b16 %v217
    %v873 = vunpack.c.h.b16 %v217
    %v874 = vunpack.c.l.b16 %v218
    %v875 = vunpack.c.h.b16 %v218
    %v876 = vunpack.c.l.b16 %v219
    %v877 = vunpack.c.l.b16 %v220
    %v878 = vunpack.c.h.b16 %v220
    %v879 = vunpack.c.l.b16 %v221
    %v880 = vunpack.c.h.b16 %v221
    %v881 = vunpack.c.l.b16 %v222
    %v882 = vunpack.c.h.b16 %v222
    %v883 = vunpack.c.l.b16 %v223
    %v884 = vunpack.c.l.b16 %v224
    %v885 = vunpack.c.h.b16 %v224
    %v886 = vunpack.c.l.b16 %v225
    %v887 = vunpack.c.h.b16 %v225
    %v888 = vunpack.c.l.b16 %v226
    %v889 = vunpack.c.h.b16 %v226
    %v890 = vunpack.c.l.b16 %v227
    %v891 = vunpack.c.l.b16 %v228
    %v892 = vunpack.c.h.b16 %v228
    %v893 = vunpack.c.l.b16 %v229
    %v894 = vunpack.c.h.b16 %v229
    %v895 = vunpack.c.l.b16 %v230
    %v896 = vunpack.c.h.b16 %v230
    %v897 = vunpack.c.l.b16 %v231
    %v898 = vunpack.c.l.b16 %v232
    %v899 = vunpack.c.h.b16 %v232
    %v900 = vunpack.c.l.b16 %v233
    %v901 = vunpack.c.h.b16 %v233
    %v902 = vunpack.c.l.b16 %v234
    %v903 = vunpack.c.h.b16 %v234
    %v904 = vunpack.c.l.b16 %v235
    %v905 = vunpack.c.l.b16 %v236
    %v906 = vunpack.c.h.b16 %v236
    %v907 = vunpack.c.l.b16 %v237
    %v908 = vunpack.c.h.b16 %v237
    %v909 = vunpack.c.l.b16 %v238
    %v910 = vunpack.c.h.b16 %v238
    %v911 = vunpack.c.l.b16 %v239
    %v912 = vunpack.c.l.b16 %v240
    %v913 = vunpack.c.h.b16 %v240
    %v914 = vunpack.c.l.b16 %v241
    %v915 = vunpack.c.h.b16 %v241
    %v916 = vunpack.c.l.b16 %v242
    %v917 = vunpack.c.h.b16 %v242
    %v918 = vunpack.c.l.b16 %v243
    %v919 = vunpack.c.l.b16 %v244
    %v920 = vunpack.c.h.b16 %v244
    %v921 = vunpack.c.l.b16 %v245
    %v922 = vunpack.c.h.b16 %v245
    %v923 = vunpack.c.l.b16 %v246
    %v924 = vunpack.c.h.b16 %v246
    %v925 = vunpack.c.l.b16 %v247
    %v926 = vunpack.c.l.b16 %v248
    %v927 = vunpack.c.h.b16 %v248
    %v928 = vunpack.c.l.b16 %v249
    %v929 = vunpack.c.h.b16 %v249
    %v930 = vunpack.c.l.b16 %v250
    %v931 = vunpack.c.h.b16 %v250
    %v932 = vunpack.c.l.b16 %v251
    %v933 = vunpack.c.l.b16 %v252
    %v934 = vunpack.c.h.b16 %v252
    %v935 = vunpack.c.l.b16 %v253
    %v936 = vunpack.c.h.b16 %v253
    %v937 = vunpack.c.l.b16 %v254
    %v938 = vunpack.c.h.b16 %v254
    %v939 = vunpack.c.l.b16 %v255
    %v940 = vunpack.c.l.b16 %v256
    %v941 = vunpack.c.h.b16 %v256
    %v942 = vunpack.c.l.b16 %v257
    %v943 = vunpack.c.h.b16 %v257
    %v944 = vunpack.c.l.b16 %v258
    %v945 = vunpack.c.h.b16 %v258
    %v946 = vunpack.c.l.b16 %v259
    %v947 = vunpack.c.l.b16 %v260
    %v948 = vunpack.c.h.b16 %v260
    %v949 = vunpack.c.l.b16 %v261
    %v950 = vunpack.c.h.b16 %v261
    %v951 = vunpack.c.l.b16 %v262
    %v952 = vunpack.c.h.b16 %v262
    %v953 = vunpack.c.l.b16 %v263
    %v954 = vunpack.c.l.b16 %v264
    %v955 = vunpack.c.h.b16 %v264
    %v956 = vunpack.c.l.b16 %v265
    %v957 = vunpack.c.h.b16 %v265
    %v958 = vunpack.c.l.b16 %v266
    %v959 = vunpack.c.h.b16 %v266
    %v960 = vunpack.c.l.b16 %v267
    %v961 = vunpack.c.l.b16 %v268
    %v962 = vunpack.c.h.b16 %v268
    %v963 = vunpack.c.l.b16 %v269
    %v964 = vunpack.c.h.b16 %v269
    %v965 = vunpack.c.l.b16 %v270
    %v966 = vunpack.c.h.b16 %v270
    %v967 = vunpack.c.l.b16 %v271
    %v968 = vunpack.c.l.b16 %v272
    %v969 = vunpack.c.h.b16 %v272
    %v970 = vunpack.c.l.b16 %v273
    %v971 = vunpack.c.h.b16 %v273
    %v972 = vunpack.c.l.b16 %v274
    %v973 = vunpack.c.h.b16 %v274
    %v974 = vunpack.c.l.b16 %v275
    %v975 = vunpack.c.l.b16 %v276
    %v976 = vunpack.c.h.b16 %v276
    %v977 = vunpack.c.l.b16 %v277
    %v978 = vunpack.c.h.b16 %v277
    %v979 = vunpack.c.l.b16 %v278
    %v980 = vunpack.c.h.b16 %v278
    %v981 = vunpack.c.l.b16 %v279
    %v982 = vunpack.c.l.b16 %v280
    %v983 = vunpack.c.h.b16 %v280
    %v984 = vunpack.c.l.b16 %v281
    %v985 = vunpack.c.h.b16 %v281
    %v986 = vunpack.c.l.b16 %v282
    %v987 = vunpack.c.h.b16 %v282
    %v988 = vunpack.c.l.b16 %v283
    %v989 = vunpack.c.l.b16 %v284
    %v990 = vunpack.c.h.b16 %v284
    %v991 = vunpack.c.l.b16 %v285
    %v992 = vunpack.c.h.b16 %v285
    %v993 = vunpack.c.l.b16 %v286
    %v994 = vunpack.c.h.b16 %v286
    %v995 = vunpack.c.l.b16 %v287
    %v996 = vunpack.c.l.b16 %v288
    %v997 = vunpack.c.h.b16 %v288
    %v998 = vunpack.c.l.b16 %v289
    %v999 = vunpack.c.h.b16 %v289
    %v1000 = vunpack.c.l.b16 %v290
    %v1001 = vunpack.c.h.b16 %v290
    %v1002 = vunpack.c.l.b16 %v291
    %v1003 = vunpack.c.l.b16 %v292
    %v1004 = vunpack.c.h.b16 %v292
    %v1005 = vunpack.c.l.b16 %v293
    %v1006 = vunpack.c.h.b16 %v293
    %v1007 = vunpack.c.l.b16 %v294
    %v1008 = vunpack.c.h.b16 %v294
    %v1009 = vunpack.c.l.b16 %v295
    %v1010 = vunpack.c.l.b16 %v296
    %v1011 = vunpack.c.h.b16 %v296
    %v1012 = vunpack.c.l.b16 %v297
    %v1013 = vunpack.c.h.b16 %v297
    %v1014 = vunpack.c.l.b16 %v298
    %v1015 = vunpack.c.h.b16 %v298
    %v1016 = vunpack.c.l.b16 %v299
    %v1017 = vunpack.c.l.b16 %v300
    %v1018 = vunpack.c.h.b16 %v300
    %v1019 = vunpack.c.l.b16 %v301
    %v1020 = vunpack.c.h.b16 %v301
    %v1021 = vunpack.c.l.b16 %v302
    %v1022 = vunpack.c.h.b16 %v302
    %v1023 = vunpack.c.l.b16 %v303
    %v1024 = vunpack.c.l.b16 %v304
    %v1025 = vunpack.c.h.b16 %v304
    %v1026 = vunpack.c.l.b16 %v305
    %v1027 = vunpack.c.h.b16 %v305
    %v1028 = vunpack.c.l.b16 %v306
    %v1029 = vunpack.c.h.b16 %v306
    %v1030 = vunpack.c.l.b16 %v307
    %v1031 = vunpack.c.l.b16 %v308
    %v1032 = vunpack.c.h.b16 %v308
    %v1033 = vunpack.c.l.b16 %v309
    %v1034 = vunpack.c.h.b16 %v309
    %v1035 = vunpack.c.l.b16 %v310
    %v1036 = vunpack.c.h.b16 %v310
    %v1037 = vunpack.c.l.b16 %v311
    %v1038 = vunpack.c.l.b16 %v312
    %v1039 = vunpack.c.h.b16 %v312
    %v1040 = vunpack.c.l.b16 %v313
    %v1041 = vunpack.c.h.b16 %v313
    %v1042 = vunpack.c.l.b16 %v314
    %v1043 = vunpack.c.h.b16 %v314
    %v1044 = vunpack.c.l.b16 %v315
    %v1045 = vunpack.c.l.b16 %v316
    %v1046 = vunpack.c.h.b16 %v316
    %v1047 = vunpack.c.l.b16 %v317
    %v1048 = vunpack.c.h.b16 %v317
    %v1049 = vunpack.c.l.b16 %v318
    %v1050 = vunpack.c.h.b16 %v318
    %v1051 = vunpack.c.l.b16 %v319
    %v1052 = vunpack.c.l.b16 %v320
    %v1053 = vunpack.c.h.b16 %v320
    %v1054 = vunpack.c.l.b16 %v321
    %v1055 = vunpack.c.h.b16 %v321
    %v1056 = vunpack.c.l.b16 %v322
    %v1057 = vunpack.c.h.b16 %v322
    %v1058 = vunpack.c.l.b16 %v323
    %v1059 = vunpack.c.l.b16 %v324
    %v1060 = vunpack.c.h.b16 %v324
    %v1061 = vunpack.c.l.b16 %v325
    %v1062 = vunpack.c.h.b16 %v325
    %v1063 = vunpack.c.l.b16 %v326
    %v1064 = vunpack.c.h.b16 %v326
    %v1065 = vunpack.c.l.b16 %v327
    %v1066 = vunpack.c.l.b16 %v328
    %v1067 = vunpack.c.h.b16 %v328
    %v1068 = vunpack.c.l.b16 %v329
    %v1069 = vunpack.c.h.b16 %v329
    %v1070 = vunpack.c.l.b16 %v330
    %v1071 = vunpack.c.h.b16 %v330
    %v1072 = vunpack.c.l.b16 %v331
    %v1073 = vunpack.c.l.b16 %v332
    %v1074 = vunpack.c.h.b16 %v332
    %v1075 = vunpack.c.l.b16 %v333
    %v1076 = vunpack.c.h.b16 %v333
    %v1077 = vunpack.c.l.b16 %v334
    %v1078 = vunpack.c.h.b16 %v334
    %v1079 = vunpack.c.l.b16 %v335
    %v1080 = vunpack.c.l.b16 %v336
    %v1081 = vunpack.c.h.b16 %v336
    %v1082 = vunpack.c.l.b16 %v337
    %v1083 = vunpack.c.h.b16 %v337
    %v1084 = vunpack.c.l.b16 %v338
    %v1085 = vunpack.c.h.b16 %v338
    %v1086 = vunpack.c.l.b16 %v339
    %v1087 = vunpack.c.l.b16 %v340
    %v1088 = vunpack.c.h.b16 %v340
    %v1089 = vunpack.c.l.b16 %v341
    %v1090 = vunpack.c.h.b16 %v341
    %v1091 = vunpack.c.l.b16 %v342
    %v1092 = vunpack.c.h.b16 %v342
    %v1093 = vunpack.c.l.b16 %v343
    %v1094 = vunpack.c.l.b16 %v344
    %v1095 = vunpack.c.h.b16 %v344
    %v1096 = vunpack.c.l.b16 %v345
    %v1097 = vunpack.c.h.b16 %v345
    %v1098 = vunpack.c.l.b16 %v346
    %v1099 = vunpack.c.h.b16 %v346
    %v1100 = vunpack.c.l.b16 %v347
    %v1101 = vunpack.c.l.b16 %v348
    %v1102 = vunpack.c.h.b16 %v348
    %v1103 = vunpack.c.l.b16 %v349
    %v1104 = vunpack.c.h.b16 %v349
    %v1105 = vunpack.c.l.b16 %v350
    %v1106 = vunpack.c.h.b16 %v350
    %v1107 = vunpack.c.l.b16 %v351
    %v1108 = vunpack.c.l.b16 %v352
    %v1109 = vunpack.c.h.b16 %v352
    %v1110 = vunpack.c.l.b16 %v353
    %v1111 = vunpack.c.h.b16 %v353
    %v1112 = vunpack.c.l.b16 %v354
    %v1113 = vunpack.c.h.b16 %v354
    %v1114 = vunpack.c.l.b16 %v355
    %v1115 = vunpack.c.l.b16 %v356
    %v1116 = vunpack.c.h.b16 %v356
    %v1117 = vunpack.c.l.b16 %v357
    %v1118 = vunpack.c.h.b16 %v357
    %v1119 = vunpack.c.l.b16 %v358
    %v1120 = vunpack.c.h.b16 %v358
    %v1121 = vunpack.c.l.b16 %v359
    %v1122 = vunpack.c.l.b16 %v360
    %v1123 = vunpack.c.h.b16 %v360
    %v1124 = vunpack.c.l.b16 %v361
    %v1125 = vunpack.c.h.b16 %v361
    %v1126 = vunpack.c.l.b16 %v362
    %v1127 = vunpack.c.h.b16 %v362
    %v1128 = vunpack.c.l.b16 %v363
    %v1129 = vunpack.c.l.b16 %v364
    %v1130 = vunpack.c.h.b16 %v364
    %v1131 = vunpack.c.l.b16 %v365
    %v1132 = vunpack.c.h.b16 %v365
    %v1133 = vunpack.c.l.b16 %v366
    %v1134 = vunpack.c.h.b16 %v366
    %v1135 = vunpack.c.l.b16 %v367
    %v1136 = vunpack.c.l.b16 %v368
    %v1137 = vunpack.c.h.b16 %v368
    %v1138 = vunpack.c.l.b16 %v369
    %v1139 = vunpack.c.h.b16 %v369
    %v1140 = vunpack.c.l.b16 %v370
    %v1141 = vunpack.c.h.b16 %v370
    %v1142 = vunpack.c.l.b16 %v371
    %v1143 = vunpack.c.l.b16 %v372
    %v1144 = vunpack.c.h.b16 %v372
    %v1145 = vunpack.c.l.b16 %v373
    %v1146 = vunpack.c.h.b16 %v373
    %v1147 = vunpack.c.l.b16 %v374
    %v1148 = vunpack.c.h.b16 %v374
    %v1149 = vunpack.c.l.b16 %v375
    %v1150 = vunpack.c.l.b16 %v376
    %v1151 = vunpack.c.h.b16 %v376
    %v1152 = vunpack.c.l.b16 %v377
    %v1153 = vunpack.c.h.b16 %v377
    %v1154 = vunpack.c.l.b16 %v378
    %v1155 = vunpack.c.h.b16 %v378
    %v1156 = vunpack.c.l.b16 %v379
    %v1157 = vunpack.c.l.b16 %v380
    %v1158 = vunpack.c.h.b16 %v380
    %v1159 = vunpack.c.l.b16 %v381
    %v1160 = vunpack.c.h.b16 %v381
    %v1161 = vunpack.c.l.b16 %v382
    %v1162 = vunpack.c.h.b16 %v382
    %v1163 = vunpack.c.l.b16 %v383
    %v1164 = vunpack.c.l.b16 %v384
    %v1165 = vunpack.c.h.b16 %v384
    %v1166 = vunpack.c.l.b16 %v385
    %v1167 = vunpack.c.h.b16 %v385
    %v1168 = vunpack.c.l.b16 %v386
    %v1169 = vunpack.c.h.b16 %v386
    %v1170 = vunpack.c.l.b16 %v387
    %v1171 = vunpack.c.l.b16 %v388
    %v1172 = vunpack.c.h.b16 %v388
    %v1173 = vunpack.c.l.b16 %v389
    %v1174 = vunpack.c.h.b16 %v389
    %v1175 = vunpack.c.l.b16 %v390
    %v1176 = vunpack.c.h.b16 %v390
    %v1177 = vunpack.c.l.b16 %v391
    %v1178 = vunpack.c.l.b16 %v392
    %v1179 = vunpack.c.h.b16 %v392
    %v1180 = vunpack.c.l.b16 %v393
    %v1181 = vunpack.c.h.b16 %v393
    %v1182 = vunpack.c.l.b16 %v394
    %v1183 = vunpack.c.h.b16 %v394
    %v1184 = vunpack.c.l.b16 %v395
    %v1185 = vunpack.c.l.b16 %v396
    %v1186 = vunpack.c.h.b16 %v396
    %v1187 = vunpack.c.l.b16 %v397
    %v1188 = vunpack.c.h.b16 %v397
    %v1189 = vunpack.c.l.b16 %v398
    %v1190 = vunpack.c.h.b16 %v398
    %v1191 = vunpack.c.l.b16 %v399
    %v1192 = vunpack.c.l.b16 %v400
    %v1193 = vunpack.c.h.b16 %v400
    %v1194 = vunpack.c.l.b16 %v401
    %v1195 = vunpack.c.h.b16 %v401
    %v1196 = vunpack.c.l.b16 %v402
    %v1197 = vunpack.c.h.b16 %v402
    %v1198 = vunpack.c.l.b16 %v403
    %v1199 = vunpack.c.l.b16 %v404
    %v1200 = vunpack.c.h.b16 %v404
    %v1201 = vunpack.c.l.b16 %v405
    %v1202 = vunpack.c.h.b16 %v405
    %v1203 = vunpack.c.l.b16 %v406
    %v1204 = vunpack.c.h.b16 %v406
    %v1205 = vunpack.c.l.b16 %v407
    %v1206 = vunpack.c.l.b16 %v408
    %v1207 = vunpack.c.h.b16 %v408
    %v1208 = vunpack.c.l.b16 %v409
    %v1209 = vunpack.c.h.b16 %v409
    %v1210 = vunpack.c.l.b16 %v410
    %v1211 = vunpack.c.h.b16 %v410
    %v1212 = vunpack.c.l.b16 %v411
    %v1213 = vunpack.c.l.b16 %v412
    %v1214 = vunpack.c.h.b16 %v412
    %v1215 = vunpack.c.l.b16 %v413
    %v1216 = vunpack.c.h.b16 %v413
    %v1217 = vunpack.c.l.b16 %v414
    %v1218 = vunpack.c.h.b16 %v414
    %v1219 = vunpack.c.l.b16 %v415
    %v1220 = vunpack.c.l.b16 %v416
    %v1221 = vunpack.c.h.b16 %v416
    %v1222 = vunpack.c.l.b16 %v417
    %v1223 = vunpack.c.h.b16 %v417
    %v1224 = vunpack.c.l.b16 %v418
    %v1225 = vunpack.c.h.b16 %v418
    %v1226 = vunpack.c.l.b16 %v419
    %v1227 = vunpack.c.l.b16 %v420
    %v1228 = vunpack.c.h.b16 %v420
    %v1229 = vunpack.c.l.b16 %v421
    %v1230 = vunpack.c.h.b16 %v421
    %v1231 = vunpack.c.l.b16 %v422
    %v1232 = vunpack.c.h.b16 %v422
    %v1233 = vunpack.c.l.b16 %v423
    %v1234 = vunpack.c.l.b16 %v424
    %v1235 = vunpack.c.h.b16 %v424
    %v1236 = vunpack.c.l.b16 %v425
    %v1237 = vunpack.c.h.b16 %v425
    %v1238 = vunpack.c.l.b16 %v426
    %v1239 = vunpack.c.h.b16 %v426
    %v1240 = vunpack.c.l.b16 %v427
    %v1241 = vunpack.c.l.b16 %v428
    %v1242 = vunpack.c.h.b16 %v428
    %v1243 = vunpack.c.l.b16 %v429
    %v1244 = vunpack.c.h.b16 %v429
    %v1245 = vunpack.c.l.b16 %v430
    %v1246 = vunpack.c.h.b16 %v430
    %v1247 = vunpack.c.l.b16 %v431
    %v1248 = vpack.c.b16 %v807, %v800
    %v1249 = vpack.c.b16 %v808, %v801
    %v1250 = vpack.c.b16 %v809, %v802
    %v1251 = vpack.c.b16 %v810, %v803
    %v1252 = vpack.c.b16 %v811, %v804
    %v1253 = vpack.c.b16 %v812, %v805
    %v1254 = vpack.c.b16 %v813, %v806
    %v1255 = vpack.c.b16 %v821, %v814
    %v1256 = vpack.c.b16 %v822, %v815
    %v1257 = vpack.c.b16 %v823, %v816
    %v1258 = vpack.c.b16 %v824, %v817
    %v1259 = vpack.c.b16 %v825, %v818
    %v1260 = vpack.c.b16 %v826, %v819
    %v1261 = vpack.c.b16 %v827, %v820
    %v1262 = vpack.c.b16 %v835, %v828
    %v1263 = vpack.c.b16 %v836, %v829
    %v1264 = vpack.c.b16 %v837, %v830
    %v1265 = vpack.c.b16 %v838, %v831
    %v1266 = vpack.c.b16 %v839, %v832
    %v1267 = vpack.c.b16 %v840, %v833
    %v1268 = vpack.c.b16 %v841, %v834
    %v1269 = vpack.c.b16 %v849, %v842
    %v1270 = vpack.c.b16 %v850, %v843
    %v1271 = vpack.c.b16 %v851, %v844
    %v1272 = vpack.c.b16 %v852, %v845
    %v1273 = vpack.c.b16 %v853, %v846
    %v1274 = vpack.c.b16 %v854, %v847
    %v1275 = vpack.c.b16 %v855, %v848
    %v1276 = vpack.c.b16 %v863, %v856
    %v1277 = vpack.c.b16 %v864, %v857
    %v1278 = vpack.c.b16 %v865, %v858
    %v1279 = vpack.c.b16 %v866, %v859
    %v1280 = vpack.c.b16 %v867, %v860
    %v1281 = vpack.c.b16 %v868, %v861
    %v1282 = vpack.c.b16 %v869, %v862
    %v1283 = vpack.c.b16 %v877, %v870
    %v1284 = vpack.c.b16 %v878, %v871
    %v1285 = vpack.c.b16 %v879, %v872
    %v1286 = vpack.c.b16 %v880, %v873
    %v1287 = vpack.c.b16 %v881, %v874
    %v1288 = vpack.c.b16 %v882, %v875
    %v1289 = vpack.c.b16 %v883, %v876
    %v1290 = vpack.c.b16 %v891, %v884
    %v1291 = vpack.c.b16 %v892, %v885
    %v1292 = vpack.c.b16 %v893, %v886
    %v1293 = vpack.c.b16 %v894, %v887
    %v1294 = vpack.c.b16 %v895, %v888
    %v1295 = vpack.c.b16 %v896, %v889
    %v1296 = vpack.c.b16 %v897, %v890
    %v1297 = vpack.c.b16 %v905, %v898
    %v1298 = vpack.c.b16 %v906, %v899
    %v1299 = vpack.c.b16 %v907, %v900
    %v1300 = vpack.c.b16 %v908, %v901
    %v1301 = vpack.c.b16 %v909, %v902
    %v1302 = vpack.c.b16 %v910, %v903
    %v1303 = vpack.c.b16 %v911, %v904
    %v1304 = vpack.c.b16 %v919, %v912
    %v1305 = vpack.c.b16 %v920, %v913
    %v1306 = vpack.c.b16 %v921, %v914
    %v1307 = vpack.c.b16 %v922, %v915
    %v1308 = vpack.c.b16 %v923, %v916
    %v1309 = vpack.c.b16 %v924, %v917
    %v1310 = vpack.c.b16 %v925, %v918
    %v1311 = vpack.c.b16 %v933, %v926
    %v1312 = vpack.c.b16 %v934, %v927
    %v1313 = vpack.c.b16 %v935, %v928
    %v1314 = vpack.c.b16 %v936, %v929
    %v1315 = vpack.c.b16 %v937, %v930
    %v1316 = vpack.c.b16 %v938, %v931
    %v1317 = vpack.c.b16 %v939, %v932
    %v1318 = vpack.c.b16 %v947, %v940
    %v1319 = vpack.c.b16 %v948, %v941
    %v1320 = vpack.c.b16 %v949, %v942
    %v1321 = vpack.c.b16 %v950, %v943
    %v1322 = vpack.c.b16 %v951, %v944
    %v1323 = vpack.c.b16 %v952, %v945
    %v1324 = vpack.c.b16 %v953, %v946
    %v1325 = vpack.c.b16 %v961, %v954
    %v1326 = vpack.c.b16 %v962, %v955
    %v1327 = vpack.c.b16 %v963, %v956
    %v1328 = vpack.c.b16 %v964, %v957
    %v1329 = vpack.c.b16 %v965, %v958
    %v1330 = vpack.c.b16 %v966, %v959
    %v1331 = vpack.c.b16 %v967, %v960
    %v1332 = vpack.c.b16 %v975, %v968
    %v1333 = vpack.c.b16 %v976, %v969
    %v1334 = vpack.c.b16 %v977, %v970
    %v1335 = vpack.c.b16 %v978, %v971
    %v1336 = vpack.c.b16 %v979, %v972
    %v1337 = vpack.c.b16 %v980, %v973
    %v1338 = vpack.c.b16 %v981, %v974
    %v1339 = vpack.c.b16 %v989, %v982
    %v1340 = vpack.c.b16 %v990, %v983
    %v1341 = vpack.c.b16 %v991, %v984
    %v1342 = vpack.c.b16 %v992, %v985
    %v1343 = vpack.c.b16 %v993, %v986
    %v1344 = vpack.c.b16 %v994, %v987
    %v1345 = vpack.c.b16 %v995, %v988
    %v1346 = vpack.c.b16 %v1003, %v996
    %v1347 = vpack.c.b16 %v1004, %v997
    %v1348 = vpack.c.b16 %v1005, %v998
    %v1349 = vpack.c.b16 %v1006, %v999
    %v1350 = vpack.c.b16 %v1007, %v1000
    %v1351 = vpack.c.b16 %v1008, %v1001
    %v1352 = vpack.c.b16 %v1009, %v1002
    %v1353 = vpack.c.b16 %v1017, %v1010
    %v1354 = vpack.c.b16 %v1018, %v1011
    %v1355 = vpack.c.b16 %v1019, %v1012
    %v1356 = vpack.c.b16 %v1020, %v1013
    %v1357 = vpack.c.b16 %v1021, %v1014
    %v1358 = vpack.c.b16 %v1022, %v1015
    %v1359 = vpack.c.b16 %v1023, %v1016
    %v1360 = vpack.c.b16 %v1031, %v1024
    %v1361 = vpack.c.b16 %v1032, %v1025
    %v1362 = vpack.c.b16 %v1033, %v1026
    %v1363 = vpack.c.b16 %v1034, %v1027
    %v1364 = vpack.c.b16 %v1035, %v1028
    %v1365 = vpack.c.b16 %v1036, %v1029
    %v1366 = vpack.c.b16 %v1037, %v1030
    %v1367 = vpack.c.b16 %v1045, %v1038
    %v1368 = vpack.c.b16 %v1046, %v1039
    %v1369 = vpack.c.b16 %v1047, %v1040
    %v1370 = vpack.c.b16 %v1048, %v1041
    %v1371 = vpack.c.b16 %v1049, %v1042
    %v1372 = vpack.c.b16 %v1050, %v1043
    %v1373 = vpack.c.b16 %v1051, %v1044
    %v1374 = vpack.c.b16 %v1059, %v1052
    %v1375 = vpack.c.b16 %v1060, %v1053
    %v1376 = vpack.c.b16 %v1061, %v1054
    %v1377 = vpack.c.b16 %v1062, %v1055
    %v1378 = vpack.c.b16 %v1063, %v1056
    %v1379 = vpack.c.b16 %v1064, %v1057
    %v1380 = vpack.c.b16 %v1065, %v1058
    %v1381 = vpack.c.b16 %v1073, %v1066
    %v1382 = vpack.c.b16 %v1074, %v1067
    %v1383 = vpack.c.b16 %v1075, %v1068
    %v1384 = vpack.c.b16 %v1076, %v1069
    %v1385 = vpack.c.b16 %v1077, %v1070
    %v1386 = vpack.c.b16 %v1078, %v1071
    %v1387 = vpack.c.b16 %v1079, %v1072
    %v1388 = vpack.c.b16 %v1087, %v1080
    %v1389 = vpack.c.b16 %v1088, %v1081
    %v1390 = vpack.c.b16 %v1089, %v1082
    %v1391 = vpack.c.b16 %v1090, %v1083
    %v1392 = vpack.c.b16 %v1091, %v1084
    %v1393 = vpack.c.b16 %v1092, %v1085
    %v1394 = vpack.c.b16 %v1093, %v1086
    %v1395 = vpack.c.b16 %v1101, %v1094
    %v1396 = vpack.c.b16 %v1102, %v1095
    %v1397 = vpack.c.b16 %v1103, %v1096
    %v1398 = vpack.c.b16 %v1104, %v1097
    %v1399 = vpack.c.b16 %v1105, %v1098
    %v1400 = vpack.c.b16 %v1106, %v1099
    %v1401 = vpack.c.b16 %v1107, %v1100
    %v1402 = vpack.c.b16 %v1115, %v1108
    %v1403 = vpack.c.b16 %v1116, %v1109
    %v1404 = vpack.c.b16 %v1117, %v1110
    %v1405 = vpack.c.b16 %v1118, %v1111
    %v1406 = vpack.c.b16 %v1119, %v1112
    %v1407 = vpack.c.b16 %v1120, %v1113
    %v1408 = vpack.c.b16 %v1121, %v1114
    %v1409 = vpack.c.b16 %v1129, %v1122
    %v1410 = vpack.c.b16 %v1130, %v1123
    %v1411 = vpack.c.b16 %v1131, %v1124
    %v1412 = vpack.c.b16 %v1132, %v1125
    %v1413 = vpack.c.b16 %v1133, %v1126
    %v1414 = vpack.c.b16 %v1134, %v1127
    %v1415 = vpack.c.b16 %v1135, %v1128
    %v1416 = vpack.c.b16 %v1143, %v1136
    %v1417 = vpack.c.b16 %v1144, %v1137
    %v1418 = vpack.c.b16 %v1145, %v1138
    %v1419 = vpack.c.b16 %v1146, %v1139
    %v1420 = vpack.c.b16 %v1147, %v1140
    %v1421 = vpack.c.b16 %v1148, %v1141
    %v1422 = vpack.c.b16 %v1149, %v1142
    %v1423 = vpack.c.b16 %v1157, %v1150
    %v1424 = vpack.c.b16 %v1158, %v1151
    %v1425 = vpack.c.b16 %v1159, %v1152
    %v1426 = vpack.c.b16 %v1160, %v1153
    %v1427 = vpack.c.b16 %v1161, %v1154
    %v1428 = vpack.c.b16 %v1162, %v1155
    %v1429 = vpack.c.b16 %v1163, %v1156
    %v1430 = vpack.c.b16 %v1171, %v1164
    %v1431 = vpack.c.b16 %v1172, %v1165
    %v1432 = vpack.c.b16 %v1173, %v1166
    %v1433 = vpack.c.b16 %v1174, %v1167
    %v1434 = vpack.c.b16 %v1175, %v1168
    %v1435 = vpack.c.b16 %v1176, %v1169
    %v1436 = vpack.c.b16 %v1177, %v1170
    %v1437 = vpack.c.b16 %v1185, %v1178
    %v1438 = vpack.c.b16 %v1186, %v1179
    %v1439 = vpack.c.b16 %v1187, %v1180
    %v1440 = vpack.c.b16 %v1188, %v1181
    %v1441 = vpack.c.b16 %v1189, %v1182
    %v1442 = vpack.c.b16 %v1190, %v1183
    %v1443 = vpack.c.b16 %v1191, %v1184
    %v1444 = vpack.c.b16 %v1199, %v1192
    %v1445 = vpack.c.b16 %v1200, %v1193
    %v1446 = vpack.c.b16 %v1201, %v1194
    %v1447 = vpack.c.b16 %v1202, %v1195
    %v1448 = vpack.c.b16 %v1203, %v1196
    %v1449 = vpack.c.b16 %v1204, %v1197
    %v1450 = vpack.c.b16 %v1205, %v1198
    %v1451 = vpack.c.b16 %v1213, %v1206
    %v1452 = vpack.c.b16 %v1214, %v1207
    %v1453 = vpack.c.b16 %v1215, %v1208
    %v1454 = vpack.c.b16 %v1216, %v1209
    %v1455 = vpack.c.b16 %v1217, %v1210
    %v1456 = vpack.c.b16 %v1218, %v1211
    %v1457 = vpack.c.b16 %v1219, %v1212
    %v1458 = vpack.c.b16 %v1227, %v1220
    %v1459 = vpack.c.b16 %v1228, %v1221
    %v1460 = vpack.c.b16 %v1229, %v1222
    %v1461 = vpack.c.b16 %v1230, %v1223
    %v1462 = vpack.c.b16 %v1231, %v1224
    %v1463 = vpack.c.b16 %v1232, %v1225
    %v1464 = vpack.c.b16 %v1233, %v1226
    %v1465 = vpack.c.b16 %v1241, %v1234
    %v1466 = vpack.c.b16 %v1242, %v1235
    %v1467 = vpack.c.b16 %v1243, %v1236
    %v1468 = vpack.c.b16 %v1244, %v1237
    %v1469 = vpack.c.b16 %v1245, %v1238
    %v1470 = vpack.c.b16 %v1246, %v1239
    %v1471 = vpack.c.b16 %v1247, %v1240
    %v1808 = vunpack.c.l.b16 %v432
    %v1809 = vunpack.c.l.b16 %v433
    %v1810 = vunpack.c.l.b16 %v434
    %v1811 = vunpack.c.l.b16 %v435
    %v1812 = vunpack.c.l.b16 %v436
    %v1813 = vunpack.c.l.b16 %v437
    %v1814 = vunpack.c.l.b16 %v438
    %v1815 = vunpack.c.l.b16 %v439
    %v1816 = vunpack.c.l.b16 %v440
    %v1817 = vunpack.c.l.b16 %v441
    %v1818 = vunpack.c.l.b16 %v442
    %v1819 = vunpack.c.l.b16 %v443
    %v1820 = vunpack.c.l.b16 %v444
    %v1821 = vunpack.c.l.b16 %v445
    %v1822 = vunpack.c.l.b16 %v446
    %v1823 = vunpack.c.l.b16 %v447
    %v1824 = vunpack.c.l.b16 %v448
    %v1825 = vunpack.c.l.b16 %v449
    %v1826 = vunpack.c.l.b16 %v450
    %v1827 = vunpack.c.l.b16 %v451
    %v1828 = vunpack.c.l.b16 %v452
    %v1829 = vunpack.c.l.b16 %v453
    %v1830 = vunpack.c.l.b16 %v454
    %v1831 = vunpack.c.l.b16 %v455
    %v1832 = vunpack.c.l.b16 %v456
    %v1833 = vunpack.c.l.b16 %v457
    %v1834 = vunpack.c.l.b16 %v458
    %v1835 = vunpack.c.l.b16 %v459
    %v1836 = vunpack.c.l.b16 %v460
    %v1837 = vunpack.c.l.b16 %v461
    %v1838 = vunpack.c.l.b16 %v462
    %v1839 = vunpack.c.l.b16 %v463
    %v1840 = vunpack.c.l.b16 %v464
    %v1841 = vunpack.c.l.b16 %v465
    %v1842 = vunpack.c.l.b16 %v466
    %v1843 = vunpack.c.l.b16 %v467
    %v1844 = vunpack.c.l.b16 %v468
    %v1845 = vunpack.c.l.b16 %v469
    %v1846 = vunpack.c.l.b16 %v470
    %v1847 = vunpack.c.l.b16 %v471
    %v1848 = vunpack.c.l.b16 %v472
    %v1849 = vunpack.c.l.b16 %v473
    %v1850 = vunpack.c.l.b16 %v474
    %v1851 = vunpack.c.l.b16 %v475
    %v1852 = vunpack.c.l.b16 %v476
    %v1853 = vunpack.c.l.b16 %v477
    %v1854 = vunpack.c.l.b16 %v478
    %v1855 = vunpack.c.l.b16 %v479
    %v1856 = vunpack.c.l.b16 %v480
    %v1857 = vunpack.c.l.b16 %v481
    %v1858 = vunpack.c.l.b16 %v482
    %v1859 = vunpack.c.l.b16 %v483
    %v1860 = vunpack.c.l.b16 %v484
    %v1861 = vunpack.c.l.b16 %v485
    %v1862 = vunpack.c.l.b16 %v486
    %v1863 = vunpack.c.l.b16 %v487
    %v1864 = vunpack.c.l.b16 %v488
    %v1865 = vunpack.c.l.b16 %v489
    %v1866 = vunpack.c.l.b16 %v490
    %v1867 = vunpack.c.l.b16 %v491
    %v1868 = vunpack.c.l.b16 %v492
    %v1869 = vunpack.c.l.b16 %v493
    %v1870 = vunpack.c.l.b16 %v494
    %v1871 = vunpack.c.l.b16 %v495
    %v1872 = vunpack.c.l.b16 %v496
    %v1873 = vunpack.c.l.b16 %v497
    %v1874 = vunpack.c.l.b16 %v498
    %v1875 = vunpack.c.l.b16 %v499
    %v1876 = vunpack.c.l.b16 %v500
    %v1877 = vunpack.c.l.b16 %v501
    %v1878 = vunpack.c.l.b16 %v502
    %v1879 = vunpack.c.l.b16 %v503
    %v1880 = vunpack.c.l.b16 %v504
    %v1881 = vunpack.c.l.b16 %v505
    %v1882 = vunpack.c.l.b16 %v506
    %v1883 = vunpack.c.l.b16 %v507
    %v1884 = vunpack.c.l.b16 %v508
    %v1885 = vunpack.c.l.b16 %v509
    %v1886 = vunpack.c.l.b16 %v510
    %v1887 = vunpack.c.l.b16 %v511
    %v1888 = vunpack.c.l.b16 %v512
    %v1889 = vunpack.c.l.b16 %v513
    %v1890 = vunpack.c.l.b16 %v514
    %v1891 = vunpack.c.l.b16 %v515
    %v1892 = vunpack.c.l.b16 %v516
    %v1893 = vunpack.c.l.b16 %v517
    %v1894 = vunpack.c.l.b16 %v518
    %v1895 = vunpack.c.l.b16 %v519
    %v1896 = vunpack.c.l.b16 %v520
    %v1897 = vunpack.c.l.b16 %v521
    %v1898 = vunpack.c.l.b16 %v522
    %v1899 = vunpack.c.l.b16 %v523
    %v1900 = vunpack.c.l.b16 %v524
    %v1901 = vunpack.c.l.b16 %v525
    %v1902 = vunpack.c.l.b16 %v526
    %v1903 = vunpack.c.l.b16 %v527
    %v1904 = vunpack.c.l.b16 %v528
    %v1905 = vunpack.c.l.b16 %v529
    %v1906 = vunpack.c.l.b16 %v530
    %v1907 = vunpack.c.l.b16 %v531
    %v1908 = vunpack.c.l.b16 %v532
    %v1909 = vunpack.c.l.b16 %v533
    %v1910 = vunpack.c.l.b16 %v534
    %v1911 = vunpack.c.l.b16 %v535
    %v1912 = vunpack.c.l.b16 %v536
    %v1913 = vunpack.c.l.b16 %v537
    %v1914 = vunpack.c.l.b16 %v538
    %v1915 = vunpack.c.l.b16 %v539
    %v1916 = vunpack.c.l.b16 %v540
    %v1917 = vunpack.c.l.b16 %v541
    %v1918 = vunpack.c.l.b16 %v542
    %v1919 = vunpack.c.l.b16 %v543
    %v1920 = vpack.c.b16 %v1809, %v1808
    %v1921 = vpack.c.b16 %v1811, %v1810
    %v1922 = vpack.c.b16 %v1813, %v1812
    %v1923 = vpack.c.b16 %v1815, %v1814
    %v1924 = vpack.c.b16 %v1817, %v1816
    %v1925 = vpack.c.b16 %v1819, %v1818
    %v1926 = vpack.c.b16 %v1821, %v1820
    %v1927 = vpack.c.b16 %v1823, %v1822
    %v1928 = vpack.c.b16 %v1825, %v1824
    %v1929 = vpack.c.b16 %v1827, %v1826
    %v1930 = vpack.c.b16 %v1829, %v1828
    %v1931 = vpack.c.b16 %v1831, %v1830
    %v1932 = vpack.c.b16 %v1833, %v1832
    %v1933 = vpack.c.b16 %v1835, %v1834
    %v1934 = vpack.c.b16 %v1837, %v1836
    %v1935 = vpack.c.b16 %v1839, %v1838
    %v1936 = vpack.c.b16 %v1841, %v1840
    %v1937 = vpack.c.b16 %v1843, %v1842
    %v1938 = vpack.c.b16 %v1845, %v1844
    %v1939 = vpack.c.b16 %v1847, %v1846
    %v1940 = vpack.c.b16 %v1849, %v1848
    %v1941 = vpack.c.b16 %v1851, %v1850
    %v1942 = vpack.c.b16 %v1853, %v1852
    %v1943 = vpack.c.b16 %v1855, %v1854
    %v1944 = vpack.c.b16 %v1857, %v1856
    %v1945 = vpack.c.b16 %v1859, %v1858
    %v1946 = vpack.c.b16 %v1861, %v1860
    %v1947 = vpack.c.b16 %v1863, %v1862
    %v1948 = vpack.c.b16 %v1865, %v1864
    %v1949 = vpack.c.b16 %v1867, %v1866
    %v1950 = vpack.c.b16 %v1869, %v1868
    %v1951 = vpack.c.b16 %v1871, %v1870
    %v1952 = vpack.c.b16 %v1873, %v1872
    %v1953 = vpack.c.b16 %v1875, %v1874
    %v1954 = vpack.c.b16 %v1877, %v1876
    %v1955 = vpack.c.b16 %v1879, %v1878
    %v1956 = vpack.c.b16 %v1881, %v1880
    %v1957 = vpack.c.b16 %v1883, %v1882
    %v1958 = vpack.c.b16 %v1885, %v1884
    %v1959 = vpack.c.b16 %v1887, %v1886
    %v1960 = vpack.c.b16 %v1889, %v1888
    %v1961 = vpack.c.b16 %v1891, %v1890
    %v1962 = vpack.c.b16 %v1893, %v1892
    %v1963 = vpack.c.b16 %v1895, %v1894
    %v1964 = vpack.c.b16 %v1897, %v1896
    %v1965 = vpack.c.b16 %v1899, %v1898
    %v1966 = vpack.c.b16 %v1901, %v1900
    %v1967 = vpack.c.b16 %v1903, %v1902
    %v1968 = vpack.c.b16 %v1905, %v1904
    %v1969 = vpack.c.b16 %v1907, %v1906
    %v1970 = vpack.c.b16 %v1909, %v1908
    %v1971 = vpack.c.b16 %v1911, %v1910
    %v1972 = vpack.c.b16 %v1913, %v1912
    %v1973 = vpack.c.b16 %v1915, %v1914
    %v1974 = vpack.c.b16 %v1917, %v1916
    %v1975 = vpack.c.b16 %v1919, %v1918
    %2032 = vmatprep.subr.bf16.mxu0 0
    %2033 = vmatpush1.bf16.msra.mxu0 %v1920
    %2034 = vmatprep.subr.bf16.mxu0 0
    %2035 = vmatpush1.bf16.msra.mxu0 %v1921
    %2036 = vmatprep.subr.bf16.mxu0 0
    %2037 = vmatpush1.bf16.msra.mxu0 %v1922
    %2038 = vmatprep.subr.bf16.mxu0 0
    %2039 = vmatpush1.bf16.msra.mxu0 %v1923
    %2040 = vmatprep.subr.bf16.mxu0 0
    %2041 = vmatpush1.bf16.msra.mxu0 %v1924
    %2042 = vmatprep.subr.bf16.mxu0 0
    %2043 = vmatpush1.bf16.msra.mxu0 %v1925
    %2044 = vmatprep.subr.bf16.mxu0 0
    %2045 = vmatpush1.bf16.msra.mxu0 %v1926
    %2046 = vmatprep.subr.bf16.mxu0 0
    %2047 = vmatpush1.bf16.msra.mxu0 %v1927
    %2048 = vmatprep.subr.bf16.mxu0 0
    %2049 = vmatpush1.bf16.msra.mxu0 %v1928
    %2050 = vmatprep.subr.bf16.mxu0 0
    %2051 = vmatpush1.bf16.msra.mxu0 %v1929
    %2052 = vmatprep.subr.bf16.mxu0 0
    %2053 = vmatpush1.bf16.msra.mxu0 %v1930
    %2054 = vmatprep.subr.bf16.mxu0 0
    %2055 = vmatpush1.bf16.msra.mxu0 %v1931
    %2056 = vmatprep.subr.bf16.mxu0 0
    %2057 = vmatpush1.bf16.msra.mxu0 %v1932
    %2058 = vmatprep.subr.bf16.mxu0 0
    %2059 = vmatpush1.bf16.msra.mxu0 %v1933
    %2060 = vmatprep.subr.bf16.mxu0 0
    %2061 = vmatpush1.bf16.msra.mxu0 %v1934
    %2062 = vmatprep.subr.bf16.mxu0 0
    %2063 = vmatpush1.bf16.msra.mxu0 %v1935
    %2064 = vmatprep.mubr.bf16.mxu0 %v1249
    %2065 = vmatmul.mubr.bf16.gmra.mrb[0].mxu0 %v1248
    %v2066 = vpop.f32.mrb[0].mxu0
    %v2067 = vadd.f32 0.0, %v2066
    %v2068 = vpop.f32.mrb[0].mxu0
    %v2069 = vpop.f32.mrb[0].mxu0
    %v2070 = vadd.f32 0.0, %v2069
    %v2071 = vpop.f32.mrb[0].mxu0
    %2072 = vmatprep.mubr.bf16.mxu0 %v1256
    %2073 = vmatmul.mubr.bf16.gmra.mrb[0].mxu0 %v1255
    %v2074 = vpop.f32.mrb[0].mxu0
    %v2075 = vadd.f32 0.0, %v2074
    %v2076 = vpop.f32.mrb[0].mxu0
    %v2077 = vpop.f32.mrb[0].mxu0
    %v2078 = vadd.f32 0.0, %v2077
    %v2079 = vpop.f32.mrb[0].mxu0
    %2080 = vmatprep.mubr.bf16.mxu0 %v1263
    %2081 = vmatmul.mubr.bf16.gmra.mrb[0].mxu0 %v1262
    %v2082 = vpop.f32.mrb[0].mxu0
    %v2083 = vadd.f32 0.0, %v2082
    %v2084 = vpop.f32.mrb[0].mxu0
    %v2085 = vpop.f32.mrb[0].mxu0
    %v2086 = vadd.f32 0.0, %v2085
    %v2087 = vpop.f32.mrb[0].mxu0
    %2088 = vmatprep.mubr.bf16.mxu0 %v1270
    %2089 = vmatmul.mubr.bf16.gmra.mrb[0].mxu0 %v1269
    %v2090 = vpop.f32.mrb[0].mxu0
    %v2091 = vadd.f32 0.0, %v2090
    %v2092 = vpop.f32.mrb[0].mxu0
    %v2093 = vpop.f32.mrb[0].mxu0
    %v2094 = vadd.f32 0.0, %v2093
    %v2095 = vpop.f32.mrb[0].mxu0
    %2096 = vmatprep.mubr.bf16.mxu0 %v1277
    %2097 = vmatmul.mubr.bf16.gmra.mrb[0].mxu0 %v1276
    %v2098 = vpop.f32.mrb[0].mxu0
    %v2099 = vadd.f32 0.0, %v2098
    %v2100 = vpop.f32.mrb[0].mxu0
    %v2101 = vpop.f32.mrb[0].mxu0
    %v2102 = vadd.f32 0.0, %v2101
    %v2103 = vpop.f32.mrb[0].mxu0
    %2104 = vmatprep.mubr.bf16.mxu0 %v1284
    %2105 = vmatmul.mubr.bf16.gmra.mrb[0].mxu0 %v1283
    %v2106 = vpop.f32.mrb[0].mxu0
    %v2107 = vadd.f32 0.0, %v2106
    %v2108 = vpop.f32.mrb[0].mxu0
    %v2109 = vpop.f32.mrb[0].mxu0
    %v2110 = vadd.f32 0.0, %v2109
    %v2111 = vpop.f32.mrb[0].mxu0
    %2112 = vmatprep.mubr.bf16.mxu0 %v1291
    %2113 = vmatmul.mubr.bf16.gmra.mrb[0].mxu0 %v1290
    %v2114 = vpop.f32.mrb[0].mxu0
    %v2115 = vadd.f32 0.0, %v2114
    %v2116 = vpop.f32.mrb[0].mxu0
    %v2117 = vpop.f32.mrb[0].mxu0
    %v2118 = vadd.f32 0.0, %v2117
    %v2119 = vpop.f32.mrb[0].mxu0
    %2120 = vmatprep.mubr.bf16.mxu0 %v1298
    %2121 = vmatmul.mubr.bf16.gmra.mrb[0].mxu0 %v1297
    %v2122 = vpop.f32.mrb[0].mxu0
    %v2123 = vadd.f32 0.0, %v2122
    %v2124 = vpop.f32.mrb[0].mxu0
    %v2125 = vpop.f32.mrb[0].mxu0
    %v2126 = vadd.f32 0.0, %v2125
    %v2127 = vpop.f32.mrb[0].mxu0
    %2128 = vmatprep.mubr.bf16.mxu0 %v1305
    %2129 = vmatmul.mubr.bf16.gmra.mrb[0].mxu0 %v1304
    %v2130 = vpop.f32.mrb[0].mxu0
    %v2131 = vadd.f32 0.0, %v2130
    %v2132 = vpop.f32.mrb[0].mxu0
    %v2133 = vpop.f32.mrb[0].mxu0
    %v2134 = vadd.f32 0.0, %v2133
    %v2135 = vpop.f32.mrb[0].mxu0
    %2136 = vmatprep.mubr.bf16.mxu0 %v1312
    %2137 = vmatmul.mubr.bf16.gmra.mrb[0].mxu0 %v1311
    %v2138 = vpop.f32.mrb[0].mxu0
    %v2139 = vadd.f32 0.0, %v2138
    %v2140 = vpop.f32.mrb[0].mxu0
    %v2141 = vpop.f32.mrb[0].mxu0
    %v2142 = vadd.f32 0.0, %v2141
    %v2143 = vpop.f32.mrb[0].mxu0
    %2144 = vmatprep.mubr.bf16.mxu0 %v1319
    %2145 = vmatmul.mubr.bf16.gmra.mrb[0].mxu0 %v1318
    %v2146 = vpop.f32.mrb[0].mxu0
    %v2147 = vadd.f32 0.0, %v2146
    %v2148 = vpop.f32.mrb[0].mxu0
    %v2149 = vpop.f32.mrb[0].mxu0
    %v2150 = vadd.f32 0.0, %v2149
    %v2151 = vpop.f32.mrb[0].mxu0
    %2152 = vmatprep.mubr.bf16.mxu0 %v1326
    %2153 = vmatmul.mubr.bf16.gmra.mrb[0].mxu0 %v1325
    %v2154 = vpop.f32.mrb[0].mxu0
    %v2155 = vadd.f32 0.0, %v2154
    %v2156 = vpop.f32.mrb[0].mxu0
    %v2157 = vpop.f32.mrb[0].mxu0
    %v2158 = vadd.f32 0.0, %v2157
    %v2159 = vpop.f32.mrb[0].mxu0
    %2160 = vmatprep.mubr.bf16.mxu0 %v1333
    %2161 = vmatmul.mubr.bf16.gmra.mrb[0].mxu0 %v1332
    %v2162 = vpop.f32.mrb[0].mxu0
    %v2163 = vadd.f32 0.0, %v2162
    %v2164 = vpop.f32.mrb[0].mxu0
    %v2165 = vpop.f32.mrb[0].mxu0
    %v2166 = vadd.f32 0.0, %v2165
    %v2167 = vpop.f32.mrb[0].mxu0
    %2168 = vmatprep.mubr.bf16.mxu0 %v1340
    %2169 = vmatmul.mubr.bf16.gmra.mrb[0].mxu0 %v1339
    %v2170 = vpop.f32.mrb[0].mxu0
    %v2171 = vadd.f32 0.0, %v2170
    %v2172 = vpop.f32.mrb[0].mxu0
    %v2173 = vpop.f32.mrb[0].mxu0
    %v2174 = vadd.f32 0.0, %v2173
    %v2175 = vpop.f32.mrb[0].mxu0
    %2176 = vmatprep.mubr.bf16.mxu0 %v1347
    %2177 = vmatmul.mubr.bf16.gmra.mrb[0].mxu0 %v1346
    %v2178 = vpop.f32.mrb[0].mxu0
    %v2179 = vadd.f32 0.0, %v2178
    %v2180 = vpop.f32.mrb[0].mxu0
    %v2181 = vpop.f32.mrb[0].mxu0
    %v2182 = vadd.f32 0.0, %v2181
    %v2183 = vpop.f32.mrb[0].mxu0
    %2184 = vmatprep.mubr.bf16.mxu0 %v1354
    %2185 = vmatmul.mubr.bf16.gmra.mrb[0].mxu0 %v1353
    %v2186 = vpop.f32.mrb[0].mxu0
    %v2187 = vadd.f32 0.0, %v2186
    %v2188 = vpop.f32.mrb[0].mxu0
    %v2189 = vpop.f32.mrb[0].mxu0
    %v2190 = vadd.f32 0.0, %v2189
    %v2191 = vpop.f32.mrb[0].mxu0
    %2192 = vmatprep.mubr.bf16.mxu0 %v1361
    %2193 = vmatmul.mubr.bf16.gmra.mrb[0].mxu0 %v1360
    %v2194 = vpop.f32.mrb[0].mxu0
    %v2195 = vadd.f32 0.0, %v2194
    %v2196 = vpop.f32.mrb[0].mxu0
    %v2197 = vpop.f32.mrb[0].mxu0
    %v2198 = vadd.f32 0.0, %v2197
    %v2199 = vpop.f32.mrb[0].mxu0
    %2200 = vmatprep.mubr.bf16.mxu0 %v1368
    %2201 = vmatmul.mubr.bf16.gmra.mrb[0].mxu0 %v1367
    %v2202 = vpop.f32.mrb[0].mxu0
    %v2203 = vadd.f32 0.0, %v2202
    %v2204 = vpop.f32.mrb[0].mxu0
    %v2205 = vpop.f32.mrb[0].mxu0
    %v2206 = vadd.f32 0.0, %v2205
    %v2207 = vpop.f32.mrb[0].mxu0
    %2208 = vmatprep.mubr.bf16.mxu0 %v1375
    %2209 = vmatmul.mubr.bf16.gmra.mrb[0].mxu0 %v1374
    %v2210 = vpop.f32.mrb[0].mxu0
    %v2211 = vadd.f32 0.0, %v2210
    %v2212 = vpop.f32.mrb[0].mxu0
    %v2213 = vpop.f32.mrb[0].mxu0
    %v2214 = vadd.f32 0.0, %v2213
    %v2215 = vpop.f32.mrb[0].mxu0
    %2216 = vmatprep.mubr.bf16.mxu0 %v1382
    %2217 = vmatmul.mubr.bf16.gmra.mrb[0].mxu0 %v1381
    %v2218 = vpop.f32.mrb[0].mxu0
    %v2219 = vadd.f32 0.0, %v2218
    %v2220 = vpop.f32.mrb[0].mxu0
    %v2221 = vpop.f32.mrb[0].mxu0
    %v2222 = vadd.f32 0.0, %v2221
    %v2223 = vpop.f32.mrb[0].mxu0
    %2224 = vmatprep.mubr.bf16.mxu0 %v1389
    %2225 = vmatmul.mubr.bf16.gmra.mrb[0].mxu0 %v1388
    %v2226 = vpop.f32.mrb[0].mxu0
    %v2227 = vadd.f32 0.0, %v2226
    %v2228 = vpop.f32.mrb[0].mxu0
    %v2229 = vpop.f32.mrb[0].mxu0
    %v2230 = vadd.f32 0.0, %v2229
    %v2231 = vpop.f32.mrb[0].mxu0
    %2232 = vmatprep.mubr.bf16.mxu0 %v1396
    %2233 = vmatmul.mubr.bf16.gmra.mrb[0].mxu0 %v1395
    %v2234 = vpop.f32.mrb[0].mxu0
    %v2235 = vadd.f32 0.0, %v2234
    %v2236 = vpop.f32.mrb[0].mxu0
    %v2237 = vpop.f32.mrb[0].mxu0
    %v2238 = vadd.f32 0.0, %v2237
    %v2239 = vpop.f32.mrb[0].mxu0
    %2240 = vmatprep.mubr.bf16.mxu0 %v1403
    %2241 = vmatmul.mubr.bf16.gmra.mrb[0].mxu0 %v1402
    %v2242 = vpop.f32.mrb[0].mxu0
    %v2243 = vadd.f32 0.0, %v2242
    %v2244 = vpop.f32.mrb[0].mxu0
    %v2245 = vpop.f32.mrb[0].mxu0
    %v2246 = vadd.f32 0.0, %v2245
    %v2247 = vpop.f32.mrb[0].mxu0
    %2248 = vmatprep.mubr.bf16.mxu0 %v1410
    %2249 = vmatmul.mubr.bf16.gmra.mrb[0].mxu0 %v1409
    %v2250 = vpop.f32.mrb[0].mxu0
    %v2251 = vadd.f32 0.0, %v2250
    %v2252 = vpop.f32.mrb[0].mxu0
    %v2253 = vpop.f32.mrb[0].mxu0
    %v2254 = vadd.f32 0.0, %v2253
    %v2255 = vpop.f32.mrb[0].mxu0
    %2256 = vmatprep.mubr.bf16.mxu0 %v1417
    %2257 = vmatmul.mubr.bf16.gmra.mrb[0].mxu0 %v1416
    %v2258 = vpop.f32.mrb[0].mxu0
    %v2259 = vadd.f32 0.0, %v2258
    %v2260 = vpop.f32.mrb[0].mxu0
    %v2261 = vpop.f32.mrb[0].mxu0
    %v2262 = vadd.f32 0.0, %v2261
    %v2263 = vpop.f32.mrb[0].mxu0
    %2264 = vmatprep.mubr.bf16.mxu0 %v1424
    %2265 = vmatmul.mubr.bf16.gmra.mrb[0].mxu0 %v1423
    %v2266 = vpop.f32.mrb[0].mxu0
    %v2267 = vadd.f32 0.0, %v2266
    %v2268 = vpop.f32.mrb[0].mxu0
    %v2269 = vpop.f32.mrb[0].mxu0
    %v2270 = vadd.f32 0.0, %v2269
    %v2271 = vpop.f32.mrb[0].mxu0
    %2272 = vmatprep.mubr.bf16.mxu0 %v1431
    %2273 = vmatmul.mubr.bf16.gmra.mrb[0].mxu0 %v1430
    %v2274 = vpop.f32.mrb[0].mxu0
    %v2275 = vadd.f32 0.0, %v2274
    %v2276 = vpop.f32.mrb[0].mxu0
    %v2277 = vpop.f32.mrb[0].mxu0
    %v2278 = vadd.f32 0.0, %v2277
    %v2279 = vpop.f32.mrb[0].mxu0
    %2280 = vmatprep.mubr.bf16.mxu0 %v1438
    %2281 = vmatmul.mubr.bf16.gmra.mrb[0].mxu0 %v1437
    %v2282 = vpop.f32.mrb[0].mxu0
    %v2283 = vadd.f32 0.0, %v2282
    %v2284 = vpop.f32.mrb[0].mxu0
    %v2285 = vpop.f32.mrb[0].mxu0
    %v2286 = vadd.f32 0.0, %v2285
    %v2287 = vpop.f32.mrb[0].mxu0
    %2288 = vmatprep.mubr.bf16.mxu0 %v1445
    %2289 = vmatmul.mubr.bf16.gmra.mrb[0].mxu0 %v1444
    %v2290 = vpop.f32.mrb[0].mxu0
    %v2291 = vadd.f32 0.0, %v2290
    %v2292 = vpop.f32.mrb[0].mxu0
    %v2293 = vpop.f32.mrb[0].mxu0
    %v2294 = vadd.f32 0.0, %v2293
    %v2295 = vpop.f32.mrb[0].mxu0
    %2296 = vmatprep.mubr.bf16.mxu0 %v1452
    %2297 = vmatmul.mubr.bf16.gmra.mrb[0].mxu0 %v1451
    %v2298 = vpop.f32.mrb[0].mxu0
    %v2299 = vadd.f32 0.0, %v2298
    %v2300 = vpop.f32.mrb[0].mxu0
    %v2301 = vpop.f32.mrb[0].mxu0
    %v2302 = vadd.f32 0.0, %v2301
    %v2303 = vpop.f32.mrb[0].mxu0
    %2304 = vmatprep.mubr.bf16.mxu0 %v1459
    %2305 = vmatmul.mubr.bf16.gmra.mrb[0].mxu0 %v1458
    %v2306 = vpop.f32.mrb[0].mxu0
    %v2307 = vadd.f32 0.0, %v2306
    %v2308 = vpop.f32.mrb[0].mxu0
    %v2309 = vpop.f32.mrb[0].mxu0
    %v2310 = vadd.f32 0.0, %v2309
    %v2311 = vpop.f32.mrb[0].mxu0
    %2312 = vmatprep.mubr.bf16.mxu0 %v1466
    %2313 = vmatmul.mubr.bf16.gmra.mrb[0].mxu0 %v1465
    %v2314 = vpop.f32.mrb[0].mxu0
    %v2315 = vadd.f32 0.0, %v2314
    %v2316 = vpop.f32.mrb[0].mxu0
    %v2317 = vpop.f32.mrb[0].mxu0
    %v2318 = vadd.f32 0.0, %v2317
    %v2319 = vpop.f32.mrb[0].mxu0
    %2320 = vdwg.mxu0
    %2321 = vmatprep.subr.bf16.mxu0 0
    %2322 = vmatpush1.bf16.msra.mxu0 %v1936
    %2323 = vmatprep.subr.bf16.mxu0 0
    %2324 = vmatpush1.bf16.msra.mxu0 %v1937
    %2325 = vmatprep.subr.bf16.mxu0 0
    %2326 = vmatpush1.bf16.msra.mxu0 %v1938
    %2327 = vmatprep.subr.bf16.mxu0 0
    %2328 = vmatpush1.bf16.msra.mxu0 %v1939
    %2329 = vmatprep.subr.bf16.mxu0 0
    %2330 = vmatpush1.bf16.msra.mxu0 %v1940
    %2331 = vmatprep.subr.bf16.mxu0 0
    %2332 = vmatpush1.bf16.msra.mxu0 %v1941
    %2333 = vmatprep.subr.bf16.mxu0 0
    %2334 = vmatpush1.bf16.msra.mxu0 %v1942
    %2335 = vmatprep.subr.bf16.mxu0 0
    %2336 = vmatpush1.bf16.msra.mxu0 %v1943
    %2337 = vmatprep.subr.bf16.mxu0 0
    %2338 = vmatpush1.bf16.msra.mxu0 %v1944
    %2339 = vmatprep.subr.bf16.mxu0 0
    %2340 = vmatpush1.bf16.msra.mxu0 %v1945
    %2341 = vmatprep.subr.bf16.mxu0 0
    %2342 = vmatpush1.bf16.msra.mxu0 %v1946
    %2343 = vmatprep.subr.bf16.mxu0 0
    %2344 = vmatpush1.bf16.msra.mxu0 %v1947
    %2345 = vmatprep.subr.bf16.mxu0 0
    %2346 = vmatpush1.bf16.msra.mxu0 %v1948
    %2347 = vmatprep.subr.bf16.mxu0 0
    %2348 = vmatpush1.bf16.msra.mxu0 %v1949
    %2349 = vmatprep.subr.bf16.mxu0 0
    %2350 = vmatpush1.bf16.msra.mxu0 %v1950
    %2351 = vmatprep.subr.bf16.mxu0 0
    %2352 = vmatpush1.bf16.msra.mxu0 %v1951
    %2353 = vmatprep.mubr.bf16.mxu0 %v1251
    %2354 = vmatmul.mubr.bf16.gmra.mrb[0].mxu0 %v1250
    %v2355 = vpop.f32.mrb[0].mxu0
    %v2356 = vadd.f32 %v2067, %v2355
    %v2357 = vpop.f32.mrb[0].mxu0
    %v2358 = vpop.f32.mrb[0].mxu0
    %v2359 = vadd.f32 %v2070, %v2358
    %v2360 = vpop.f32.mrb[0].mxu0
    %2361 = vmatprep.mubr.bf16.mxu0 %v1258
    %2362 = vmatmul.mubr.bf16.gmra.mrb[0].mxu0 %v1257
    %v2363 = vpop.f32.mrb[0].mxu0
    %v2364 = vadd.f32 %v2075, %v2363
    %v2365 = vpop.f32.mrb[0].mxu0
    %v2366 = vpop.f32.mrb[0].mxu0
    %v2367 = vadd.f32 %v2078, %v2366
    %v2368 = vpop.f32.mrb[0].mxu0
    %2369 = vmatprep.mubr.bf16.mxu0 %v1265
    %2370 = vmatmul.mubr.bf16.gmra.mrb[0].mxu0 %v1264
    %v2371 = vpop.f32.mrb[0].mxu0
    %v2372 = vadd.f32 %v2083, %v2371
    %v2373 = vpop.f32.mrb[0].mxu0
    %v2374 = vpop.f32.mrb[0].mxu0
    %v2375 = vadd.f32 %v2086, %v2374
    %v2376 = vpop.f32.mrb[0].mxu0
    %2377 = vmatprep.mubr.bf16.mxu0 %v1272
    %2378 = vmatmul.mubr.bf16.gmra.mrb[0].mxu0 %v1271
    %v2379 = vpop.f32.mrb[0].mxu0
    %v2380 = vadd.f32 %v2091, %v2379
    %v2381 = vpop.f32.mrb[0].mxu0
    %v2382 = vpop.f32.mrb[0].mxu0
    %v2383 = vadd.f32 %v2094, %v2382
    %v2384 = vpop.f32.mrb[0].mxu0
    %2385 = vmatprep.mubr.bf16.mxu0 %v1279
    %2386 = vmatmul.mubr.bf16.gmra.mrb[0].mxu0 %v1278
    %v2387 = vpop.f32.mrb[0].mxu0
    %v2388 = vadd.f32 %v2099, %v2387
    %v2389 = vpop.f32.mrb[0].mxu0
    %v2390 = vpop.f32.mrb[0].mxu0
    %v2391 = vadd.f32 %v2102, %v2390
    %v2392 = vpop.f32.mrb[0].mxu0
    %2393 = vmatprep.mubr.bf16.mxu0 %v1286
    %2394 = vmatmul.mubr.bf16.gmra.mrb[0].mxu0 %v1285
    %v2395 = vpop.f32.mrb[0].mxu0
    %v2396 = vadd.f32 %v2107, %v2395
    %v2397 = vpop.f32.mrb[0].mxu0
    %v2398 = vpop.f32.mrb[0].mxu0
    %v2399 = vadd.f32 %v2110, %v2398
    %v2400 = vpop.f32.mrb[0].mxu0
    %2401 = vmatprep.mubr.bf16.mxu0 %v1293
    %2402 = vmatmul.mubr.bf16.gmra.mrb[0].mxu0 %v1292
    %v2403 = vpop.f32.mrb[0].mxu0
    %v2404 = vadd.f32 %v2115, %v2403
    %v2405 = vpop.f32.mrb[0].mxu0
    %v2406 = vpop.f32.mrb[0].mxu0
    %v2407 = vadd.f32 %v2118, %v2406
    %v2408 = vpop.f32.mrb[0].mxu0
    %2409 = vmatprep.mubr.bf16.mxu0 %v1300
    %2410 = vmatmul.mubr.bf16.gmra.mrb[0].mxu0 %v1299
    %v2411 = vpop.f32.mrb[0].mxu0
    %v2412 = vadd.f32 %v2123, %v2411
    %v2413 = vpop.f32.mrb[0].mxu0
    %v2414 = vpop.f32.mrb[0].mxu0
    %v2415 = vadd.f32 %v2126, %v2414
    %v2416 = vpop.f32.mrb[0].mxu0
    %2417 = vmatprep.mubr.bf16.mxu0 %v1307
    %2418 = vmatmul.mubr.bf16.gmra.mrb[0].mxu0 %v1306
    %v2419 = vpop.f32.mrb[0].mxu0
    %v2420 = vadd.f32 %v2131, %v2419
    %v2421 = vpop.f32.mrb[0].mxu0
    %v2422 = vpop.f32.mrb[0].mxu0
    %v2423 = vadd.f32 %v2134, %v2422
    %v2424 = vpop.f32.mrb[0].mxu0
    %2425 = vmatprep.mubr.bf16.mxu0 %v1314
    %2426 = vmatmul.mubr.bf16.gmra.mrb[0].mxu0 %v1313
    %v2427 = vpop.f32.mrb[0].mxu0
    %v2428 = vadd.f32 %v2139, %v2427
    %v2429 = vpop.f32.mrb[0].mxu0
    %v2430 = vpop.f32.mrb[0].mxu0
    %v2431 = vadd.f32 %v2142, %v2430
    %v2432 = vpop.f32.mrb[0].mxu0
    %2433 = vmatprep.mubr.bf16.mxu0 %v1321
    %2434 = vmatmul.mubr.bf16.gmra.mrb[0].mxu0 %v1320
    %v2435 = vpop.f32.mrb[0].mxu0
    %v2436 = vadd.f32 %v2147, %v2435
    %v2437 = vpop.f32.mrb[0].mxu0
    %v2438 = vpop.f32.mrb[0].mxu0
    %v2439 = vadd.f32 %v2150, %v2438
    %v2440 = vpop.f32.mrb[0].mxu0
    %2441 = vmatprep.mubr.bf16.mxu0 %v1328
    %2442 = vmatmul.mubr.bf16.gmra.mrb[0].mxu0 %v1327
    %v2443 = vpop.f32.mrb[0].mxu0
    %v2444 = vadd.f32 %v2155, %v2443
    %v2445 = vpop.f32.mrb[0].mxu0
    %v2446 = vpop.f32.mrb[0].mxu0
    %v2447 = vadd.f32 %v2158, %v2446
    %v2448 = vpop.f32.mrb[0].mxu0
    %2449 = vmatprep.mubr.bf16.mxu0 %v1335
    %2450 = vmatmul.mubr.bf16.gmra.mrb[0].mxu0 %v1334
    %v2451 = vpop.f32.mrb[0].mxu0
    %v2452 = vadd.f32 %v2163, %v2451
    %v2453 = vpop.f32.mrb[0].mxu0
    %v2454 = vpop.f32.mrb[0].mxu0
    %v2455 = vadd.f32 %v2166, %v2454
    %v2456 = vpop.f32.mrb[0].mxu0
    %2457 = vmatprep.mubr.bf16.mxu0 %v1342
    %2458 = vmatmul.mubr.bf16.gmra.mrb[0].mxu0 %v1341
    %v2459 = vpop.f32.mrb[0].mxu0
    %v2460 = vadd.f32 %v2171, %v2459
    %v2461 = vpop.f32.mrb[0].mxu0
    %v2462 = vpop.f32.mrb[0].mxu0
    %v2463 = vadd.f32 %v2174, %v2462
    %v2464 = vpop.f32.mrb[0].mxu0
    %2465 = vmatprep.mubr.bf16.mxu0 %v1349
    %2466 = vmatmul.mubr.bf16.gmra.mrb[0].mxu0 %v1348
    %v2467 = vpop.f32.mrb[0].mxu0
    %v2468 = vadd.f32 %v2179, %v2467
    %v2469 = vpop.f32.mrb[0].mxu0
    %v2470 = vpop.f32.mrb[0].mxu0
    %v2471 = vadd.f32 %v2182, %v2470
    %v2472 = vpop.f32.mrb[0].mxu0
    %2473 = vmatprep.mubr.bf16.mxu0 %v1356
    %2474 = vmatmul.mubr.bf16.gmra.mrb[0].mxu0 %v1355
    %v2475 = vpop.f32.mrb[0].mxu0
    %v2476 = vadd.f32 %v2187, %v2475
    %v2477 = vpop.f32.mrb[0].mxu0
    %v2478 = vpop.f32.mrb[0].mxu0
    %v2479 = vadd.f32 %v2190, %v2478
    %v2480 = vpop.f32.mrb[0].mxu0
    %2481 = vmatprep.mubr.bf16.mxu0 %v1363
    %2482 = vmatmul.mubr.bf16.gmra.mrb[0].mxu0 %v1362
    %v2483 = vpop.f32.mrb[0].mxu0
    %v2484 = vadd.f32 %v2195, %v2483
    %v2485 = vpop.f32.mrb[0].mxu0
    %v2486 = vpop.f32.mrb[0].mxu0
    %v2487 = vadd.f32 %v2198, %v2486
    %v2488 = vpop.f32.mrb[0].mxu0
    %2489 = vmatprep.mubr.bf16.mxu0 %v1370
    %2490 = vmatmul.mubr.bf16.gmra.mrb[0].mxu0 %v1369
    %v2491 = vpop.f32.mrb[0].mxu0
    %v2492 = vadd.f32 %v2203, %v2491
    %v2493 = vpop.f32.mrb[0].mxu0
    %v2494 = vpop.f32.mrb[0].mxu0
    %v2495 = vadd.f32 %v2206, %v2494
    %v2496 = vpop.f32.mrb[0].mxu0
    %2497 = vmatprep.mubr.bf16.mxu0 %v1377
    %2498 = vmatmul.mubr.bf16.gmra.mrb[0].mxu0 %v1376
    %v2499 = vpop.f32.mrb[0].mxu0
    %v2500 = vadd.f32 %v2211, %v2499
    %v2501 = vpop.f32.mrb[0].mxu0
    %v2502 = vpop.f32.mrb[0].mxu0
    %v2503 = vadd.f32 %v2214, %v2502
    %v2504 = vpop.f32.mrb[0].mxu0
    %2505 = vmatprep.mubr.bf16.mxu0 %v1384
    %2506 = vmatmul.mubr.bf16.gmra.mrb[0].mxu0 %v1383
    %v2507 = vpop.f32.mrb[0].mxu0
    %v2508 = vadd.f32 %v2219, %v2507
    %v2509 = vpop.f32.mrb[0].mxu0
    %v2510 = vpop.f32.mrb[0].mxu0
    %v2511 = vadd.f32 %v2222, %v2510
    %v2512 = vpop.f32.mrb[0].mxu0
    %2513 = vmatprep.mubr.bf16.mxu0 %v1391
    %2514 = vmatmul.mubr.bf16.gmra.mrb[0].mxu0 %v1390
    %v2515 = vpop.f32.mrb[0].mxu0
    %v2516 = vadd.f32 %v2227, %v2515
    %v2517 = vpop.f32.mrb[0].mxu0
    %v2518 = vpop.f32.mrb[0].mxu0
    %v2519 = vadd.f32 %v2230, %v2518
    %v2520 = vpop.f32.mrb[0].mxu0
    %2521 = vmatprep.mubr.bf16.mxu0 %v1398
    %2522 = vmatmul.mubr.bf16.gmra.mrb[0].mxu0 %v1397
    %v2523 = vpop.f32.mrb[0].mxu0
    %v2524 = vadd.f32 %v2235, %v2523
    %v2525 = vpop.f32.mrb[0].mxu0
    %v2526 = vpop.f32.mrb[0].mxu0
    %v2527 = vadd.f32 %v2238, %v2526
    %v2528 = vpop.f32.mrb[0].mxu0
    %2529 = vmatprep.mubr.bf16.mxu0 %v1405
    %2530 = vmatmul.mubr.bf16.gmra.mrb[0].mxu0 %v1404
    %v2531 = vpop.f32.mrb[0].mxu0
    %v2532 = vadd.f32 %v2243, %v2531
    %v2533 = vpop.f32.mrb[0].mxu0
    %v2534 = vpop.f32.mrb[0].mxu0
    %v2535 = vadd.f32 %v2246, %v2534
    %v2536 = vpop.f32.mrb[0].mxu0
    %2537 = vmatprep.mubr.bf16.mxu0 %v1412
    %2538 = vmatmul.mubr.bf16.gmra.mrb[0].mxu0 %v1411
    %v2539 = vpop.f32.mrb[0].mxu0
    %v2540 = vadd.f32 %v2251, %v2539
    %v2541 = vpop.f32.mrb[0].mxu0
    %v2542 = vpop.f32.mrb[0].mxu0
    %v2543 = vadd.f32 %v2254, %v2542
    %v2544 = vpop.f32.mrb[0].mxu0
    %2545 = vmatprep.mubr.bf16.mxu0 %v1419
    %2546 = vmatmul.mubr.bf16.gmra.mrb[0].mxu0 %v1418
    %v2547 = vpop.f32.mrb[0].mxu0
    %v2548 = vadd.f32 %v2259, %v2547
    %v2549 = vpop.f32.mrb[0].mxu0
    %v2550 = vpop.f32.mrb[0].mxu0
    %v2551 = vadd.f32 %v2262, %v2550
    %v2552 = vpop.f32.mrb[0].mxu0
    %2553 = vmatprep.mubr.bf16.mxu0 %v1426
    %2554 = vmatmul.mubr.bf16.gmra.mrb[0].mxu0 %v1425
    %v2555 = vpop.f32.mrb[0].mxu0
    %v2556 = vadd.f32 %v2267, %v2555
    %v2557 = vpop.f32.mrb[0].mxu0
    %v2558 = vpop.f32.mrb[0].mxu0
    %v2559 = vadd.f32 %v2270, %v2558
    %v2560 = vpop.f32.mrb[0].mxu0
    %2561 = vmatprep.mubr.bf16.mxu0 %v1433
    %2562 = vmatmul.mubr.bf16.gmra.mrb[0].mxu0 %v1432
    %v2563 = vpop.f32.mrb[0].mxu0
    %v2564 = vadd.f32 %v2275, %v2563
    %v2565 = vpop.f32.mrb[0].mxu0
    %v2566 = vpop.f32.mrb[0].mxu0
    %v2567 = vadd.f32 %v2278, %v2566
    %v2568 = vpop.f32.mrb[0].mxu0
    %2569 = vmatprep.mubr.bf16.mxu0 %v1440
    %2570 = vmatmul.mubr.bf16.gmra.mrb[0].mxu0 %v1439
    %v2571 = vpop.f32.mrb[0].mxu0
    %v2572 = vadd.f32 %v2283, %v2571
    %v2573 = vpop.f32.mrb[0].mxu0
    %v2574 = vpop.f32.mrb[0].mxu0
    %v2575 = vadd.f32 %v2286, %v2574
    %v2576 = vpop.f32.mrb[0].mxu0
    %2577 = vmatprep.mubr.bf16.mxu0 %v1447
    %2578 = vmatmul.mubr.bf16.gmra.mrb[0].mxu0 %v1446
    %v2579 = vpop.f32.mrb[0].mxu0
    %v2580 = vadd.f32 %v2291, %v2579
    %v2581 = vpop.f32.mrb[0].mxu0
    %v2582 = vpop.f32.mrb[0].mxu0
    %v2583 = vadd.f32 %v2294, %v2582
    %v2584 = vpop.f32.mrb[0].mxu0
    %2585 = vmatprep.mubr.bf16.mxu0 %v1454
    %2586 = vmatmul.mubr.bf16.gmra.mrb[0].mxu0 %v1453
    %v2587 = vpop.f32.mrb[0].mxu0
    %v2588 = vadd.f32 %v2299, %v2587
    %v2589 = vpop.f32.mrb[0].mxu0
    %v2590 = vpop.f32.mrb[0].mxu0
    %v2591 = vadd.f32 %v2302, %v2590
    %v2592 = vpop.f32.mrb[0].mxu0
    %2593 = vmatprep.mubr.bf16.mxu0 %v1461
    %2594 = vmatmul.mubr.bf16.gmra.mrb[0].mxu0 %v1460
    %v2595 = vpop.f32.mrb[0].mxu0
    %v2596 = vadd.f32 %v2307, %v2595
    %v2597 = vpop.f32.mrb[0].mxu0
    %v2598 = vpop.f32.mrb[0].mxu0
    %v2599 = vadd.f32 %v2310, %v2598
    %v2600 = vpop.f32.mrb[0].mxu0
    %2601 = vmatprep.mubr.bf16.mxu0 %v1468
    %2602 = vmatmul.mubr.bf16.gmra.mrb[0].mxu0 %v1467
    %v2603 = vpop.f32.mrb[0].mxu0
    %v2604 = vadd.f32 %v2315, %v2603
    %v2605 = vpop.f32.mrb[0].mxu0
    %v2606 = vpop.f32.mrb[0].mxu0
    %v2607 = vadd.f32 %v2318, %v2606
    %v2608 = vpop.f32.mrb[0].mxu0
    %2609 = vdwg.mxu0
    %2610 = vmatprep.subr.bf16.mxu0 0
    %2611 = vmatpush1.bf16.msra.mxu0 %v1952
    %2612 = vmatprep.subr.bf16.mxu0 0
    %2613 = vmatpush1.bf16.msra.mxu0 %v1953
    %2614 = vmatprep.subr.bf16.mxu0 0
    %2615 = vmatpush1.bf16.msra.mxu0 %v1954
    %2616 = vmatprep.subr.bf16.mxu0 0
    %2617 = vmatpush1.bf16.msra.mxu0 %v1955
    %2618 = vmatprep.subr.bf16.mxu0 0
    %2619 = vmatpush1.bf16.msra.mxu0 %v1956
    %2620 = vmatprep.subr.bf16.mxu0 0
    %2621 = vmatpush1.bf16.msra.mxu0 %v1957
    %2622 = vmatprep.subr.bf16.mxu0 0
    %2623 = vmatpush1.bf16.msra.mxu0 %v1958
    %2624 = vmatprep.subr.bf16.mxu0 0
    %2625 = vmatpush1.bf16.msra.mxu0 %v1959
    %2626 = vmatprep.subr.bf16.mxu0 0
    %2627 = vmatpush1.bf16.msra.mxu0 %v1960
    %2628 = vmatprep.subr.bf16.mxu0 0
    %2629 = vmatpush1.bf16.msra.mxu0 %v1961
    %2630 = vmatprep.subr.bf16.mxu0 0
    %2631 = vmatpush1.bf16.msra.mxu0 %v1962
    %2632 = vmatprep.subr.bf16.mxu0 0
    %2633 = vmatpush1.bf16.msra.mxu0 %v1963
    %2634 = vmatprep.subr.bf16.mxu0 0
    %2635 = vmatpush1.bf16.msra.mxu0 %v1964
    %2636 = vmatprep.subr.bf16.mxu0 0
    %2637 = vmatpush1.bf16.msra.mxu0 %v1965
    %2638 = vmatprep.subr.bf16.mxu0 0
    %2639 = vmatpush1.bf16.msra.mxu0 %v1966
    %2640 = vmatprep.subr.bf16.mxu0 0
    %2641 = vmatpush1.bf16.msra.mxu0 %v1967
    %2642 = vmatprep.mubr.bf16.mxu0 %v1253
    %2643 = vmatmul.mubr.bf16.gmra.mrb[0].mxu0 %v1252
    %v2644 = vpop.f32.mrb[0].mxu0
    %v2645 = vadd.f32 %v2356, %v2644
    %v2646 = vpop.f32.mrb[0].mxu0
    %v2647 = vpop.f32.mrb[0].mxu0
    %v2648 = vadd.f32 %v2359, %v2647
    %v2649 = vpop.f32.mrb[0].mxu0
    %2650 = vmatprep.mubr.bf16.mxu0 %v1260
    %2651 = vmatmul.mubr.bf16.gmra.mrb[0].mxu0 %v1259
    %v2652 = vpop.f32.mrb[0].mxu0
    %v2653 = vadd.f32 %v2364, %v2652
    %v2654 = vpop.f32.mrb[0].mxu0
    %v2655 = vpop.f32.mrb[0].mxu0
    %v2656 = vadd.f32 %v2367, %v2655
    %v2657 = vpop.f32.mrb[0].mxu0
    %2658 = vmatprep.mubr.bf16.mxu0 %v1267
    %2659 = vmatmul.mubr.bf16.gmra.mrb[0].mxu0 %v1266
    %v2660 = vpop.f32.mrb[0].mxu0
    %v2661 = vadd.f32 %v2372, %v2660
    %v2662 = vpop.f32.mrb[0].mxu0
    %v2663 = vpop.f32.mrb[0].mxu0
    %v2664 = vadd.f32 %v2375, %v2663
    %v2665 = vpop.f32.mrb[0].mxu0
    %2666 = vmatprep.mubr.bf16.mxu0 %v1274
    %2667 = vmatmul.mubr.bf16.gmra.mrb[0].mxu0 %v1273
    %v2668 = vpop.f32.mrb[0].mxu0
    %v2669 = vadd.f32 %v2380, %v2668
    %v2670 = vpop.f32.mrb[0].mxu0
    %v2671 = vpop.f32.mrb[0].mxu0
    %v2672 = vadd.f32 %v2383, %v2671
    %v2673 = vpop.f32.mrb[0].mxu0
    %2674 = vmatprep.mubr.bf16.mxu0 %v1281
    %2675 = vmatmul.mubr.bf16.gmra.mrb[0].mxu0 %v1280
    %v2676 = vpop.f32.mrb[0].mxu0
    %v2677 = vadd.f32 %v2388, %v2676
    %v2678 = vpop.f32.mrb[0].mxu0
    %v2679 = vpop.f32.mrb[0].mxu0
    %v2680 = vadd.f32 %v2391, %v2679
    %v2681 = vpop.f32.mrb[0].mxu0
    %2682 = vmatprep.mubr.bf16.mxu0 %v1288
    %2683 = vmatmul.mubr.bf16.gmra.mrb[0].mxu0 %v1287
    %v2684 = vpop.f32.mrb[0].mxu0
    %v2685 = vadd.f32 %v2396, %v2684
    %v2686 = vpop.f32.mrb[0].mxu0
    %v2687 = vpop.f32.mrb[0].mxu0
    %v2688 = vadd.f32 %v2399, %v2687
    %v2689 = vpop.f32.mrb[0].mxu0
    %2690 = vmatprep.mubr.bf16.mxu0 %v1295
    %2691 = vmatmul.mubr.bf16.gmra.mrb[0].mxu0 %v1294
    %v2692 = vpop.f32.mrb[0].mxu0
    %v2693 = vadd.f32 %v2404, %v2692
    %v2694 = vpop.f32.mrb[0].mxu0
    %v2695 = vpop.f32.mrb[0].mxu0
    %v2696 = vadd.f32 %v2407, %v2695
    %v2697 = vpop.f32.mrb[0].mxu0
    %2698 = vmatprep.mubr.bf16.mxu0 %v1302
    %2699 = vmatmul.mubr.bf16.gmra.mrb[0].mxu0 %v1301
    %v2700 = vpop.f32.mrb[0].mxu0
    %v2701 = vadd.f32 %v2412, %v2700
    %v2702 = vpop.f32.mrb[0].mxu0
    %v2703 = vpop.f32.mrb[0].mxu0
    %v2704 = vadd.f32 %v2415, %v2703
    %v2705 = vpop.f32.mrb[0].mxu0
    %2706 = vmatprep.mubr.bf16.mxu0 %v1309
    %2707 = vmatmul.mubr.bf16.gmra.mrb[0].mxu0 %v1308
    %v2708 = vpop.f32.mrb[0].mxu0
    %v2709 = vadd.f32 %v2420, %v2708
    %v2710 = vpop.f32.mrb[0].mxu0
    %v2711 = vpop.f32.mrb[0].mxu0
    %v2712 = vadd.f32 %v2423, %v2711
    %v2713 = vpop.f32.mrb[0].mxu0
    %2714 = vmatprep.mubr.bf16.mxu0 %v1316
    %2715 = vmatmul.mubr.bf16.gmra.mrb[0].mxu0 %v1315
    %v2716 = vpop.f32.mrb[0].mxu0
    %v2717 = vadd.f32 %v2428, %v2716
    %v2718 = vpop.f32.mrb[0].mxu0
    %v2719 = vpop.f32.mrb[0].mxu0
    %v2720 = vadd.f32 %v2431, %v2719
    %v2721 = vpop.f32.mrb[0].mxu0
    %2722 = vmatprep.mubr.bf16.mxu0 %v1323
    %2723 = vmatmul.mubr.bf16.gmra.mrb[0].mxu0 %v1322
    %v2724 = vpop.f32.mrb[0].mxu0
    %v2725 = vadd.f32 %v2436, %v2724
    %v2726 = vpop.f32.mrb[0].mxu0
    %v2727 = vpop.f32.mrb[0].mxu0
    %v2728 = vadd.f32 %v2439, %v2727
    %v2729 = vpop.f32.mrb[0].mxu0
    %2730 = vmatprep.mubr.bf16.mxu0 %v1330
    %2731 = vmatmul.mubr.bf16.gmra.mrb[0].mxu0 %v1329
    %v2732 = vpop.f32.mrb[0].mxu0
    %v2733 = vadd.f32 %v2444, %v2732
    %v2734 = vpop.f32.mrb[0].mxu0
    %v2735 = vpop.f32.mrb[0].mxu0
    %v2736 = vadd.f32 %v2447, %v2735
    %v2737 = vpop.f32.mrb[0].mxu0
    %2738 = vmatprep.mubr.bf16.mxu0 %v1337
    %2739 = vmatmul.mubr.bf16.gmra.mrb[0].mxu0 %v1336
    %v2740 = vpop.f32.mrb[0].mxu0
    %v2741 = vadd.f32 %v2452, %v2740
    %v2742 = vpop.f32.mrb[0].mxu0
    %v2743 = vpop.f32.mrb[0].mxu0
    %v2744 = vadd.f32 %v2455, %v2743
    %v2745 = vpop.f32.mrb[0].mxu0
    %2746 = vmatprep.mubr.bf16.mxu0 %v1344
    %2747 = vmatmul.mubr.bf16.gmra.mrb[0].mxu0 %v1343
    %v2748 = vpop.f32.mrb[0].mxu0
    %v2749 = vadd.f32 %v2460, %v2748
    %v2750 = vpop.f32.mrb[0].mxu0
    %v2751 = vpop.f32.mrb[0].mxu0
    %v2752 = vadd.f32 %v2463, %v2751
    %v2753 = vpop.f32.mrb[0].mxu0
    %2754 = vmatprep.mubr.bf16.mxu0 %v1351
    %2755 = vmatmul.mubr.bf16.gmra.mrb[0].mxu0 %v1350
    %v2756 = vpop.f32.mrb[0].mxu0
    %v2757 = vadd.f32 %v2468, %v2756
    %v2758 = vpop.f32.mrb[0].mxu0
    %v2759 = vpop.f32.mrb[0].mxu0
    %v2760 = vadd.f32 %v2471, %v2759
    %v2761 = vpop.f32.mrb[0].mxu0
    %2762 = vmatprep.mubr.bf16.mxu0 %v1358
    %2763 = vmatmul.mubr.bf16.gmra.mrb[0].mxu0 %v1357
    %v2764 = vpop.f32.mrb[0].mxu0
    %v2765 = vadd.f32 %v2476, %v2764
    %v2766 = vpop.f32.mrb[0].mxu0
    %v2767 = vpop.f32.mrb[0].mxu0
    %v2768 = vadd.f32 %v2479, %v2767
    %v2769 = vpop.f32.mrb[0].mxu0
    %2770 = vmatprep.mubr.bf16.mxu0 %v1365
    %2771 = vmatmul.mubr.bf16.gmra.mrb[0].mxu0 %v1364
    %v2772 = vpop.f32.mrb[0].mxu0
    %v2773 = vadd.f32 %v2484, %v2772
    %v2774 = vpop.f32.mrb[0].mxu0
    %v2775 = vpop.f32.mrb[0].mxu0
    %v2776 = vadd.f32 %v2487, %v2775
    %v2777 = vpop.f32.mrb[0].mxu0
    %2778 = vmatprep.mubr.bf16.mxu0 %v1372
    %2779 = vmatmul.mubr.bf16.gmra.mrb[0].mxu0 %v1371
    %v2780 = vpop.f32.mrb[0].mxu0
    %v2781 = vadd.f32 %v2492, %v2780
    %v2782 = vpop.f32.mrb[0].mxu0
    %v2783 = vpop.f32.mrb[0].mxu0
    %v2784 = vadd.f32 %v2495, %v2783
    %v2785 = vpop.f32.mrb[0].mxu0
    %2786 = vmatprep.mubr.bf16.mxu0 %v1379
    %2787 = vmatmul.mubr.bf16.gmra.mrb[0].mxu0 %v1378
    %v2788 = vpop.f32.mrb[0].mxu0
    %v2789 = vadd.f32 %v2500, %v2788
    %v2790 = vpop.f32.mrb[0].mxu0
    %v2791 = vpop.f32.mrb[0].mxu0
    %v2792 = vadd.f32 %v2503, %v2791
    %v2793 = vpop.f32.mrb[0].mxu0
    %2794 = vmatprep.mubr.bf16.mxu0 %v1386
    %2795 = vmatmul.mubr.bf16.gmra.mrb[0].mxu0 %v1385
    %v2796 = vpop.f32.mrb[0].mxu0
    %v2797 = vadd.f32 %v2508, %v2796
    %v2798 = vpop.f32.mrb[0].mxu0
    %v2799 = vpop.f32.mrb[0].mxu0
    %v2800 = vadd.f32 %v2511, %v2799
    %v2801 = vpop.f32.mrb[0].mxu0
    %2802 = vmatprep.mubr.bf16.mxu0 %v1393
    %2803 = vmatmul.mubr.bf16.gmra.mrb[0].mxu0 %v1392
    %v2804 = vpop.f32.mrb[0].mxu0
    %v2805 = vadd.f32 %v2516, %v2804
    %v2806 = vpop.f32.mrb[0].mxu0
    %v2807 = vpop.f32.mrb[0].mxu0
    %v2808 = vadd.f32 %v2519, %v2807
    %v2809 = vpop.f32.mrb[0].mxu0
    %2810 = vmatprep.mubr.bf16.mxu0 %v1400
    %2811 = vmatmul.mubr.bf16.gmra.mrb[0].mxu0 %v1399
    %v2812 = vpop.f32.mrb[0].mxu0
    %v2813 = vadd.f32 %v2524, %v2812
    %v2814 = vpop.f32.mrb[0].mxu0
    %v2815 = vpop.f32.mrb[0].mxu0
    %v2816 = vadd.f32 %v2527, %v2815
    %v2817 = vpop.f32.mrb[0].mxu0
    %2818 = vmatprep.mubr.bf16.mxu0 %v1407
    %2819 = vmatmul.mubr.bf16.gmra.mrb[0].mxu0 %v1406
    %v2820 = vpop.f32.mrb[0].mxu0
    %v2821 = vadd.f32 %v2532, %v2820
    %v2822 = vpop.f32.mrb[0].mxu0
    %v2823 = vpop.f32.mrb[0].mxu0
    %v2824 = vadd.f32 %v2535, %v2823
    %v2825 = vpop.f32.mrb[0].mxu0
    %2826 = vmatprep.mubr.bf16.mxu0 %v1414
    %2827 = vmatmul.mubr.bf16.gmra.mrb[0].mxu0 %v1413
    %v2828 = vpop.f32.mrb[0].mxu0
    %v2829 = vadd.f32 %v2540, %v2828
    %v2830 = vpop.f32.mrb[0].mxu0
    %v2831 = vpop.f32.mrb[0].mxu0
    %v2832 = vadd.f32 %v2543, %v2831
    %v2833 = vpop.f32.mrb[0].mxu0
    %2834 = vmatprep.mubr.bf16.mxu0 %v1421
    %2835 = vmatmul.mubr.bf16.gmra.mrb[0].mxu0 %v1420
    %v2836 = vpop.f32.mrb[0].mxu0
    %v2837 = vadd.f32 %v2548, %v2836
    %v2838 = vpop.f32.mrb[0].mxu0
    %v2839 = vpop.f32.mrb[0].mxu0
    %v2840 = vadd.f32 %v2551, %v2839
    %v2841 = vpop.f32.mrb[0].mxu0
    %2842 = vmatprep.mubr.bf16.mxu0 %v1428
    %2843 = vmatmul.mubr.bf16.gmra.mrb[0].mxu0 %v1427
    %v2844 = vpop.f32.mrb[0].mxu0
    %v2845 = vadd.f32 %v2556, %v2844
    %v2846 = vpop.f32.mrb[0].mxu0
    %v2847 = vpop.f32.mrb[0].mxu0
    %v2848 = vadd.f32 %v2559, %v2847
    %v2849 = vpop.f32.mrb[0].mxu0
    %2850 = vmatprep.mubr.bf16.mxu0 %v1435
    %2851 = vmatmul.mubr.bf16.gmra.mrb[0].mxu0 %v1434
    %v2852 = vpop.f32.mrb[0].mxu0
    %v2853 = vadd.f32 %v2564, %v2852
    %v2854 = vpop.f32.mrb[0].mxu0
    %v2855 = vpop.f32.mrb[0].mxu0
    %v2856 = vadd.f32 %v2567, %v2855
    %v2857 = vpop.f32.mrb[0].mxu0
    %2858 = vmatprep.mubr.bf16.mxu0 %v1442
    %2859 = vmatmul.mubr.bf16.gmra.mrb[0].mxu0 %v1441
    %v2860 = vpop.f32.mrb[0].mxu0
    %v2861 = vadd.f32 %v2572, %v2860
    %v2862 = vpop.f32.mrb[0].mxu0
    %v2863 = vpop.f32.mrb[0].mxu0
    %v2864 = vadd.f32 %v2575, %v2863
    %v2865 = vpop.f32.mrb[0].mxu0
    %2866 = vmatprep.mubr.bf16.mxu0 %v1449
    %2867 = vmatmul.mubr.bf16.gmra.mrb[0].mxu0 %v1448
    %v2868 = vpop.f32.mrb[0].mxu0
    %v2869 = vadd.f32 %v2580, %v2868
    %v2870 = vpop.f32.mrb[0].mxu0
    %v2871 = vpop.f32.mrb[0].mxu0
    %v2872 = vadd.f32 %v2583, %v2871
    %v2873 = vpop.f32.mrb[0].mxu0
    %2874 = vmatprep.mubr.bf16.mxu0 %v1456
    %2875 = vmatmul.mubr.bf16.gmra.mrb[0].mxu0 %v1455
    %v2876 = vpop.f32.mrb[0].mxu0
    %v2877 = vadd.f32 %v2588, %v2876
    %v2878 = vpop.f32.mrb[0].mxu0
    %v2879 = vpop.f32.mrb[0].mxu0
    %v2880 = vadd.f32 %v2591, %v2879
    %v2881 = vpop.f32.mrb[0].mxu0
    %2882 = vmatprep.mubr.bf16.mxu0 %v1463
    %2883 = vmatmul.mubr.bf16.gmra.mrb[0].mxu0 %v1462
    %v2884 = vpop.f32.mrb[0].mxu0
    %v2885 = vadd.f32 %v2596, %v2884
    %v2886 = vpop.f32.mrb[0].mxu0
    %v2887 = vpop.f32.mrb[0].mxu0
    %v2888 = vadd.f32 %v2599, %v2887
    %v2889 = vpop.f32.mrb[0].mxu0
    %2890 = vmatprep.mubr.bf16.mxu0 %v1470
    %2891 = vmatmul.mubr.bf16.gmra.mrb[0].mxu0 %v1469
    %v2892 = vpop.f32.mrb[0].mxu0
    %v2893 = vadd.f32 %v2604, %v2892
    %v2894 = vpop.f32.mrb[0].mxu0
    %v2895 = vpop.f32.mrb[0].mxu0
    %v2896 = vadd.f32 %v2607, %v2895
    %v2897 = vpop.f32.mrb[0].mxu0
    %2898 = vdwg.mxu0
    %2899 = vmatprep.subr.bf16.mxu0 0
    %2900 = vmatpush1.bf16.msra.mxu0 %v1968
    %2901 = vmatprep.subr.bf16.mxu0 0
    %2902 = vmatpush1.bf16.msra.mxu0 %v1969
    %2903 = vmatprep.subr.bf16.mxu0 0
    %2904 = vmatpush1.bf16.msra.mxu0 %v1970
    %2905 = vmatprep.subr.bf16.mxu0 0
    %2906 = vmatpush1.bf16.msra.mxu0 %v1971
    %2907 = vmatprep.subr.bf16.mxu0 0
    %2908 = vmatpush1.bf16.msra.mxu0 %v1972
    %2909 = vmatprep.subr.bf16.mxu0 0
    %2910 = vmatpush1.bf16.msra.mxu0 %v1973
    %2911 = vmatprep.subr.bf16.mxu0 0
    %2912 = vmatpush1.bf16.msra.mxu0 %v1974
    %2913 = vmatprep.subr.bf16.mxu0 0
    %2914 = vmatpush1.bf16.msra.mxu0 %v1975
    %2915 = vmatprep.subr.bf16.mxu0 0
    %2916 = vmatpush1.bf16.msra.mxu0 0
    %2917 = vmatprep.subr.bf16.mxu0 0
    %2918 = vmatpush1.bf16.msra.mxu0 0
    %2919 = vmatprep.subr.bf16.mxu0 0
    %2920 = vmatpush1.bf16.msra.mxu0 0
    %2921 = vmatprep.subr.bf16.mxu0 0
    %2922 = vmatpush1.bf16.msra.mxu0 0
    %2923 = vmatprep.subr.bf16.mxu0 0
    %2924 = vmatpush1.bf16.msra.mxu0 0
    %2925 = vmatprep.subr.bf16.mxu0 0
    %2926 = vmatpush1.bf16.msra.mxu0 0
    %2927 = vmatprep.subr.bf16.mxu0 0
    %2928 = vmatpush1.bf16.msra.mxu0 0
    %2929 = vmatprep.subr.bf16.mxu0 0
    %2930 = vmatpush1.bf16.msra.mxu0 0
    %2931 = vmatprep.mubr.bf16.mxu0 0
    %2932 = vmatmul.mubr.bf16.gmra.mrb[0].mxu0 %v1254
    %v2933 = vpop.f32.mrb[0].mxu0
    %v2934 = vadd.f32 %v2645, %v2933
    %v2935 = vpop.f32.mrb[0].mxu0
    %v2936 = vpop.f32.mrb[0].mxu0
    %v2937 = vadd.f32 %v2648, %v2936
    %v2938 = vpop.f32.mrb[0].mxu0
    %2939 = vmatprep.mubr.bf16.mxu0 0
    %2940 = vmatmul.mubr.bf16.gmra.mrb[0].mxu0 %v1261
    %v2941 = vpop.f32.mrb[0].mxu0
    %v2942 = vadd.f32 %v2653, %v2941
    %v2943 = vpop.f32.mrb[0].mxu0
    %v2944 = vpop.f32.mrb[0].mxu0
    %v2945 = vadd.f32 %v2656, %v2944
    %v2946 = vpop.f32.mrb[0].mxu0
    %2947 = vmatprep.mubr.bf16.mxu0 0
    %2948 = vmatmul.mubr.bf16.gmra.mrb[0].mxu0 %v1268
    %v2949 = vpop.f32.mrb[0].mxu0
    %v2950 = vadd.f32 %v2661, %v2949
    %v2951 = vpop.f32.mrb[0].mxu0
    %v2952 = vpop.f32.mrb[0].mxu0
    %v2953 = vadd.f32 %v2664, %v2952
    %v2954 = vpop.f32.mrb[0].mxu0
    %2955 = vmatprep.mubr.bf16.mxu0 0
    %2956 = vmatmul.mubr.bf16.gmra.mrb[0].mxu0 %v1275
    %v2957 = vpop.f32.mrb[0].mxu0
    %v2958 = vadd.f32 %v2669, %v2957
    %v2959 = vpop.f32.mrb[0].mxu0
    %v2960 = vpop.f32.mrb[0].mxu0
    %v2961 = vadd.f32 %v2672, %v2960
    %v2962 = vpop.f32.mrb[0].mxu0
    %2963 = vmatprep.mubr.bf16.mxu0 0
    %2964 = vmatmul.mubr.bf16.gmra.mrb[0].mxu0 %v1282
    %v2965 = vpop.f32.mrb[0].mxu0
    %v2966 = vadd.f32 %v2677, %v2965
    %v2967 = vpop.f32.mrb[0].mxu0
    %v2968 = vpop.f32.mrb[0].mxu0
    %v2969 = vadd.f32 %v2680, %v2968
    %v2970 = vpop.f32.mrb[0].mxu0
    %2971 = vmatprep.mubr.bf16.mxu0 0
    %2972 = vmatmul.mubr.bf16.gmra.mrb[0].mxu0 %v1289
    %v2973 = vpop.f32.mrb[0].mxu0
    %v2974 = vadd.f32 %v2685, %v2973
    %v2975 = vpop.f32.mrb[0].mxu0
    %v2976 = vpop.f32.mrb[0].mxu0
    %v2977 = vadd.f32 %v2688, %v2976
    %v2978 = vpop.f32.mrb[0].mxu0
    %2979 = vmatprep.mubr.bf16.mxu0 0
    %2980 = vmatmul.mubr.bf16.gmra.mrb[0].mxu0 %v1296
    %v2981 = vpop.f32.mrb[0].mxu0
    %v2982 = vadd.f32 %v2693, %v2981
    %v2983 = vpop.f32.mrb[0].mxu0
    %v2984 = vpop.f32.mrb[0].mxu0
    %v2985 = vadd.f32 %v2696, %v2984
    %v2986 = vpop.f32.mrb[0].mxu0
    %2987 = vmatprep.mubr.bf16.mxu0 0
    %2988 = vmatmul.mubr.bf16.gmra.mrb[0].mxu0 %v1303
    %v2989 = vpop.f32.mrb[0].mxu0
    %v2990 = vadd.f32 %v2701, %v2989
    %v2991 = vpop.f32.mrb[0].mxu0
    %v2992 = vpop.f32.mrb[0].mxu0
    %v2993 = vadd.f32 %v2704, %v2992
    %v2994 = vpop.f32.mrb[0].mxu0
    %2995 = vmatprep.mubr.bf16.mxu0 0
    %2996 = vmatmul.mubr.bf16.gmra.mrb[0].mxu0 %v1310
    %v2997 = vpop.f32.mrb[0].mxu0
    %v2998 = vadd.f32 %v2709, %v2997
    %v2999 = vpop.f32.mrb[0].mxu0
    %v3000 = vpop.f32.mrb[0].mxu0
    %v3001 = vadd.f32 %v2712, %v3000
    %v3002 = vpop.f32.mrb[0].mxu0
    %3003 = vmatprep.mubr.bf16.mxu0 0
    %3004 = vmatmul.mubr.bf16.gmra.mrb[0].mxu0 %v1317
    %v3005 = vpop.f32.mrb[0].mxu0
    %v3006 = vadd.f32 %v2717, %v3005
    %v3007 = vpop.f32.mrb[0].mxu0
    %v3008 = vpop.f32.mrb[0].mxu0
    %v3009 = vadd.f32 %v2720, %v3008
    %v3010 = vpop.f32.mrb[0].mxu0
    %3011 = vmatprep.mubr.bf16.mxu0 0
    %3012 = vmatmul.mubr.bf16.gmra.mrb[0].mxu0 %v1324
    %v3013 = vpop.f32.mrb[0].mxu0
    %v3014 = vadd.f32 %v2725, %v3013
    %v3015 = vpop.f32.mrb[0].mxu0
    %v3016 = vpop.f32.mrb[0].mxu0
    %v3017 = vadd.f32 %v2728, %v3016
    %v3018 = vpop.f32.mrb[0].mxu0
    %3019 = vmatprep.mubr.bf16.mxu0 0
    %3020 = vmatmul.mubr.bf16.gmra.mrb[0].mxu0 %v1331
    %v3021 = vpop.f32.mrb[0].mxu0
    %v3022 = vadd.f32 %v2733, %v3021
    %v3023 = vpop.f32.mrb[0].mxu0
    %v3024 = vpop.f32.mrb[0].mxu0
    %v3025 = vadd.f32 %v2736, %v3024
    %v3026 = vpop.f32.mrb[0].mxu0
    %3027 = vmatprep.mubr.bf16.mxu0 0
    %3028 = vmatmul.mubr.bf16.gmra.mrb[0].mxu0 %v1338
    %v3029 = vpop.f32.mrb[0].mxu0
    %v3030 = vadd.f32 %v2741, %v3029
    %v3031 = vpop.f32.mrb[0].mxu0
    %v3032 = vpop.f32.mrb[0].mxu0
    %v3033 = vadd.f32 %v2744, %v3032
    %v3034 = vpop.f32.mrb[0].mxu0
    %3035 = vmatprep.mubr.bf16.mxu0 0
    %3036 = vmatmul.mubr.bf16.gmra.mrb[0].mxu0 %v1345
    %v3037 = vpop.f32.mrb[0].mxu0
    %v3038 = vadd.f32 %v2749, %v3037
    %v3039 = vpop.f32.mrb[0].mxu0
    %v3040 = vpop.f32.mrb[0].mxu0
    %v3041 = vadd.f32 %v2752, %v3040
    %v3042 = vpop.f32.mrb[0].mxu0
    %3043 = vmatprep.mubr.bf16.mxu0 0
    %3044 = vmatmul.mubr.bf16.gmra.mrb[0].mxu0 %v1352
    %v3045 = vpop.f32.mrb[0].mxu0
    %v3046 = vadd.f32 %v2757, %v3045
    %v3047 = vpop.f32.mrb[0].mxu0
    %v3048 = vpop.f32.mrb[0].mxu0
    %v3049 = vadd.f32 %v2760, %v3048
    %v3050 = vpop.f32.mrb[0].mxu0
    %3051 = vmatprep.mubr.bf16.mxu0 0
    %3052 = vmatmul.mubr.bf16.gmra.mrb[0].mxu0 %v1359
    %v3053 = vpop.f32.mrb[0].mxu0
    %v3054 = vadd.f32 %v2765, %v3053
    %v3055 = vpop.f32.mrb[0].mxu0
    %v3056 = vpop.f32.mrb[0].mxu0
    %v3057 = vadd.f32 %v2768, %v3056
    %v3058 = vpop.f32.mrb[0].mxu0
    %3059 = vmatprep.mubr.bf16.mxu0 0
    %3060 = vmatmul.mubr.bf16.gmra.mrb[0].mxu0 %v1366
    %v3061 = vpop.f32.mrb[0].mxu0
    %v3062 = vadd.f32 %v2773, %v3061
    %v3063 = vpop.f32.mrb[0].mxu0
    %v3064 = vpop.f32.mrb[0].mxu0
    %v3065 = vadd.f32 %v2776, %v3064
    %v3066 = vpop.f32.mrb[0].mxu0
    %3067 = vmatprep.mubr.bf16.mxu0 0
    %3068 = vmatmul.mubr.bf16.gmra.mrb[0].mxu0 %v1373
    %v3069 = vpop.f32.mrb[0].mxu0
    %v3070 = vadd.f32 %v2781, %v3069
    %v3071 = vpop.f32.mrb[0].mxu0
    %v3072 = vpop.f32.mrb[0].mxu0
    %v3073 = vadd.f32 %v2784, %v3072
    %v3074 = vpop.f32.mrb[0].mxu0
    %3075 = vmatprep.mubr.bf16.mxu0 0
    %3076 = vmatmul.mubr.bf16.gmra.mrb[0].mxu0 %v1380
    %v3077 = vpop.f32.mrb[0].mxu0
    %v3078 = vadd.f32 %v2789, %v3077
    %v3079 = vpop.f32.mrb[0].mxu0
    %v3080 = vpop.f32.mrb[0].mxu0
    %v3081 = vadd.f32 %v2792, %v3080
    %v3082 = vpop.f32.mrb[0].mxu0
    %3083 = vmatprep.mubr.bf16.mxu0 0
    %3084 = vmatmul.mubr.bf16.gmra.mrb[0].mxu0 %v1387
    %v3085 = vpop.f32.mrb[0].mxu0
    %v3086 = vadd.f32 %v2797, %v3085
    %v3087 = vpop.f32.mrb[0].mxu0
    %v3088 = vpop.f32.mrb[0].mxu0
    %v3089 = vadd.f32 %v2800, %v3088
    %v3090 = vpop.f32.mrb[0].mxu0
    %3091 = vmatprep.mubr.bf16.mxu0 0
    %3092 = vmatmul.mubr.bf16.gmra.mrb[0].mxu0 %v1394
    %v3093 = vpop.f32.mrb[0].mxu0
    %v3094 = vadd.f32 %v2805, %v3093
    %v3095 = vpop.f32.mrb[0].mxu0
    %v3096 = vpop.f32.mrb[0].mxu0
    %v3097 = vadd.f32 %v2808, %v3096
    %v3098 = vpop.f32.mrb[0].mxu0
    %3099 = vmatprep.mubr.bf16.mxu0 0
    %3100 = vmatmul.mubr.bf16.gmra.mrb[0].mxu0 %v1401
    %v3101 = vpop.f32.mrb[0].mxu0
    %v3102 = vadd.f32 %v2813, %v3101
    %v3103 = vpop.f32.mrb[0].mxu0
    %v3104 = vpop.f32.mrb[0].mxu0
    %v3105 = vadd.f32 %v2816, %v3104
    %v3106 = vpop.f32.mrb[0].mxu0
    %3107 = vmatprep.mubr.bf16.mxu0 0
    %3108 = vmatmul.mubr.bf16.gmra.mrb[0].mxu0 %v1408
    %v3109 = vpop.f32.mrb[0].mxu0
    %v3110 = vadd.f32 %v2821, %v3109
    %v3111 = vpop.f32.mrb[0].mxu0
    %v3112 = vpop.f32.mrb[0].mxu0
    %v3113 = vadd.f32 %v2824, %v3112
    %v3114 = vpop.f32.mrb[0].mxu0
    %3115 = vmatprep.mubr.bf16.mxu0 0
    %3116 = vmatmul.mubr.bf16.gmra.mrb[0].mxu0 %v1415
    %v3117 = vpop.f32.mrb[0].mxu0
    %v3118 = vadd.f32 %v2829, %v3117
    %v3119 = vpop.f32.mrb[0].mxu0
    %v3120 = vpop.f32.mrb[0].mxu0
    %v3121 = vadd.f32 %v2832, %v3120
    %v3122 = vpop.f32.mrb[0].mxu0
    %3123 = vmatprep.mubr.bf16.mxu0 0
    %3124 = vmatmul.mubr.bf16.gmra.mrb[0].mxu0 %v1422
    %v3125 = vpop.f32.mrb[0].mxu0
    %v3126 = vadd.f32 %v2837, %v3125
    %v3127 = vpop.f32.mrb[0].mxu0
    %v3128 = vpop.f32.mrb[0].mxu0
    %v3129 = vadd.f32 %v2840, %v3128
    %v3130 = vpop.f32.mrb[0].mxu0
    %3131 = vmatprep.mubr.bf16.mxu0 0
    %3132 = vmatmul.mubr.bf16.gmra.mrb[0].mxu0 %v1429
    %v3133 = vpop.f32.mrb[0].mxu0
    %v3134 = vadd.f32 %v2845, %v3133
    %v3135 = vpop.f32.mrb[0].mxu0
    %v3136 = vpop.f32.mrb[0].mxu0
    %v3137 = vadd.f32 %v2848, %v3136
    %v3138 = vpop.f32.mrb[0].mxu0
    %3139 = vmatprep.mubr.bf16.mxu0 0
    %3140 = vmatmul.mubr.bf16.gmra.mrb[0].mxu0 %v1436
    %v3141 = vpop.f32.mrb[0].mxu0
    %v3142 = vadd.f32 %v2853, %v3141
    %v3143 = vpop.f32.mrb[0].mxu0
    %v3144 = vpop.f32.mrb[0].mxu0
    %v3145 = vadd.f32 %v2856, %v3144
    %v3146 = vpop.f32.mrb[0].mxu0
    %3147 = vmatprep.mubr.bf16.mxu0 0
    %3148 = vmatmul.mubr.bf16.gmra.mrb[0].mxu0 %v1443
    %v3149 = vpop.f32.mrb[0].mxu0
    %v3150 = vadd.f32 %v2861, %v3149
    %v3151 = vpop.f32.mrb[0].mxu0
    %v3152 = vpop.f32.mrb[0].mxu0
    %v3153 = vadd.f32 %v2864, %v3152
    %v3154 = vpop.f32.mrb[0].mxu0
    %3155 = vmatprep.mubr.bf16.mxu0 0
    %3156 = vmatmul.mubr.bf16.gmra.mrb[0].mxu0 %v1450
    %v3157 = vpop.f32.mrb[0].mxu0
    %v3158 = vadd.f32 %v2869, %v3157
    %v3159 = vpop.f32.mrb[0].mxu0
    %v3160 = vpop.f32.mrb[0].mxu0
    %v3161 = vadd.f32 %v2872, %v3160
    %v3162 = vpop.f32.mrb[0].mxu0
    %3163 = vmatprep.mubr.bf16.mxu0 0
    %3164 = vmatmul.mubr.bf16.gmra.mrb[0].mxu0 %v1457
    %v3165 = vpop.f32.mrb[0].mxu0
    %v3166 = vadd.f32 %v2877, %v3165
    %v3167 = vpop.f32.mrb[0].mxu0
    %v3168 = vpop.f32.mrb[0].mxu0
    %v3169 = vadd.f32 %v2880, %v3168
    %v3170 = vpop.f32.mrb[0].mxu0
    %3171 = vmatprep.mubr.bf16.mxu0 0
    %3172 = vmatmul.mubr.bf16.gmra.mrb[0].mxu0 %v1464
    %v3173 = vpop.f32.mrb[0].mxu0
    %v3174 = vadd.f32 %v2885, %v3173
    %v3175 = vpop.f32.mrb[0].mxu0
    %v3176 = vpop.f32.mrb[0].mxu0
    %v3177 = vadd.f32 %v2888, %v3176
    %v3178 = vpop.f32.mrb[0].mxu0
    %3179 = vmatprep.mubr.bf16.mxu0 0
    %3180 = vmatmul.mubr.bf16.gmra.mrb[0].mxu0 %v1471
    %v3181 = vpop.f32.mrb[0].mxu0
    %v3182 = vadd.f32 %v2893, %v3181
    %v3183 = vpop.f32.mrb[0].mxu0
    %v3184 = vpop.f32.mrb[0].mxu0
    %v3185 = vadd.f32 %v2896, %v3184
    %v3186 = vpop.f32.mrb[0].mxu0
    %3187 = vdwg.mxu0
    %v3188 = vadd.f32 %v112, %v2934
    %v3189 = vadd.f32 %v113, %v2937
    %v3190 = vadd.f32 %v114, %v2942
    %v3191 = vadd.f32 %v115, %v2945
    %v3192 = vadd.f32 %v116, %v2950
    %v3193 = vadd.f32 %v117, %v2953
    %v3194 = vadd.f32 %v118, %v2958
    %v3195 = vadd.f32 %v119, %v2961
    %v3196 = vadd.f32 %v120, %v2966
    %v3197 = vadd.f32 %v121, %v2969
    %v3198 = vadd.f32 %v122, %v2974
    %v3199 = vadd.f32 %v123, %v2977
    %v3200 = vadd.f32 %v124, %v2982
    %v3201 = vadd.f32 %v125, %v2985
    %v3202 = vadd.f32 %v126, %v2990
    %v3203 = vadd.f32 %v127, %v2993
    %v3204 = vadd.f32 %v128, %v2998
    %v3205 = vadd.f32 %v129, %v3001
    %v3206 = vadd.f32 %v130, %v3006
    %v3207 = vadd.f32 %v131, %v3009
    %v3208 = vadd.f32 %v132, %v3014
    %v3209 = vadd.f32 %v133, %v3017
    %v3210 = vadd.f32 %v134, %v3022
    %v3211 = vadd.f32 %v135, %v3025
    %v3212 = vadd.f32 %v136, %v3030
    %v3213 = vadd.f32 %v137, %v3033
    %v3214 = vadd.f32 %v138, %v3038
    %v3215 = vadd.f32 %v139, %v3041
    %v3216 = vadd.f32 %v140, %v3046
    %v3217 = vadd.f32 %v141, %v3049
    %v3218 = vadd.f32 %v142, %v3054
    %v3219 = vadd.f32 %v143, %v3057
    %v3220 = vadd.f32 %v144, %v3062
    %v3221 = vadd.f32 %v145, %v3065
    %v3222 = vadd.f32 %v146, %v3070
    %v3223 = vadd.f32 %v147, %v3073
    %v3224 = vadd.f32 %v148, %v3078
    %v3225 = vadd.f32 %v149, %v3081
    %v3226 = vadd.f32 %v150, %v3086
    %v3227 = vadd.f32 %v151, %v3089
    %v3228 = vadd.f32 %v152, %v3094
    %v3229 = vadd.f32 %v153, %v3097
    %v3230 = vadd.f32 %v154, %v3102
    %v3231 = vadd.f32 %v155, %v3105
    %v3232 = vadd.f32 %v156, %v3110
    %v3233 = vadd.f32 %v157, %v3113
    %v3234 = vadd.f32 %v158, %v3118
    %v3235 = vadd.f32 %v159, %v3121
    %v3236 = vadd.f32 %v160, %v3126
    %v3237 = vadd.f32 %v161, %v3129
    %v3238 = vadd.f32 %v162, %v3134
    %v3239 = vadd.f32 %v163, %v3137
    %v3240 = vadd.f32 %v164, %v3142
    %v3241 = vadd.f32 %v165, %v3145
    %v3242 = vadd.f32 %v166, %v3150
    %v3243 = vadd.f32 %v167, %v3153
    %v3244 = vadd.f32 %v168, %v3158
    %v3245 = vadd.f32 %v169, %v3161
    %v3246 = vadd.f32 %v170, %v3166
    %v3247 = vadd.f32 %v171, %v3169
    %v3248 = vadd.f32 %v172, %v3174
    %v3249 = vadd.f32 %v173, %v3177
    %v3250 = vadd.f32 %v174, %v3182
    %v3251 = vadd.f32 %v175, %v3185
    %3252 = vst [vmem:[#allocation7] sm:$0xff] %v3188
    %3253 = vst [vmem:[#allocation7 + $0x8] sm:$0xff] %v3189
    %3254 = vst [vmem:[#allocation7 + $0x10] sm:$0xff] %v3190
    %3255 = vst [vmem:[#allocation7 + $0x18] sm:$0xff] %v3191
    %3256 = vst [vmem:[#allocation7 + $0x20] sm:$0xff] %v3192
    %3257 = vst [vmem:[#allocation7 + $0x28] sm:$0xff] %v3193
    %3258 = vst [vmem:[#allocation7 + $0x30] sm:$0xff] %v3194
    %3259 = vst [vmem:[#allocation7 + $0x38] sm:$0xff] %v3195
    %3260 = vst [vmem:[#allocation7 + $0x40] sm:$0xff] %v3196
    %3261 = vst [vmem:[#allocation7 + $0x48] sm:$0xff] %v3197
    %3262 = vst [vmem:[#allocation7 + $0x50] sm:$0xff] %v3198
    %3263 = vst [vmem:[#allocation7 + $0x58] sm:$0xff] %v3199
    %3264 = vst [vmem:[#allocation7 + $0x60] sm:$0xff] %v3200
    %3265 = vst [vmem:[#allocation7 + $0x68] sm:$0xff] %v3201
    %3266 = vst [vmem:[#allocation7 + $0x70] sm:$0xff] %v3202
    %3267 = vst [vmem:[#allocation7 + $0x78] sm:$0xff] %v3203
    %3268 = vst [vmem:[#allocation7 + $0x80] sm:$0xff] %v3204
    %3269 = vst [vmem:[#allocation7 + $0x88] sm:$0xff] %v3205
    %3270 = vst [vmem:[#allocation7 + $0x90] sm:$0xff] %v3206
    %3271 = vst [vmem:[#allocation7 + $0x98] sm:$0xff] %v3207
    %3272 = vst [vmem:[#allocation7 + $0xa0] sm:$0xff] %v3208
    %3273 = vst [vmem:[#allocation7 + $0xa8] sm:$0xff] %v3209
    %3274 = vst [vmem:[#allocation7 + $0xb0] sm:$0xff] %v3210
    %3275 = vst [vmem:[#allocation7 + $0xb8] sm:$0xff] %v3211
    %3276 = vst [vmem:[#allocation7 + $0xc0] sm:$0xff] %v3212
    %3277 = vst [vmem:[#allocation7 + $0xc8] sm:$0xff] %v3213
    %3278 = vst [vmem:[#allocation7 + $0xd0] sm:$0xff] %v3214
    %3279 = vst [vmem:[#allocation7 + $0xd8] sm:$0xff] %v3215
    %3280 = vst [vmem:[#allocation7 + $0xe0] sm:$0xff] %v3216
    %3281 = vst [vmem:[#allocation7 + $0xe8] sm:$0xff] %v3217
    %3282 = vst [vmem:[#allocation7 + $0xf0] sm:$0xff] %v3218
    %3283 = vst [vmem:[#allocation7 + $0xf8] sm:$0xff] %v3219
    %3284 = vst [vmem:[#allocation7 + $0x100] sm:$0xff] %v3220
    %3285 = vst [vmem:[#allocation7 + $0x108] sm:$0xff] %v3221
    %3286 = vst [vmem:[#allocation7 + $0x110] sm:$0xff] %v3222
    %3287 = vst [vmem:[#allocation7 + $0x118] sm:$0xff] %v3223
    %3288 = vst [vmem:[#allocation7 + $0x120] sm:$0xff] %v3224
    %3289 = vst [vmem:[#allocation7 + $0x128] sm:$0xff] %v3225
    %3290 = vst [vmem:[#allocation7 + $0x130] sm:$0xff] %v3226
    %3291 = vst [vmem:[#allocation7 + $0x138] sm:$0xff] %v3227
    %3292 = vst [vmem:[#allocation7 + $0x140] sm:$0xff] %v3228
    %3293 = vst [vmem:[#allocation7 + $0x148] sm:$0xff] %v3229
    %3294 = vst [vmem:[#allocation7 + $0x150] sm:$0xff] %v3230
    %3295 = vst [vmem:[#allocation7 + $0x158] sm:$0xff] %v3231
    %3296 = vst [vmem:[#allocation7 + $0x160] sm:$0xff] %v3232
    %3297 = vst [vmem:[#allocation7 + $0x168] sm:$0xff] %v3233
    %3298 = vst [vmem:[#allocation7 + $0x170] sm:$0xff] %v3234
    %3299 = vst [vmem:[#allocation7 + $0x178] sm:$0xff] %v3235
    %3300 = vst [vmem:[#allocation7 + $0x180] sm:$0xff] %v3236
    %3301 = vst [vmem:[#allocation7 + $0x188] sm:$0xff] %v3237
    %3302 = vst [vmem:[#allocation7 + $0x190] sm:$0xff] %v3238
    %3303 = vst [vmem:[#allocation7 + $0x198] sm:$0xff] %v3239
    %3304 = vst [vmem:[#allocation7 + $0x1a0] sm:$0xff] %v3240
    %3305 = vst [vmem:[#allocation7 + $0x1a8] sm:$0xff] %v3241
    %3306 = vst [vmem:[#allocation7 + $0x1b0] sm:$0xff] %v3242
    %3307 = vst [vmem:[#allocation7 + $0x1b8] sm:$0xff] %v3243
    %3308 = vst [vmem:[#allocation7 + $0x1c0] sm:$0xff] %v3244
    %3309 = vst [vmem:[#allocation7 + $0x1c8] sm:$0xff] %v3245
    %3310 = vst [vmem:[#allocation7 + $0x1d0] sm:$0xff] %v3246
    %3311 = vst [vmem:[#allocation7 + $0x1d8] sm:$0xff] %v3247
    %3312 = vst [vmem:[#allocation7 + $0x1e0] sm:$0xff] %v3248
    %3313 = vst [vmem:[#allocation7 + $0x1e8] sm:$0xff] %v3249
    %3314 = vst [vmem:[#allocation7 + $0x1f0] sm:$0xff] %v3250
    %3315 = vst [vmem:[#allocation7 + $0x1f8] sm:$0xff] %v3251
    // Predicated region
    $region22: #{tpu_custom_call.1} parent=1 // pred_check
      %p3316 = pneg %p44
    $region23: #{tpu_custom_call.1} parent=1 // pred_check_branch
      %3318 = sbr.rel (%p3316) target = $region25
    $region24: #{tpu_custom_call.1} parent=1 // pred_region
      %v3319 = vld [vmem:[#allocation7] sm:$0xff]
      %v3320 = vld [vmem:[#allocation7 + $0x8] sm:$0xff]
      %v3321 = vld [vmem:[#allocation7 + $0x10] sm:$0xff]
      %v3322 = vld [vmem:[#allocation7 + $0x18] sm:$0xff]
      %v3323 = vld [vmem:[#allocation7 + $0x20] sm:$0xff]
      %v3324 = vld [vmem:[#allocation7 + $0x28] sm:$0xff]
      %v3325 = vld [vmem:[#allocation7 + $0x30] sm:$0xff]
      %v3326 = vld [vmem:[#allocation7 + $0x38] sm:$0xff]
      %v3327 = vld [vmem:[#allocation7 + $0x40] sm:$0xff]
      %v3328 = vld [vmem:[#allocation7 + $0x48] sm:$0xff]
      %v3329 = vld [vmem:[#allocation7 + $0x50] sm:$0xff]
      %v3330 = vld [vmem:[#allocation7 + $0x58] sm:$0xff]
      %v3331 = vld [vmem:[#allocation7 + $0x60] sm:$0xff]
      %v3332 = vld [vmem:[#allocation7 + $0x68] sm:$0xff]
      %v3333 = vld [vmem:[#allocation7 + $0x70] sm:$0xff]
      %v3334 = vld [vmem:[#allocation7 + $0x78] sm:$0xff]
      %v3335 = vld [vmem:[#allocation7 + $0x80] sm:$0xff]
      %v3336 = vld [vmem:[#allocation7 + $0x88] sm:$0xff]
      %v3337 = vld [vmem:[#allocation7 + $0x90] sm:$0xff]
      %v3338 = vld [vmem:[#allocation7 + $0x98] sm:$0xff]
      %v3339 = vld [vmem:[#allocation7 + $0xa0] sm:$0xff]
      %v3340 = vld [vmem:[#allocation7 + $0xa8] sm:$0xff]
      %v3341 = vld [vmem:[#allocation7 + $0xb0] sm:$0xff]
      %v3342 = vld [vmem:[#allocation7 + $0xb8] sm:$0xff]
      %v3343 = vld [vmem:[#allocation7 + $0xc0] sm:$0xff]
      %v3344 = vld [vmem:[#allocation7 + $0xc8] sm:$0xff]
      %v3345 = vld [vmem:[#allocation7 + $0xd0] sm:$0xff]
      %v3346 = vld [vmem:[#allocation7 + $0xd8] sm:$0xff]
      %v3347 = vld [vmem:[#allocation7 + $0xe0] sm:$0xff]
      %v3348 = vld [vmem:[#allocation7 + $0xe8] sm:$0xff]
      %v3349 = vld [vmem:[#allocation7 + $0xf0] sm:$0xff]
      %v3350 = vld [vmem:[#allocation7 + $0xf8] sm:$0xff]
      %v3351 = vld [vmem:[#allocation7 + $0x100] sm:$0xff]
      %v3352 = vld [vmem:[#allocation7 + $0x108] sm:$0xff]
      %v3353 = vld [vmem:[#allocation7 + $0x110] sm:$0xff]
      %v3354 = vld [vmem:[#allocation7 + $0x118] sm:$0xff]
      %v3355 = vld [vmem:[#allocation7 + $0x120] sm:$0xff]
      %v3356 = vld [vmem:[#allocation7 + $0x128] sm:$0xff]
      %v3357 = vld [vmem:[#allocation7 + $0x130] sm:$0xff]
      %v3358 = vld [vmem:[#allocation7 + $0x138] sm:$0xff]
      %v3359 = vld [vmem:[#allocation7 + $0x140] sm:$0xff]
      %v3360 = vld [vmem:[#allocation7 + $0x148] sm:$0xff]
      %v3361 = vld [vmem:[#allocation7 + $0x150] sm:$0xff]
      %v3362 = vld [vmem:[#allocation7 + $0x158] sm:$0xff]
      %v3363 = vld [vmem:[#allocation7 + $0x160] sm:$0xff]
      %v3364 = vld [vmem:[#allocation7 + $0x168] sm:$0xff]
      %v3365 = vld [vmem:[#allocation7 + $0x170] sm:$0xff]
      %v3366 = vld [vmem:[#allocation7 + $0x178] sm:$0xff]
      %v3367 = vld [vmem:[#allocation7 + $0x180] sm:$0xff]
      %v3368 = vld [vmem:[#allocation7 + $0x188] sm:$0xff]
      %v3369 = vld [vmem:[#allocation7 + $0x190] sm:$0xff]
      %v3370 = vld [vmem:[#allocation7 + $0x198] sm:$0xff]
      %v3371 = vld [vmem:[#allocation7 + $0x1a0] sm:$0xff]
      %v3372 = vld [vmem:[#allocation7 + $0x1a8] sm:$0xff]
      %v3373 = vld [vmem:[#allocation7 + $0x1b0] sm:$0xff]
      %v3374 = vld [vmem:[#allocation7 + $0x1b8] sm:$0xff]
      %v3375 = vld [vmem:[#allocation7 + $0x1c0] sm:$0xff]
      %v3376 = vld [vmem:[#allocation7 + $0x1c8] sm:$0xff]
      %v3377 = vld [vmem:[#allocation7 + $0x1d0] sm:$0xff]
      %v3378 = vld [vmem:[#allocation7 + $0x1d8] sm:$0xff]
      %v3379 = vld [vmem:[#allocation7 + $0x1e0] sm:$0xff]
      %v3380 = vld [vmem:[#allocation7 + $0x1e8] sm:$0xff]
      %v3381 = vld [vmem:[#allocation7 + $0x1f0] sm:$0xff]
      %v3382 = vld [vmem:[#allocation7 + $0x1f8] sm:$0xff]
      %v3383 = vadd.f32 %v3319, %v3320
      %v3384 = vadd.f32 %v3383, %v3321
      %v3385 = vadd.f32 %v3384, %v3322
      %v3386 = vadd.f32 %v3385, %v3323
      %v3387 = vadd.f32 %v3386, %v3324
      %v3388 = vadd.f32 %v3387, %v3325
      %v3389 = vadd.f32 %v3388, %v3326
      %v3390 = vadd.f32 %v3389, %v3327
      %v3391 = vadd.f32 %v3390, %v3328
      %v3392 = vadd.f32 %v3391, %v3329
      %v3393 = vadd.f32 %v3392, %v3330
      %v3394 = vadd.f32 %v3393, %v3331
      %v3395 = vadd.f32 %v3394, %v3332
      %v3396 = vadd.f32 %v3395, %v3333
      %v3397 = vadd.f32 %v3396, %v3334
      %v3398 = vadd.f32 %v3397, %v3335
      %v3399 = vadd.f32 %v3398, %v3336
      %v3400 = vadd.f32 %v3399, %v3337
      %v3401 = vadd.f32 %v3400, %v3338
      %v3402 = vadd.f32 %v3401, %v3339
      %v3403 = vadd.f32 %v3402, %v3340
      %v3404 = vadd.f32 %v3403, %v3341
      %v3405 = vadd.f32 %v3404, %v3342
      %v3406 = vadd.f32 %v3405, %v3343
      %v3407 = vadd.f32 %v3406, %v3344
      %v3408 = vadd.f32 %v3407, %v3345
      %v3409 = vadd.f32 %v3408, %v3346
      %v3410 = vadd.f32 %v3409, %v3347
      %v3411 = vadd.f32 %v3410, %v3348
      %v3412 = vadd.f32 %v3411, %v3349
      %v3413 = vadd.f32 %v3412, %v3350
      %v3414 = vadd.f32 %v3413, %v3351
      %v3415 = vadd.f32 %v3414, %v3352
      %v3416 = vadd.f32 %v3415, %v3353
      %v3417 = vadd.f32 %v3416, %v3354
      %v3418 = vadd.f32 %v3417, %v3355
      %v3419 = vadd.f32 %v3418, %v3356
      %v3420 = vadd.f32 %v3419, %v3357
      %v3421 = vadd.f32 %v3420, %v3358
      %v3422 = vadd.f32 %v3421, %v3359
      %v3423 = vadd.f32 %v3422, %v3360
      %v3424 = vadd.f32 %v3423, %v3361
      %v3425 = vadd.f32 %v3424, %v3362
      %v3426 = vadd.f32 %v3425, %v3363
      %v3427 = vadd.f32 %v3426, %v3364
      %v3428 = vadd.f32 %v3427, %v3365
      %v3429 = vadd.f32 %v3428, %v3366
      %v3430 = vadd.f32 %v3429, %v3367
      %v3431 = vadd.f32 %v3430, %v3368
      %v3432 = vadd.f32 %v3431, %v3369
      %v3433 = vadd.f32 %v3432, %v3370
      %v3434 = vadd.f32 %v3433, %v3371
      %v3435 = vadd.f32 %v3434, %v3372
      %v3436 = vadd.f32 %v3435, %v3373
      %v3437 = vadd.f32 %v3436, %v3374
      %v3438 = vadd.f32 %v3437, %v3375
      %v3439 = vadd.f32 %v3438, %v3376
      %v3440 = vadd.f32 %v3439, %v3377
      %v3441 = vadd.f32 %v3440, %v3378
      %v3442 = vadd.f32 %v3441, %v3379
      %v3443 = vadd.f32 %v3442, %v3380
      %v3444 = vadd.f32 %v3443, %v3381
      %v3445 = vadd.f32 %v3444, %v3382
      %v3446 = vrot.slane %v3445, 4
      %v3447 = vadd.f32 %v3445, %v3446
      %v3448 = vrot.slane %v3447, 2
      %v3449 = vadd.f32 %v3447, %v3448
      %v3450 = vrot.slane %v3449, 1
      %v3451 = vadd.f32 %v3449, %v3450
      %3452 = vst [vmem:[#allocation8] sm:$0x1] %v3451
      %v3453 = vmul.f32 %v3319, %v3319
      %v3454 = vmul.f32 %v3320, %v3320
      %v3455 = vmul.f32 %v3321, %v3321
      %v3456 = vmul.f32 %v3322, %v3322
      %v3457 = vmul.f32 %v3323, %v3323
      %v3458 = vmul.f32 %v3324, %v3324
      %v3459 = vmul.f32 %v3325, %v3325
      %v3460 = vmul.f32 %v3326, %v3326
      %v3461 = vmul.f32 %v3327, %v3327
      %v3462 = vmul.f32 %v3328, %v3328
      %v3463 = vmul.f32 %v3329, %v3329
      %v3464 = vmul.f32 %v3330, %v3330
      %v3465 = vmul.f32 %v3331, %v3331
      %v3466 = vmul.f32 %v3332, %v3332
      %v3467 = vmul.f32 %v3333, %v3333
      %v3468 = vmul.f32 %v3334, %v3334
      %v3469 = vmul.f32 %v3335, %v3335
      %v3470 = vmul.f32 %v3336, %v3336
      %v3471 = vmul.f32 %v3337, %v3337
      %v3472 = vmul.f32 %v3338, %v3338
      %v3473 = vmul.f32 %v3339, %v3339
      %v3474 = vmul.f32 %v3340, %v3340
      %v3475 = vmul.f32 %v3341, %v3341
      %v3476 = vmul.f32 %v3342, %v3342
      %v3477 = vmul.f32 %v3343, %v3343
      %v3478 = vmul.f32 %v3344, %v3344
      %v3479 = vmul.f32 %v3345, %v3345
      %v3480 = vmul.f32 %v3346, %v3346
      %v3481 = vmul.f32 %v3347, %v3347
      %v3482 = vmul.f32 %v3348, %v3348
      %v3483 = vmul.f32 %v3349, %v3349
      %v3484 = vmul.f32 %v3350, %v3350
      %v3485 = vmul.f32 %v3351, %v3351
      %v3486 = vmul.f32 %v3352, %v3352
      %v3487 = vmul.f32 %v3353, %v3353
      %v3488 = vmul.f32 %v3354, %v3354
      %v3489 = vmul.f32 %v3355, %v3355
      %v3490 = vmul.f32 %v3356, %v3356
      %v3491 = vmul.f32 %v3357, %v3357
      %v3492 = vmul.f32 %v3358, %v3358
      %v3493 = vmul.f32 %v3359, %v3359
      %v3494 = vmul.f32 %v3360, %v3360
      %v3495 = vmul.f32 %v3361, %v3361
      %v3496 = vmul.f32 %v3362, %v3362
      %v3497 = vmul.f32 %v3363, %v3363
      %v3498 = vmul.f32 %v3364, %v3364
      %v3499 = vmul.f32 %v3365, %v3365
      %v3500 = vmul.f32 %v3366, %v3366
      %v3501 = vmul.f32 %v3367, %v3367
      %v3502 = vmul.f32 %v3368, %v3368
      %v3503 = vmul.f32 %v3369, %v3369
      %v3504 = vmul.f32 %v3370, %v3370
      %v3505 = vmul.f32 %v3371, %v3371
      %v3506 = vmul.f32 %v3372, %v3372
      %v3507 = vmul.f32 %v3373, %v3373
      %v3508 = vmul.f32 %v3374, %v3374
      %v3509 = vmul.f32 %v3375, %v3375
      %v3510 = vmul.f32 %v3376, %v3376
      %v3511 = vmul.f32 %v3377, %v3377
      %v3512 = vmul.f32 %v3378, %v3378
      %v3513 = vmul.f32 %v3379, %v3379
      %v3514 = vmul.f32 %v3380, %v3380
      %v3515 = vmul.f32 %v3381, %v3381
      %v3516 = vmul.f32 %v3382, %v3382
      %v3517 = vadd.f32 %v3453, %v3454
      %v3518 = vadd.f32 %v3517, %v3455
      %v3519 = vadd.f32 %v3518, %v3456
      %v3520 = vadd.f32 %v3519, %v3457
      %v3521 = vadd.f32 %v3520, %v3458
      %v3522 = vadd.f32 %v3521, %v3459
      %v3523 = vadd.f32 %v3522, %v3460
      %v3524 = vadd.f32 %v3523, %v3461
      %v3525 = vadd.f32 %v3524, %v3462
      %v3526 = vadd.f32 %v3525, %v3463
      %v3527 = vadd.f32 %v3526, %v3464
      %v3528 = vadd.f32 %v3527, %v3465
      %v3529 = vadd.f32 %v3528, %v3466
      %v3530 = vadd.f32 %v3529, %v3467
      %v3531 = vadd.f32 %v3530, %v3468
      %v3532 = vadd.f32 %v3531, %v3469
      %v3533 = vadd.f32 %v3532, %v3470
      %v3534 = vadd.f32 %v3533, %v3471
      %v3535 = vadd.f32 %v3534, %v3472
      %v3536 = vadd.f32 %v3535, %v3473
      %v3537 = vadd.f32 %v3536, %v3474
      %v3538 = vadd.f32 %v3537, %v3475
      %v3539 = vadd.f32 %v3538, %v3476
      %v3540 = vadd.f32 %v3539, %v3477
      %v3541 = vadd.f32 %v3540, %v3478
      %v3542 = vadd.f32 %v3541, %v3479
      %v3543 = vadd.f32 %v3542, %v3480
      %v3544 = vadd.f32 %v3543, %v3481
      %v3545 = vadd.f32 %v3544, %v3482
      %v3546 = vadd.f32 %v3545, %v3483
      %v3547 = vadd.f32 %v3546, %v3484
      %v3548 = vadd.f32 %v3547, %v3485
      %v3549 = vadd.f32 %v3548, %v3486
      %v3550 = vadd.f32 %v3549, %v3487
      %v3551 = vadd.f32 %v3550, %v3488
      %v3552 = vadd.f32 %v3551, %v3489
      %v3553 = vadd.f32 %v3552, %v3490
      %v3554 = vadd.f32 %v3553, %v3491
      %v3555 = vadd.f32 %v3554, %v3492
      %v3556 = vadd.f32 %v3555, %v3493
      %v3557 = vadd.f32 %v3556, %v3494
      %v3558 = vadd.f32 %v3557, %v3495
      %v3559 = vadd.f32 %v3558, %v3496
      %v3560 = vadd.f32 %v3559, %v3497
      %v3561 = vadd.f32 %v3560, %v3498
      %v3562 = vadd.f32 %v3561, %v3499
      %v3563 = vadd.f32 %v3562, %v3500
      %v3564 = vadd.f32 %v3563, %v3501
      %v3565 = vadd.f32 %v3564, %v3502
      %v3566 = vadd.f32 %v3565, %v3503
      %v3567 = vadd.f32 %v3566, %v3504
      %v3568 = vadd.f32 %v3567, %v3505
      %v3569 = vadd.f32 %v3568, %v3506
      %v3570 = vadd.f32 %v3569, %v3507
      %v3571 = vadd.f32 %v3570, %v3508
      %v3572 = vadd.f32 %v3571, %v3509
      %v3573 = vadd.f32 %v3572, %v3510
      %v3574 = vadd.f32 %v3573, %v3511
      %v3575 = vadd.f32 %v3574, %v3512
      %v3576 = vadd.f32 %v3575, %v3513
      %v3577 = vadd.f32 %v3576, %v3514
      %v3578 = vadd.f32 %v3577, %v3515
      %v3579 = vadd.f32 %v3578, %v3516
      %v3580 = vrot.slane %v3579, 4
      %v3581 = vadd.f32 %v3579, %v3580
      %v3582 = vrot.slane %v3581, 2
      %v3583 = vadd.f32 %v3581, %v3582
      %v3584 = vrot.slane %v3583, 1
      %v3585 = vadd.f32 %v3583, %v3584
      %3586 = vst [vmem:[#allocation8 + $0x1] sm:$0x1] %v3585
    $region25: #{tpu_custom_call.1} parent=1 // pred_fallthru
      _
    // Predicated region
    $region26: #{tpu_custom_call.1} parent=1 // pred_check
      _
    $region27: #{tpu_custom_call.1} parent=1 // pred_check_branch
      %3588 = sbr.rel (0) target = $region29
    $region28: #{tpu_custom_call.1} parent=1 // pred_region
      %s3590 = ssub.s32 8192, 8192
      %3591 = vsyncadd [#allocation4], %s3590
      %s3592 = sshll.u32 [#allocation7], 4
      %s3593 = int_to_ptr.vmem [resolvable:$true] %s3592
      %3598 = dma.vmem_to_hbm [thread:$0]  %s3593, 8192, %s2, [#allocation4], 128, 128, 8
    $region29: #{tpu_custom_call.1} parent=1 // pred_fallthru
      _
    // Predicated region
    $region30: #{tpu_custom_call.1} parent=1 // pred_check
      _
    $region31: #{tpu_custom_call.1} parent=1 // pred_check_branch
      %3600 = sbr.rel (0) target = $region33
    $region32: #{tpu_custom_call.1} parent=1 // pred_region
      %s3602 = ssub.s32 32, 32
      %3603 = vsyncadd [#allocation9], %s3602
      %s3605 = sshll.u32 [#allocation8], 4
      %s3606 = int_to_ptr.vmem [resolvable:$true] %s3605
      %3608 = dma.vmem_to_hbm [thread:$0]  %s3606, 32, %s3, [#allocation9]
    $region33: #{tpu_custom_call.1} parent=1 // pred_fallthru
      _
    // Predicated region
    $region34: #{tpu_custom_call.1} parent=1 // pred_check
      _
    $region35: #{tpu_custom_call.1} parent=1 // pred_check_branch
      %3610 = sbr.rel (0) target = $region37
    $region36: #{tpu_custom_call.1} parent=1 // pred_region
      %3611 = dma.done [#allocation4], 8192
    $region37: #{tpu_custom_call.1} parent=1 // pred_fallthru
      _
    // Predicated region
    $region38: #{tpu_custom_call.1} parent=1 // pred_check
      _
    $region39: #{tpu_custom_call.1} parent=1 // pred_check_branch
      %3613 = sbr.rel (0) target = $region41
    $region40: #{tpu_custom_call.1} parent=1 // pred_region
      %3614 = dma.done [#allocation9], 32
    $region41: #{tpu_custom_call.1} parent=1 // pred_fallthru
      _
    %3615 = vsyncpa [#allocation3], 1
    %3616 = vsyncpa [#allocation6], 1
    %3617 = vsyncpa [#allocation4], 1
    %3618 = vsyncpa [#allocation9], 1

</llo_original>
